<compile_context>
chip_gen: v7x
topology: tpu7x:2x2x1
jax: 0.10.0
libtpu: 0.0.40
codegen_flags: <defaults>
</compile_context>

<pallas_src>
import functools

import numpy as np

import jax
import jax.numpy as jnp
from jax.experimental import pallas as pl
from jax.experimental.pallas import tpu as pltpu

C_LEN = 8        # c_len in the PyTorch module
B_SCALE = 1.0    # self.b = 1


def _round_up(n, m):
    return ((n + m - 1) // m) * m


# --------------------------------------------------------------------------
# Host-side: fold a Conv2d(kernel, pad, stride, groups) into a dense banded
# matrix so that, for activations laid out as (batch, cin*H*W) row-major, the
# conv becomes one MXU matmul:
#   out[b, co*OH*OW + oy*OW + ox] = (x @ A)[b, ...] + bias[co]
# The scatter index sets depend only on static shapes (numpy, built once).
# --------------------------------------------------------------------------
def _conv_matrix_indices(cin, cout, h, w, kh, kw, stride, pad, groups):
    oh = (h + 2 * pad - kh) // stride + 1
    ow = (w + 2 * pad - kw) // stride + 1
    cin_g, cout_g = cin // groups, cout // groups
    rows, cols, widx = [], [], []
    for co in range(cout):
        g = co // cout_g
        for cig in range(cin_g):
            ci = g * cin_g + cig
            for ky in range(kh):
                for kx in range(kw):
                    for oy in range(oh):
                        iy = oy * stride + ky - pad
                        if iy < 0 or iy >= h:
                            continue
                        for ox in range(ow):
                            ix = ox * stride + kx - pad
                            if ix < 0 or ix >= w:
                                continue
                            rows.append(ci * h * w + iy * w + ix)
                            cols.append(co * oh * ow + oy * ow + ox)
                            widx.append(((co * cin_g + cig) * kh + ky) * kw + kx)
    return (np.asarray(rows), np.asarray(cols), np.asarray(widx),
            cin * h * w, cout * oh * ow)


_IDX_CONV1 = _conv_matrix_indices(1, 2, 28, 28, 3, 3, 2, 1, 1)   # -> (784, 392)
_IDX_C1    = _conv_matrix_indices(2, 1, 14, 14, 3, 3, 1, 1, 1)   # -> (392, 196)
_IDX_DW    = _conv_matrix_indices(2, 2, 14, 14, 3, 3, 1, 1, 2)   # -> (392, 392) depthwise
_IDX_PW    = _conv_matrix_indices(2, 2, 14, 14, 1, 1, 1, 0, 1)   # -> (392, 392) pointwise
_IDX_CONV2 = _conv_matrix_indices(2, 2, 14, 14, 3, 3, 2, 1, 1)   # -> (392, 98)


def _conv_as_matmul(w, idx):
    """Scatter PyTorch-layout conv weights into the banded matmul matrix (f32)."""
    rows, cols, widx, r, c = idx
    vals = w.reshape(-1).astype(jnp.float32)[widx]
    return jnp.zeros((r, c), jnp.float32).at[rows, cols].set(vals)


# --------------------------------------------------------------------------
# Packed small-parameter layouts.  Every in-kernel slice starts at lane 0 and
# at an 8-aligned row, so loads are layout-clean.
# --------------------------------------------------------------------------
# `smalls` (32, 512) f32 rows:
_R_CONV1_B, _R_C1CONV_B = 0, 1
_R_DW1_B, _R_PW1_B, _R_COND1_B = 2, 3, 4
_R_DW2_B, _R_PW2_B, _R_COND2_B = 5, 6, 7
_R_CONV2_B, _R_C1FC_B, _R_FC1_B, _R_FC2_B = 8, 9, 10, 11
_R_COND1_W, _R_COND2_W = 16, 24           # 8 rows each: expanded (8, 392) cond projections
_SMALLS_ROWS, _SMALLS_COLS = 32, 512

# `wpack` (336, 32) f32 rows (8-aligned starts):
_W_C1FC, _W_FC1, _W_FC2 = 0, 200, 304     # (196, 8), (98, 32), (32, 10)


def _build_smalls(p):
    s1, s2 = p["sca1"], p["sca2"]

    def row(v):
        v = jnp.asarray(v, jnp.float32).reshape(1, -1)
        return jnp.pad(v, ((0, 0), (0, _SMALLS_COLS - v.shape[1])))

    def cond_w_exp(cond_w):                # (2, C_LEN) -> (8, 512), per-channel expanded
        w = jnp.repeat(cond_w.T.astype(jnp.float32), 196, axis=1)     # (8, 392)
        return jnp.pad(w, ((0, 0), (0, _SMALLS_COLS - w.shape[1])))

    rows = [
        row(jnp.repeat(p["conv1_b"], 196)),            # 0  conv1 bias  -> 392 lanes
        row(jnp.repeat(p["c1_conv_b"], 196)),          # 1  c1 conv bias -> 196 lanes
        row(jnp.repeat(s1["dw_b"], 196)),              # 2
        row(jnp.repeat(s1["pw_b"], 196)),              # 3
        row(jnp.repeat(s1["cond_b"], 196)),            # 4
        row(jnp.repeat(s2["dw_b"], 196)),              # 5
        row(jnp.repeat(s2["pw_b"], 196)),              # 6
        row(jnp.repeat(s2["cond_b"], 196)),            # 7
        row(jnp.repeat(p["conv2_b"], 49)),             # 8  conv2 bias -> 98 lanes
        row(p["c1_fc_b"]),                             # 9
        row(p["fc1_b"]),                               # 10
        row(p["fc2_b"]),                               # 11
        jnp.zeros((4, _SMALLS_COLS), jnp.float32),     # 12..15 pad (8-align next block)
        cond_w_exp(s1["cond_w"]),                      # 16..23
        cond_w_exp(s2["cond_w"]),                      # 24..31
    ]
    return jnp.concatenate(rows, axis=0)               # (32, 512)


def _build_wpack(p):
    w = jnp.zeros((336, 32), jnp.float32)
    w = w.at[_W_C1FC:_W_C1FC + 196, 0:8].set(p["c1_fc_w"].T.astype(jnp.float32))
    w = w.at[_W_FC1:_W_FC1 + 98, 0:32].set(p["fc1_w"].T.astype(jnp.float32))
    w = w.at[_W_FC2:_W_FC2 + 32, 0:10].set(p["fc2_w"].T.astype(jnp.float32))
    return w


# --------------------------------------------------------------------------
# The fused kernel: full SCACNN forward on one block of batch rows.
# Activations: (blk, C*H*W) f32, channel-major lanes (matches PyTorch Flatten).
# --------------------------------------------------------------------------
def _scacnn_kernel(x_ref, a1_ref, ac1_ref, adw1_ref, apw1_ref,
                   adw2_ref, apw2_ref, a2_ref, wpack_ref, smalls_ref, out_ref):
    f32 = jnp.float32

    def mm(a, b):
        return jnp.dot(a, b, preferred_element_type=f32)

    def silu(v):
        return v * jax.nn.sigmoid(v)

    def bias(r, width):
        return smalls_ref[r:r + 1, 0:width]            # (1, width), broadcasts over batch

    # ---- conv1: 1 -> 2 ch, 3x3, pad 1, stride 2 (28x28 -> 14x14), folded matmul ----
    x1 = mm(x_ref[...], a1_ref[...]) + bias(_R_CONV1_B, 392)           # (blk, 392)

    wfc_c1 = wpack_ref[_W_C1FC:_W_C1FC + 196, 0:8]
    wfc1 = wpack_ref[_W_FC1:_W_FC1 + 98, 0:32]
    wfc2 = wpack_ref[_W_FC2:_W_FC2 + 32, 0:10]

    def c1_branch(feat):
        # LazyConv2d(1, k=3, p=1, s=1) -> SiLU -> Flatten -> LazyLinear(c_len)
        h = silu(mm(feat, ac1_ref[...]) + bias(_R_C1CONV_B, 196))      # (blk, 196)
        return mm(h, wfc_c1) + bias(_R_C1FC_B, C_LEN)                  # (blk, 8)

    def sca_attn(feat, cond, a_dw, a_pw, r_dw_b, r_pw_b, r_cw, r_cb):
        # TODO(synk): SCAC_DS_Attn source was not provided with the module; as in the
        # previous version it is implemented as depthwise 3x3 -> SiLU -> pointwise 1x1,
        # gated per (batch, channel) by sigmoid(cond @ Wc + bc) and scaled by b.
        h = silu(mm(feat, a_dw) + bias(r_dw_b, 392))                   # depthwise 3x3
        pw = mm(h, a_pw) + bias(r_pw_b, 392)                           # pointwise 1x1
        gate = jax.nn.sigmoid(mm(cond, smalls_ref[r_cw:r_cw + 8, 0:392])
                              + bias(r_cb, 392))                       # (blk, 392)
        return pw * gate * B_SCALE

    # ---- stage 1: x = silu(x + sca1(x, c1(x))) ----
    x1 = silu(x1 + sca_attn(x1, c1_branch(x1), adw1_ref[...], apw1_ref[...],
                            _R_DW1_B, _R_PW1_B, _R_COND1_W, _R_COND1_B))
    # ---- stage 2: x = silu(x + sca2(x, c1(x))) ----
    x1 = silu(x1 + sca_attn(x1, c1_branch(x1), adw2_ref[...], apw2_ref[...],
                            _R_DW2_B, _R_PW2_B, _R_COND2_W, _R_COND2_B))

    # ---- conv2: 2 -> 2 ch, 3x3, pad 1, stride 2 (14x14 -> 7x7), folded matmul ----
    x2 = mm(x1, a2_ref[...]) + bias(_R_CONV2_B, 98)                    # (blk, 98)

    # ---- fc_out: Flatten (lanes already channel-major) -> 32 -> SiLU -> 10 ----
    h = silu(mm(x2, wfc1) + bias(_R_FC1_B, 32))
    out_ref[...] = mm(h, wfc2) + bias(_R_FC2_B, 10)


# --------------------------------------------------------------------------
# Wrapper: batch-gridded pallas_call; constants as whole-array resident blocks.
# --------------------------------------------------------------------------
def scacnn_forward(x, params, *, block_rows=256):
    n = x.shape[0]
    assert x.shape[1:] == (1, 28, 28), "fc_out hard-codes 2*7*7 -> 28x28 input"
    x_flat = x.reshape(n, 28 * 28).astype(jnp.float32)

    blk = block_rows if n >= block_rows else _round_up(n, 8)
    n_pad = _round_up(n, blk)
    if n_pad != n:
        x_flat = jnp.pad(x_flat, ((0, n_pad - n), (0, 0)))

    # Fold convs (incl. stride-2 subsample) into banded matmul matrices.  These are
    # cheap scatters outside the kernel; for repeated inference they could be
    # precomputed once per weight update.
    a1 = _conv_as_matmul(params["conv1_w"], _IDX_CONV1)
    ac1 = _conv_as_matmul(params["c1_conv_w"], _IDX_C1)
    adw1 = _conv_as_matmul(params["sca1"]["dw_w"], _IDX_DW)
    apw1 = _conv_as_matmul(params["sca1"]["pw_w"], _IDX_PW)
    adw2 = _conv_as_matmul(params["sca2"]["dw_w"], _IDX_DW)
    apw2 = _conv_as_matmul(params["sca2"]["pw_w"], _IDX_PW)
    a2 = _conv_as_matmul(params["conv2_w"], _IDX_CONV2)
    wpack = _build_wpack(params)
    smalls = _build_smalls(params)

    def const(shape):
        return pl.BlockSpec(shape, lambda i: (0, 0))

    out = pl.pallas_call(
        _scacnn_kernel,
        out_shape=jax.ShapeDtypeStruct((n_pad, 10), jnp.float32),
        grid=(n_pad // blk,),
        in_specs=[
            pl.BlockSpec((blk, 784), lambda i: (i, 0)),   # x: blocked over batch rows
            const((784, 392)),                            # conv1 (banded, stride-2 folded)
            const((392, 196)),                            # c1 conv (banded)
            const((392, 392)), const((392, 392)),         # sca1 depthwise / pointwise
            const((392, 392)), const((392, 392)),         # sca2 depthwise / pointwise
            const((392, 98)),                             # conv2 (banded, stride-2 folded)
            const((336, 32)),                             # packed FC weights
            const((32, 512)),                             # packed biases + cond projections
        ],
        out_specs=pl.BlockSpec((blk, 10), lambda i: (i, 0)),
        compiler_params=pltpu.CompilerParams(
            dimension_semantics=("parallel",),            # v7x: use both TensorCores
            vmem_limit_bytes=32 * 1024 * 1024,            # fits v7x's 64 MiB with headroom
        ),
    )(x_flat, a1, ac1, adw1, apw1, adw2, apw2, a2, wpack, smalls)
    return out[:n]


# --------------------------------------------------------------------------
# Deterministic synthetic parameters, PyTorch-native shapes.
# --------------------------------------------------------------------------
def init_params(key):
    keys = jax.random.split(key, 14)

    def nrm(k, shape, scale=0.1):
        return (scale * jax.random.normal(k, shape)).astype(jnp.float32)

    def sca_params(k):
        ks = jax.random.split(k, 6)
        return dict(
            dw_w=nrm(ks[0], (2, 1, 3, 3)),    # depthwise 3x3, groups=2
            dw_b=nrm(ks[1], (2,)),
            pw_w=nrm(ks[2], (2, 2, 1, 1)),    # pointwise 1x1
            pw_b=nrm(ks[3], (2,)),
            cond_w=nrm(ks[4], (2, C_LEN)),    # Linear(c_len -> 2), PyTorch (out, in)
            cond_b=nrm(ks[5], (2,)),
        )

    return dict(
        conv1_w=nrm(keys[0], (2, 1, 3, 3)), conv1_b=nrm(keys[1], (2,)),
        c1_conv_w=nrm(keys[2], (1, 2, 3, 3)), c1_conv_b=nrm(keys[3], (1,)),
        c1_fc_w=nrm(keys[4], (C_LEN, 14 * 14)), c1_fc_b=nrm(keys[5], (C_LEN,)),
        sca1=sca_params(keys[6]),
        sca2=sca_params(keys[7]),
        conv2_w=nrm(keys[8], (2, 2, 3, 3)), conv2_b=nrm(keys[9], (2,)),
        fc1_w=nrm(keys[10], (32, 2 * 7 * 7)), fc1_b=nrm(keys[11], (32,)),
        fc2_w=nrm(keys[12], (10, 32)), fc2_b=nrm(keys[13], (10,)),
    )


# --------------------------------------------------------------------------
# Pure-JAX reference (same placeholder SCA semantics) for a correctness check.
# --------------------------------------------------------------------------
def _scacnn_ref(x, params):
    hi = jax.lax.Precision.HIGHEST
    conv = functools.partial(jax.lax.conv_general_dilated,
                             dimension_numbers=("NCHW", "OIHW", "NCHW"), precision=hi)

    def silu(v):
        return v * jax.nn.sigmoid(v)

    def lin(v, w, b):
        return jnp.dot(v, w.T, precision=hi) + b

    def c1(v):
        h = silu(conv(v, params["c1_conv_w"], window_strides=(1, 1),
                      padding=((1, 1), (1, 1))) + params["c1_conv_b"].reshape(1, -1, 1, 1))
        return lin(h.reshape(h.shape[0], -1), params["c1_fc_w"], params["c1_fc_b"])

    def sca(v, c, sp):
        h = silu(conv(v, sp["dw_w"], window_strides=(1, 1), padding=((1, 1), (1, 1)),
                      feature_group_count=2) + sp["dw_b"].reshape(1, -1, 1, 1))
        pw = conv(h, sp["pw_w"], window_strides=(1, 1),
                  padding=((0, 0), (0, 0))) + sp["pw_b"].reshape(1, -1, 1, 1)
        gate = jax.nn.sigmoid(lin(c, sp["cond_w"], sp["cond_b"]))      # (N, 2)
        return pw * gate[:, :, None, None] * B_SCALE

    v = conv(x, params["conv1_w"], window_strides=(2, 2),
             padding=((1, 1), (1, 1))) + params["conv1_b"].reshape(1, -1, 1, 1)
    v = silu(v + sca(v, c1(v), params["sca1"]))
    v = silu(v + sca(v, c1(v), params["sca2"]))
    v = conv(v, params["conv2_w"], window_strides=(2, 2),
             padding=((1, 1), (1, 1))) + params["conv2_b"].reshape(1, -1, 1, 1)
    flat = v.reshape(v.shape[0], -1)
    h = silu(lin(flat, params["fc1_w"], params["fc1_b"]))
    return lin(h, params["fc2_w"], params["fc2_b"])


if __name__ == "__main__":
    key = jax.random.PRNGKey(0)
    pkey, xkey = jax.random.split(key)
    params = init_params(pkey)

    # MNIST-style input: fc_out hard-codes 2*7*7, which forces 28x28 spatial.
    x = jax.random.normal(xkey, (2, 1, 28, 28), dtype=jnp.float32)

    out = jax.jit(scacnn_forward)(x, params)
    out = jax.block_until_ready(out)
    assert out.shape == (2, 10) and out.dtype == jnp.float32

    # Loose tolerance: allows for MXU matmul-pass rounding while catching structural bugs.
    ref = _scacnn_ref(x, params)
    np.testing.assert_allclose(np.asarray(out), np.asarray(ref), atol=5e-3, rtol=5e-2)

    print("KERNEL_OK")
</pallas_src>

<mosaic_0001>
module attributes {stable_mosaic.version = 11 : i64} {
  func.func @_scacnn_kernel(%arg0: i32, %arg1: memref<8x784xf32, #tpu.memory_space<vmem>>, %arg2: memref<784x392xf32, #tpu.memory_space<vmem>>, %arg3: memref<392x196xf32, #tpu.memory_space<vmem>>, %arg4: memref<392x392xf32, #tpu.memory_space<vmem>>, %arg5: memref<392x392xf32, #tpu.memory_space<vmem>>, %arg6: memref<392x392xf32, #tpu.memory_space<vmem>>, %arg7: memref<392x392xf32, #tpu.memory_space<vmem>>, %arg8: memref<392x98xf32, #tpu.memory_space<vmem>>, %arg9: memref<336x32xf32, #tpu.memory_space<vmem>>, %arg10: memref<32x512xf32, #tpu.memory_space<vmem>>, %arg11: memref<8x10xf32, #tpu.memory_space<vmem>>) attributes {dimension_semantics = [#tpu.dimension_semantics<parallel>], iteration_bounds = array<i64: 1>, scalar_prefetch = 0 : i64, scratch_operands = 0 : i64, tpu.core_type = #tpu.core_type<tc>, window_params = [{transform_indices = @transform_0, window_bounds = array<i64: 8, 784>}, {pipeline_mode = #tpu.pipeline_mode<synchronous>, transform_indices = @transform_1, window_bounds = array<i64: 784, 392>}, {pipeline_mode = #tpu.pipeline_mode<synchronous>, transform_indices = @transform_2, window_bounds = array<i64: 392, 196>}, {pipeline_mode = #tpu.pipeline_mode<synchronous>, transform_indices = @transform_3, window_bounds = array<i64: 392, 392>}, {pipeline_mode = #tpu.pipeline_mode<synchronous>, transform_indices = @transform_4, window_bounds = array<i64: 392, 392>}, {pipeline_mode = #tpu.pipeline_mode<synchronous>, transform_indices = @transform_5, window_bounds = array<i64: 392, 392>}, {pipeline_mode = #tpu.pipeline_mode<synchronous>, transform_indices = @transform_6, window_bounds = array<i64: 392, 392>}, {pipeline_mode = #tpu.pipeline_mode<synchronous>, transform_indices = @transform_7, window_bounds = array<i64: 392, 98>}, {pipeline_mode = #tpu.pipeline_mode<synchronous>, transform_indices = @transform_8, window_bounds = array<i64: 336, 32>}, {pipeline_mode = #tpu.pipeline_mode<synchronous>, transform_indices = @transform_9, window_bounds = array<i64: 32, 512>}, {transform_indices = @transform_10, window_bounds = array<i64: 8, 10>}]} {
    %c0 = arith.constant 0 : index
    %c0_0 = arith.constant 0 : index
    %0 = vector.load %arg1[%c0, %c0_0] : memref<8x784xf32, #tpu.memory_space<vmem>>, vector<8x784xf32>
    %c0_1 = arith.constant 0 : index
    %c0_2 = arith.constant 0 : index
    %1 = vector.load %arg2[%c0_1, %c0_2] : memref<784x392xf32, #tpu.memory_space<vmem>>, vector<784x392xf32>
    %cst = arith.constant dense<0.000000e+00> : vector<8x392xf32>
    %2 = tpu.matmul %0, %1, %cst {dimension_numbers = #tpu.dot_dimension_numbers<[1], [0], [0], [1], [0, 0, 1, 1], [], []>} : vector<8x784xf32>, vector<784x392xf32>, vector<8x392xf32> -> vector<8x392xf32>
    %c0_3 = arith.constant 0 : index
    %c0_4 = arith.constant 0 : index
    %3 = vector.load %arg10[%c0_3, %c0_4] : memref<32x512xf32, #tpu.memory_space<vmem>>, vector<1x392xf32>
    %4 = vector.broadcast %3 : vector<1x392xf32> to vector<8x392xf32>
    %5 = arith.addf %2, %4 : vector<8x392xf32>
    %c0_5 = arith.constant 0 : index
    %c0_6 = arith.constant 0 : index
    %6 = vector.load %arg9[%c0_5, %c0_6] : memref<336x32xf32, #tpu.memory_space<vmem>>, vector<196x8xf32>
    %c200 = arith.constant 200 : index
    %c0_7 = arith.constant 0 : index
    %7 = vector.load %arg9[%c200, %c0_7] : memref<336x32xf32, #tpu.memory_space<vmem>>, vector<98x32xf32>
    %c304 = arith.constant 304 : index
    %c0_8 = arith.constant 0 : index
    %8 = vector.load %arg9[%c304, %c0_8] : memref<336x32xf32, #tpu.memory_space<vmem>>, vector<32x10xf32>
    %c0_9 = arith.constant 0 : index
    %c0_10 = arith.constant 0 : index
    %9 = vector.load %arg3[%c0_9, %c0_10] : memref<392x196xf32, #tpu.memory_space<vmem>>, vector<392x196xf32>
    %cst_11 = arith.constant dense<0.000000e+00> : vector<8x196xf32>
    %10 = tpu.matmul %5, %9, %cst_11 {dimension_numbers = #tpu.dot_dimension_numbers<[1], [0], [0], [1], [0, 0, 1, 1], [], []>} : vector<8x392xf32>, vector<392x196xf32>, vector<8x196xf32> -> vector<8x196xf32>
    %c1 = arith.constant 1 : index
    %c0_12 = arith.constant 0 : index
    %11 = vector.load %arg10[%c1, %c0_12] : memref<32x512xf32, #tpu.memory_space<vmem>>, vector<1x196xf32>
    %12 = vector.broadcast %11 : vector<1x196xf32> to vector<8x196xf32>
    %13 = arith.addf %10, %12 : vector<8x196xf32>
    %14 = arith.negf %13 : vector<8x196xf32>
    %15 = math.exp %14 : vector<8x196xf32>
    %cst_13 = arith.constant 1.000000e+00 : f32
    %16 = vector.broadcast %cst_13 : f32 to vector<8x196xf32>
    %17 = arith.addf %16, %15 : vector<8x196xf32>
    %18 = arith.divf %16, %17 : vector<8x196xf32>
    %19 = arith.mulf %13, %18 : vector<8x196xf32>
    %cst_14 = arith.constant dense<0.000000e+00> : vector<8x8xf32>
    %20 = tpu.matmul %19, %6, %cst_14 {dimension_numbers = #tpu.dot_dimension_numbers<[1], [0], [0], [1], [0, 0, 1, 1], [], []>} : vector<8x196xf32>, vector<196x8xf32>, vector<8x8xf32> -> vector<8x8xf32>
    %c9 = arith.constant 9 : index
    %c0_15 = arith.constant 0 : index
    %21 = vector.load %arg10[%c9, %c0_15] : memref<32x512xf32, #tpu.memory_space<vmem>>, vector<1x8xf32>
    %22 = vector.broadcast %21 : vector<1x8xf32> to vector<8x8xf32>
    %23 = arith.addf %20, %22 : vector<8x8xf32>
    %c0_16 = arith.constant 0 : index
    %c0_17 = arith.constant 0 : index
    %24 = vector.load %arg4[%c0_16, %c0_17] : memref<392x392xf32, #tpu.memory_space<vmem>>, vector<392x392xf32>
    %c0_18 = arith.constant 0 : index
    %c0_19 = arith.constant 0 : index
    %25 = vector.load %arg5[%c0_18, %c0_19] : memref<392x392xf32, #tpu.memory_space<vmem>>, vector<392x392xf32>
    %cst_20 = arith.constant dense<0.000000e+00> : vector<8x392xf32>
    %26 = tpu.matmul %5, %24, %cst_20 {dimension_numbers = #tpu.dot_dimension_numbers<[1], [0], [0], [1], [0, 0, 1, 1], [], []>} : vector<8x392xf32>, vector<392x392xf32>, vector<8x392xf32> -> vector<8x392xf32>
    %c2 = arith.constant 2 : index
    %c0_21 = arith.constant 0 : index
    %27 = vector.load %arg10[%c2, %c0_21] : memref<32x512xf32, #tpu.memory_space<vmem>>, vector<1x392xf32>
    %28 = vector.broadcast %27 : vector<1x392xf32> to vector<8x392xf32>
    %29 = arith.addf %26, %28 : vector<8x392xf32>
    %30 = arith.negf %29 : vector<8x392xf32>
    %31 = math.exp %30 : vector<8x392xf32>
    %cst_22 = arith.constant 1.000000e+00 : f32
    %32 = vector.broadcast %cst_22 : f32 to vector<8x392xf32>
    %33 = arith.addf %32, %31 : vector<8x392xf32>
    %34 = arith.divf %32, %33 : vector<8x392xf32>
    %35 = arith.mulf %29, %34 : vector<8x392xf32>
    %cst_23 = arith.constant dense<0.000000e+00> : vector<8x392xf32>
    %36 = tpu.matmul %35, %25, %cst_23 {dimension_numbers = #tpu.dot_dimension_numbers<[1], [0], [0], [1], [0, 0, 1, 1], [], []>} : vector<8x392xf32>, vector<392x392xf32>, vector<8x392xf32> -> vector<8x392xf32>
    %c3 = arith.constant 3 : index
    %c0_24 = arith.constant 0 : index
    %37 = vector.load %arg10[%c3, %c0_24] : memref<32x512xf32, #tpu.memory_space<vmem>>, vector<1x392xf32>
    %38 = vector.broadcast %37 : vector<1x392xf32> to vector<8x392xf32>
    %39 = arith.addf %36, %38 : vector<8x392xf32>
    %c16 = arith.constant 16 : index
    %c0_25 = arith.constant 0 : index
    %40 = vector.load %arg10[%c16, %c0_25] : memref<32x512xf32, #tpu.memory_space<vmem>>, vector<8x392xf32>
    %cst_26 = arith.constant dense<0.000000e+00> : vector<8x392xf32>
    %41 = tpu.matmul %23, %40, %cst_26 {dimension_numbers = #tpu.dot_dimension_numbers<[1], [0], [0], [1], [0, 0, 1, 1], [], []>} : vector<8x8xf32>, vector<8x392xf32>, vector<8x392xf32> -> vector<8x392xf32>
    %c4 = arith.constant 4 : index
    %c0_27 = arith.constant 0 : index
    %42 = vector.load %arg10[%c4, %c0_27] : memref<32x512xf32, #tpu.memory_space<vmem>>, vector<1x392xf32>
    %43 = vector.broadcast %42 : vector<1x392xf32> to vector<8x392xf32>
    %44 = arith.addf %41, %43 : vector<8x392xf32>
    %45 = arith.negf %44 : vector<8x392xf32>
    %46 = math.exp %45 : vector<8x392xf32>
    %cst_28 = arith.constant 1.000000e+00 : f32
    %47 = vector.broadcast %cst_28 : f32 to vector<8x392xf32>
    %48 = arith.addf %47, %46 : vector<8x392xf32>
    %49 = arith.divf %47, %48 : vector<8x392xf32>
    %50 = arith.mulf %39, %49 : vector<8x392xf32>
    %cst_29 = arith.constant 1.000000e+00 : f32
    %51 = vector.broadcast %cst_29 : f32 to vector<8x392xf32>
    %52 = arith.mulf %50, %51 : vector<8x392xf32>
    %53 = arith.addf %5, %52 : vector<8x392xf32>
    %54 = arith.negf %53 : vector<8x392xf32>
    %55 = math.exp %54 : vector<8x392xf32>
    %cst_30 = arith.constant 1.000000e+00 : f32
    %56 = vector.broadcast %cst_30 : f32 to vector<8x392xf32>
    %57 = arith.addf %56, %55 : vector<8x392xf32>
    %58 = arith.divf %56, %57 : vector<8x392xf32>
    %59 = arith.mulf %53, %58 : vector<8x392xf32>
    %c0_31 = arith.constant 0 : index
    %c0_32 = arith.constant 0 : index
    %60 = vector.load %arg3[%c0_31, %c0_32] : memref<392x196xf32, #tpu.memory_space<vmem>>, vector<392x196xf32>
    %cst_33 = arith.constant dense<0.000000e+00> : vector<8x196xf32>
    %61 = tpu.matmul %59, %60, %cst_33 {dimension_numbers = #tpu.dot_dimension_numbers<[1], [0], [0], [1], [0, 0, 1, 1], [], []>} : vector<8x392xf32>, vector<392x196xf32>, vector<8x196xf32> -> vector<8x196xf32>
    %c1_34 = arith.constant 1 : index
    %c0_35 = arith.constant 0 : index
    %62 = vector.load %arg10[%c1_34, %c0_35] : memref<32x512xf32, #tpu.memory_space<vmem>>, vector<1x196xf32>
    %63 = vector.broadcast %62 : vector<1x196xf32> to vector<8x196xf32>
    %64 = arith.addf %61, %63 : vector<8x196xf32>
    %65 = arith.negf %64 : vector<8x196xf32>
    %66 = math.exp %65 : vector<8x196xf32>
    %cst_36 = arith.constant 1.000000e+00 : f32
    %67 = vector.broadcast %cst_36 : f32 to vector<8x196xf32>
    %68 = arith.addf %67, %66 : vector<8x196xf32>
    %69 = arith.divf %67, %68 : vector<8x196xf32>
    %70 = arith.mulf %64, %69 : vector<8x196xf32>
    %cst_37 = arith.constant dense<0.000000e+00> : vector<8x8xf32>
    %71 = tpu.matmul %70, %6, %cst_37 {dimension_numbers = #tpu.dot_dimension_numbers<[1], [0], [0], [1], [0, 0, 1, 1], [], []>} : vector<8x196xf32>, vector<196x8xf32>, vector<8x8xf32> -> vector<8x8xf32>
    %c9_38 = arith.constant 9 : index
    %c0_39 = arith.constant 0 : index
    %72 = vector.load %arg10[%c9_38, %c0_39] : memref<32x512xf32, #tpu.memory_space<vmem>>, vector<1x8xf32>
    %73 = vector.broadcast %72 : vector<1x8xf32> to vector<8x8xf32>
    %74 = arith.addf %71, %73 : vector<8x8xf32>
    %c0_40 = arith.constant 0 : index
    %c0_41 = arith.constant 0 : index
    %75 = vector.load %arg6[%c0_40, %c0_41] : memref<392x392xf32, #tpu.memory_space<vmem>>, vector<392x392xf32>
    %c0_42 = arith.constant 0 : index
    %c0_43 = arith.constant 0 : index
    %76 = vector.load %arg7[%c0_42, %c0_43] : memref<392x392xf32, #tpu.memory_space<vmem>>, vector<392x392xf32>
    %cst_44 = arith.constant dense<0.000000e+00> : vector<8x392xf32>
    %77 = tpu.matmul %59, %75, %cst_44 {dimension_numbers = #tpu.dot_dimension_numbers<[1], [0], [0], [1], [0, 0, 1, 1], [], []>} : vector<8x392xf32>, vector<392x392xf32>, vector<8x392xf32> -> vector<8x392xf32>
    %c5 = arith.constant 5 : index
    %c0_45 = arith.constant 0 : index
    %78 = vector.load %arg10[%c5, %c0_45] : memref<32x512xf32, #tpu.memory_space<vmem>>, vector<1x392xf32>
    %79 = vector.broadcast %78 : vector<1x392xf32> to vector<8x392xf32>
    %80 = arith.addf %77, %79 : vector<8x392xf32>
    %81 = arith.negf %80 : vector<8x392xf32>
    %82 = math.exp %81 : vector<8x392xf32>
    %cst_46 = arith.constant 1.000000e+00 : f32
    %83 = vector.broadcast %cst_46 : f32 to vector<8x392xf32>
    %84 = arith.addf %83, %82 : vector<8x392xf32>
    %85 = arith.divf %83, %84 : vector<8x392xf32>
    %86 = arith.mulf %80, %85 : vector<8x392xf32>
    %cst_47 = arith.constant dense<0.000000e+00> : vector<8x392xf32>
    %87 = tpu.matmul %86, %76, %cst_47 {dimension_numbers = #tpu.dot_dimension_numbers<[1], [0], [0], [1], [0, 0, 1, 1], [], []>} : vector<8x392xf32>, vector<392x392xf32>, vector<8x392xf32> -> vector<8x392xf32>
    %c6 = arith.constant 6 : index
    %c0_48 = arith.constant 0 : index
    %88 = vector.load %arg10[%c6, %c0_48] : memref<32x512xf32, #tpu.memory_space<vmem>>, vector<1x392xf32>
    %89 = vector.broadcast %88 : vector<1x392xf32> to vector<8x392xf32>
    %90 = arith.addf %87, %89 : vector<8x392xf32>
    %c24 = arith.constant 24 : index
    %c0_49 = arith.constant 0 : index
    %91 = vector.load %arg10[%c24, %c0_49] : memref<32x512xf32, #tpu.memory_space<vmem>>, vector<8x392xf32>
    %cst_50 = arith.constant dense<0.000000e+00> : vector<8x392xf32>
    %92 = tpu.matmul %74, %91, %cst_50 {dimension_numbers = #tpu.dot_dimension_numbers<[1], [0], [0], [1], [0, 0, 1, 1], [], []>} : vector<8x8xf32>, vector<8x392xf32>, vector<8x392xf32> -> vector<8x392xf32>
    %c7 = arith.constant 7 : index
    %c0_51 = arith.constant 0 : index
    %93 = vector.load %arg10[%c7, %c0_51] : memref<32x512xf32, #tpu.memory_space<vmem>>, vector<1x392xf32>
    %94 = vector.broadcast %93 : vector<1x392xf32> to vector<8x392xf32>
    %95 = arith.addf %92, %94 : vector<8x392xf32>
    %96 = arith.negf %95 : vector<8x392xf32>
    %97 = math.exp %96 : vector<8x392xf32>
    %cst_52 = arith.constant 1.000000e+00 : f32
    %98 = vector.broadcast %cst_52 : f32 to vector<8x392xf32>
    %99 = arith.addf %98, %97 : vector<8x392xf32>
    %100 = arith.divf %98, %99 : vector<8x392xf32>
    %101 = arith.mulf %90, %100 : vector<8x392xf32>
    %cst_53 = arith.constant 1.000000e+00 : f32
    %102 = vector.broadcast %cst_53 : f32 to vector<8x392xf32>
    %103 = arith.mulf %101, %102 : vector<8x392xf32>
    %104 = arith.addf %59, %103 : vector<8x392xf32>
    %105 = arith.negf %104 : vector<8x392xf32>
    %106 = math.exp %105 : vector<8x392xf32>
    %cst_54 = arith.constant 1.000000e+00 : f32
    %107 = vector.broadcast %cst_54 : f32 to vector<8x392xf32>
    %108 = arith.addf %107, %106 : vector<8x392xf32>
    %109 = arith.divf %107, %108 : vector<8x392xf32>
    %110 = arith.mulf %104, %109 : vector<8x392xf32>
    %c0_55 = arith.constant 0 : index
    %c0_56 = arith.constant 0 : index
    %111 = vector.load %arg8[%c0_55, %c0_56] : memref<392x98xf32, #tpu.memory_space<vmem>>, vector<392x98xf32>
    %cst_57 = arith.constant dense<0.000000e+00> : vector<8x98xf32>
    %112 = tpu.matmul %110, %111, %cst_57 {dimension_numbers = #tpu.dot_dimension_numbers<[1], [0], [0], [1], [0, 0, 1, 1], [], []>} : vector<8x392xf32>, vector<392x98xf32>, vector<8x98xf32> -> vector<8x98xf32>
    %c8 = arith.constant 8 : index
    %c0_58 = arith.constant 0 : index
    %113 = vector.load %arg10[%c8, %c0_58] : memref<32x512xf32, #tpu.memory_space<vmem>>, vector<1x98xf32>
    %114 = vector.broadcast %113 : vector<1x98xf32> to vector<8x98xf32>
    %115 = arith.addf %112, %114 : vector<8x98xf32>
    %cst_59 = arith.constant dense<0.000000e+00> : vector<8x32xf32>
    %116 = tpu.matmul %115, %7, %cst_59 {dimension_numbers = #tpu.dot_dimension_numbers<[1], [0], [0], [1], [0, 0, 1, 1], [], []>} : vector<8x98xf32>, vector<98x32xf32>, vector<8x32xf32> -> vector<8x32xf32>
    %c10 = arith.constant 10 : index
    %c0_60 = arith.constant 0 : index
    %117 = vector.load %arg10[%c10, %c0_60] : memref<32x512xf32, #tpu.memory_space<vmem>>, vector<1x32xf32>
    %118 = vector.broadcast %117 : vector<1x32xf32> to vector<8x32xf32>
    %119 = arith.addf %116, %118 : vector<8x32xf32>
    %120 = arith.negf %119 : vector<8x32xf32>
    %121 = math.exp %120 : vector<8x32xf32>
    %cst_61 = arith.constant 1.000000e+00 : f32
    %122 = vector.broadcast %cst_61 : f32 to vector<8x32xf32>
    %123 = arith.addf %122, %121 : vector<8x32xf32>
    %124 = arith.divf %122, %123 : vector<8x32xf32>
    %125 = arith.mulf %119, %124 : vector<8x32xf32>
    %cst_62 = arith.constant dense<0.000000e+00> : vector<8x10xf32>
    %126 = tpu.matmul %125, %8, %cst_62 {dimension_numbers = #tpu.dot_dimension_numbers<[1], [0], [0], [1], [0, 0, 1, 1], [], []>} : vector<8x32xf32>, vector<32x10xf32>, vector<8x10xf32> -> vector<8x10xf32>
    %c11 = arith.constant 11 : index
    %c0_63 = arith.constant 0 : index
    %127 = vector.load %arg10[%c11, %c0_63] : memref<32x512xf32, #tpu.memory_space<vmem>>, vector<1x10xf32>
    %128 = vector.broadcast %127 : vector<1x10xf32> to vector<8x10xf32>
    %129 = arith.addf %126, %128 : vector<8x10xf32>
    %c0_64 = arith.constant 0 : index
    %c0_65 = arith.constant 0 : index
    %130 = vector.load %arg11[%c0_64, %c0_65] : memref<8x10xf32, #tpu.memory_space<vmem>>, vector<8x10xf32>
    tpu.vector_store %arg11[%c0_64, %c0_65], %129 {strides = array<i32>} : memref<8x10xf32, #tpu.memory_space<vmem>>, vector<8x10xf32>,
    return
  }
  func.func @transform_0(%arg0: i32) -> (i32, i32) {
    %c0_i32 = arith.constant 0 : i32
    %c0_i32_0 = arith.constant 0 : i32
    return %arg0, %c0_i32 : i32, i32
  }
  func.func @transform_1(%arg0: i32) -> (i32, i32) {
    %c0_i32 = arith.constant 0 : i32
    %c0_i32_0 = arith.constant 0 : i32
    %c0_i32_1 = arith.constant 0 : i32
    return %c0_i32, %c0_i32_0 : i32, i32
  }
  func.func @transform_2(%arg0: i32) -> (i32, i32) {
    %c0_i32 = arith.constant 0 : i32
    %c0_i32_0 = arith.constant 0 : i32
    %c0_i32_1 = arith.constant 0 : i32
    return %c0_i32, %c0_i32_0 : i32, i32
  }
  func.func @transform_3(%arg0: i32) -> (i32, i32) {
    %c0_i32 = arith.constant 0 : i32
    %c0_i32_0 = arith.constant 0 : i32
    %c0_i32_1 = arith.constant 0 : i32
    return %c0_i32, %c0_i32_0 : i32, i32
  }
  func.func @transform_4(%arg0: i32) -> (i32, i32) {
    %c0_i32 = arith.constant 0 : i32
    %c0_i32_0 = arith.constant 0 : i32
    %c0_i32_1 = arith.constant 0 : i32
    return %c0_i32, %c0_i32_0 : i32, i32
  }
  func.func @transform_5(%arg0: i32) -> (i32, i32) {
    %c0_i32 = arith.constant 0 : i32
    %c0_i32_0 = arith.constant 0 : i32
    %c0_i32_1 = arith.constant 0 : i32
    return %c0_i32, %c0_i32_0 : i32, i32
  }
  func.func @transform_6(%arg0: i32) -> (i32, i32) {
    %c0_i32 = arith.constant 0 : i32
    %c0_i32_0 = arith.constant 0 : i32
    %c0_i32_1 = arith.constant 0 : i32
    return %c0_i32, %c0_i32_0 : i32, i32
  }
  func.func @transform_7(%arg0: i32) -> (i32, i32) {
    %c0_i32 = arith.constant 0 : i32
    %c0_i32_0 = arith.constant 0 : i32
    %c0_i32_1 = arith.constant 0 : i32
    return %c0_i32, %c0_i32_0 : i32, i32
  }
  func.func @transform_8(%arg0: i32) -> (i32, i32) {
    %c0_i32 = arith.constant 0 : i32
    %c0_i32_0 = arith.constant 0 : i32
    %c0_i32_1 = arith.constant 0 : i32
    return %c0_i32, %c0_i32_0 : i32, i32
  }
  func.func @transform_9(%arg0: i32) -> (i32, i32) {
    %c0_i32 = arith.constant 0 : i32
    %c0_i32_0 = arith.constant 0 : i32
    %c0_i32_1 = arith.constant 0 : i32
    return %c0_i32, %c0_i32_0 : i32, i32
  }
  func.func @transform_10(%arg0: i32) -> (i32, i32) {
    %c0_i32 = arith.constant 0 : i32
    %c0_i32_0 = arith.constant 0 : i32
    return %arg0, %c0_i32 : i32, i32
  }
}

</mosaic_0001>

<llo_original>
// kernel: scacnn_forward.1
$region0: #{scacnn_forward.1}
  #allocation0 [shape = 'u32[]', space=smem, size = 0x4, offset = 0x4, fixed_abs, tag = 'smem constant byte address 0x4 - core index']
  #allocation1 [shape = 'u32[144,128]{1,0:T(1,128)}', space=vmem, size = 0x12000, scoped, tag = 'internal scratch']
  %s0 = inlined_call_operand.vmem [shape: f32[8,784], index: 0, kind: input, shape index: {}]
  %s1 = inlined_call_operand.vmem [shape: f32[784,392], index: 1, kind: input, shape index: {}]
  %s2 = inlined_call_operand.vmem [shape: f32[392,196], index: 2, kind: input, shape index: {}]
  %s3 = inlined_call_operand.vmem [shape: f32[392,392], index: 3, kind: input, shape index: {}]
  %s4 = inlined_call_operand.vmem [shape: f32[392,392], index: 4, kind: input, shape index: {}]
  %s5 = inlined_call_operand.vmem [shape: f32[392,392], index: 5, kind: input, shape index: {}]
  %s6 = inlined_call_operand.vmem [shape: f32[392,392], index: 6, kind: input, shape index: {}]
  %s7 = inlined_call_operand.vmem [shape: f32[392,98], index: 7, kind: input, shape index: {}]
  %s8 = inlined_call_operand.vmem [shape: f32[336,32], index: 8, kind: input, shape index: {}]
  %s9 = inlined_call_operand.vmem [shape: f32[32,512], index: 9, kind: input, shape index: {}]
  %s10 = inlined_call_operand.vmem [shape: f32[8,10], index: 10, kind: output, shape index: {}]
  %s11 = sld [smem:[#allocation0]]
  $region50: #{scacnn_forward.1} parent=0
    _
  %s13 = ssub.s32 1, %s11
  %s14 = scalar_select 0, %s13, %s11
  // Predicated region
  $region2: #{scacnn_forward.1} parent=0 // pred_check
    _
  $region3: #{scacnn_forward.1} parent=0 // pred_check_branch
    %16 = sbr.rel (0) target = $region5
  $region4: #{scacnn_forward.1} parent=0 // pred_region
    _
  $region5: #{scacnn_forward.1} parent=0 // pred_fallthru
    _
  // Predicated region
  $region6: #{scacnn_forward.1} parent=0 // pred_check
    _
  $region7: #{scacnn_forward.1} parent=0 // pred_check_branch
    %18 = sbr.rel (0) target = $region9
  $region8: #{scacnn_forward.1} parent=0 // pred_region
    _
  $region9: #{scacnn_forward.1} parent=0 // pred_fallthru
    _
  // Predicated region
  $region10: #{scacnn_forward.1} parent=0 // pred_check
    _
  $region11: #{scacnn_forward.1} parent=0 // pred_check_branch
    %20 = sbr.rel (0) target = $region13
  $region12: #{scacnn_forward.1} parent=0 // pred_region
    _
  $region13: #{scacnn_forward.1} parent=0 // pred_fallthru
    _
  // Predicated region
  $region14: #{scacnn_forward.1} parent=0 // pred_check
    _
  $region15: #{scacnn_forward.1} parent=0 // pred_check_branch
    %22 = sbr.rel (0) target = $region17
  $region16: #{scacnn_forward.1} parent=0 // pred_region
    _
  $region17: #{scacnn_forward.1} parent=0 // pred_fallthru
    _
  // Predicated region
  $region18: #{scacnn_forward.1} parent=0 // pred_check
    _
  $region19: #{scacnn_forward.1} parent=0 // pred_check_branch
    %24 = sbr.rel (0) target = $region21
  $region20: #{scacnn_forward.1} parent=0 // pred_region
    _
  $region21: #{scacnn_forward.1} parent=0 // pred_fallthru
    _
  // Predicated region
  $region22: #{scacnn_forward.1} parent=0 // pred_check
    _
  $region23: #{scacnn_forward.1} parent=0 // pred_check_branch
    %26 = sbr.rel (0) target = $region25
  $region24: #{scacnn_forward.1} parent=0 // pred_region
    _
  $region25: #{scacnn_forward.1} parent=0 // pred_fallthru
    _
  // Predicated region
  $region26: #{scacnn_forward.1} parent=0 // pred_check
    _
  $region27: #{scacnn_forward.1} parent=0 // pred_check_branch
    %28 = sbr.rel (0) target = $region29
  $region28: #{scacnn_forward.1} parent=0 // pred_region
    _
  $region29: #{scacnn_forward.1} parent=0 // pred_fallthru
    _
  // Predicated region
  $region30: #{scacnn_forward.1} parent=0 // pred_check
    _
  $region31: #{scacnn_forward.1} parent=0 // pred_check_branch
    %30 = sbr.rel (0) target = $region33
  $region32: #{scacnn_forward.1} parent=0 // pred_region
    _
  $region33: #{scacnn_forward.1} parent=0 // pred_fallthru
    _
  // Predicated region
  $region34: #{scacnn_forward.1} parent=0 // pred_check
    _
  $region35: #{scacnn_forward.1} parent=0 // pred_check_branch
    %32 = sbr.rel (0) target = $region37
  $region36: #{scacnn_forward.1} parent=0 // pred_region
    _
  $region37: #{scacnn_forward.1} parent=0 // pred_fallthru
    _
  // Predicated region
  $region38: #{scacnn_forward.1} parent=0 // pred_check
    _
  $region39: #{scacnn_forward.1} parent=0 // pred_check_branch
    %34 = sbr.rel (0) target = $region41
  $region40: #{scacnn_forward.1} parent=0 // pred_region
    _
  $region41: #{scacnn_forward.1} parent=0 // pred_fallthru
    _
  %v35 = vld [vmem:[%s0] sm:$0xff]
  %v36 = vld [vmem:[%s0 + $0x8] sm:$0xff]
  %v37 = vld [vmem:[%s0 + $0x10] sm:$0xff]
  %v38 = vld [vmem:[%s0 + $0x18] sm:$0xff]
  %v39 = vld [vmem:[%s0 + $0x20] sm:$0xff]
  %v40 = vld [vmem:[%s0 + $0x28] sm:$0xff]
  %v41 = vld [vmem:[%s0 + $0x30] sm:$0xff]
  %v42 = vld [vmem:[%s1] sm:$0xff]
  %v43 = vld [vmem:[%s1 + $0x8] sm:$0xff]
  %v44 = vld [vmem:[%s1 + $0x10] sm:$0xff]
  %v45 = vld [vmem:[%s1 + $0x18] sm:$0xff]
  %v46 = vld [vmem:[%s1 + $0x20] sm:$0xff]
  %v47 = vld [vmem:[%s1 + $0x28] sm:$0xff]
  %v48 = vld [vmem:[%s1 + $0x30] sm:$0xff]
  %v49 = vld [vmem:[%s1 + $0x38] sm:$0xff]
  %v50 = vld [vmem:[%s1 + $0x40] sm:$0xff]
  %v51 = vld [vmem:[%s1 + $0x48] sm:$0xff]
  %v52 = vld [vmem:[%s1 + $0x50] sm:$0xff]
  %v53 = vld [vmem:[%s1 + $0x58] sm:$0xff]
  %v54 = vld [vmem:[%s1 + $0x60] sm:$0xff]
  %v55 = vld [vmem:[%s1 + $0x68] sm:$0xff]
  %v56 = vld [vmem:[%s1 + $0x70] sm:$0xff]
  %v57 = vld [vmem:[%s1 + $0x78] sm:$0xff]
  %v58 = vld [vmem:[%s1 + $0x80] sm:$0xff]
  %v59 = vld [vmem:[%s1 + $0x88] sm:$0xff]
  %v60 = vld [vmem:[%s1 + $0x90] sm:$0xff]
  %v61 = vld [vmem:[%s1 + $0x98] sm:$0xff]
  %v62 = vld [vmem:[%s1 + $0xa0] sm:$0xff]
  %v63 = vld [vmem:[%s1 + $0xa8] sm:$0xff]
  %v64 = vld [vmem:[%s1 + $0xb0] sm:$0xff]
  %v65 = vld [vmem:[%s1 + $0xb8] sm:$0xff]
  %v66 = vld [vmem:[%s1 + $0xc0] sm:$0xff]
  %v67 = vld [vmem:[%s1 + $0xc8] sm:$0xff]
  %v68 = vld [vmem:[%s1 + $0xd0] sm:$0xff]
  %v69 = vld [vmem:[%s1 + $0xd8] sm:$0xff]
  %v70 = vld [vmem:[%s1 + $0xe0] sm:$0xff]
  %v71 = vld [vmem:[%s1 + $0xe8] sm:$0xff]
  %v72 = vld [vmem:[%s1 + $0xf0] sm:$0xff]
  %v73 = vld [vmem:[%s1 + $0xf8] sm:$0xff]
  %v74 = vld [vmem:[%s1 + $0x100] sm:$0xff]
  %v75 = vld [vmem:[%s1 + $0x108] sm:$0xff]
  %v76 = vld [vmem:[%s1 + $0x110] sm:$0xff]
  %v77 = vld [vmem:[%s1 + $0x118] sm:$0xff]
  %v78 = vld [vmem:[%s1 + $0x120] sm:$0xff]
  %v79 = vld [vmem:[%s1 + $0x128] sm:$0xff]
  %v80 = vld [vmem:[%s1 + $0x130] sm:$0xff]
  %v81 = vld [vmem:[%s1 + $0x138] sm:$0xff]
  %v82 = vld [vmem:[%s1 + $0x140] sm:$0xff]
  %v83 = vld [vmem:[%s1 + $0x148] sm:$0xff]
  %v84 = vld [vmem:[%s1 + $0x150] sm:$0xff]
  %v85 = vld [vmem:[%s1 + $0x158] sm:$0xff]
  %v86 = vld [vmem:[%s1 + $0x160] sm:$0xff]
  %v87 = vld [vmem:[%s1 + $0x168] sm:$0xff]
  %v88 = vld [vmem:[%s1 + $0x170] sm:$0xff]
  %v89 = vld [vmem:[%s1 + $0x178] sm:$0xff]
  %v90 = vld [vmem:[%s1 + $0x180] sm:$0xff]
  %v91 = vld [vmem:[%s1 + $0x188] sm:$0xff]
  %v92 = vld [vmem:[%s1 + $0x190] sm:$0xff]
  %v93 = vld [vmem:[%s1 + $0x198] sm:$0xff]
  %v94 = vld [vmem:[%s1 + $0x1a0] sm:$0xff]
  %v95 = vld [vmem:[%s1 + $0x1a8] sm:$0xff]
  %v96 = vld [vmem:[%s1 + $0x1b0] sm:$0xff]
  %v97 = vld [vmem:[%s1 + $0x1b8] sm:$0xff]
  %v98 = vld [vmem:[%s1 + $0x1c0] sm:$0xff]
  %v99 = vld [vmem:[%s1 + $0x1c8] sm:$0xff]
  %v100 = vld [vmem:[%s1 + $0x1d0] sm:$0xff]
  %v101 = vld [vmem:[%s1 + $0x1d8] sm:$0xff]
  %v102 = vld [vmem:[%s1 + $0x1e0] sm:$0xff]
  %v103 = vld [vmem:[%s1 + $0x1e8] sm:$0xff]
  %v104 = vld [vmem:[%s1 + $0x1f0] sm:$0xff]
  %v105 = vld [vmem:[%s1 + $0x1f8] sm:$0xff]
  %v106 = vld [vmem:[%s1 + $0x200] sm:$0xff]
  %v107 = vld [vmem:[%s1 + $0x208] sm:$0xff]
  %v108 = vld [vmem:[%s1 + $0x210] sm:$0xff]
  %v109 = vld [vmem:[%s1 + $0x218] sm:$0xff]
  %v110 = vld [vmem:[%s1 + $0x220] sm:$0xff]
  %v111 = vld [vmem:[%s1 + $0x228] sm:$0xff]
  %v112 = vld [vmem:[%s1 + $0x230] sm:$0xff]
  %v113 = vld [vmem:[%s1 + $0x238] sm:$0xff]
  %v114 = vld [vmem:[%s1 + $0x240] sm:$0xff]
  %v115 = vld [vmem:[%s1 + $0x248] sm:$0xff]
  %v116 = vld [vmem:[%s1 + $0x250] sm:$0xff]
  %v117 = vld [vmem:[%s1 + $0x258] sm:$0xff]
  %v118 = vld [vmem:[%s1 + $0x260] sm:$0xff]
  %v119 = vld [vmem:[%s1 + $0x268] sm:$0xff]
  %v120 = vld [vmem:[%s1 + $0x270] sm:$0xff]
  %v121 = vld [vmem:[%s1 + $0x278] sm:$0xff]
  %v122 = vld [vmem:[%s1 + $0x280] sm:$0xff]
  %v123 = vld [vmem:[%s1 + $0x288] sm:$0xff]
  %v124 = vld [vmem:[%s1 + $0x290] sm:$0xff]
  %v125 = vld [vmem:[%s1 + $0x298] sm:$0xff]
  %v126 = vld [vmem:[%s1 + $0x2a0] sm:$0xff]
  %v127 = vld [vmem:[%s1 + $0x2a8] sm:$0xff]
  %v128 = vld [vmem:[%s1 + $0x2b0] sm:$0xff]
  %v129 = vld [vmem:[%s1 + $0x2b8] sm:$0xff]
  %v130 = vld [vmem:[%s1 + $0x2c0] sm:$0xff]
  %v131 = vld [vmem:[%s1 + $0x2c8] sm:$0xff]
  %v132 = vld [vmem:[%s1 + $0x2d0] sm:$0xff]
  %v133 = vld [vmem:[%s1 + $0x2d8] sm:$0xff]
  %v134 = vld [vmem:[%s1 + $0x2e0] sm:$0xff]
  %v135 = vld [vmem:[%s1 + $0x2e8] sm:$0xff]
  %v136 = vld [vmem:[%s1 + $0x2f0] sm:$0xff]
  %v137 = vld [vmem:[%s1 + $0x2f8] sm:$0xff]
  %v138 = vld [vmem:[%s1 + $0x300] sm:$0xff]
  %v139 = vld [vmem:[%s1 + $0x308] sm:$0xff]
  %v140 = vld [vmem:[%s1 + $0x310] sm:$0xff]
  %v141 = vld [vmem:[%s1 + $0x318] sm:$0xff]
  %v142 = vld [vmem:[%s1 + $0x320] sm:$0xff]
  %v143 = vld [vmem:[%s1 + $0x328] sm:$0xff]
  %v144 = vld [vmem:[%s1 + $0x330] sm:$0xff]
  %v145 = vld [vmem:[%s1 + $0x338] sm:$0xff]
  %v146 = vld [vmem:[%s1 + $0x340] sm:$0xff]
  %v147 = vld [vmem:[%s1 + $0x348] sm:$0xff]
  %v148 = vld [vmem:[%s1 + $0x350] sm:$0xff]
  %v149 = vld [vmem:[%s1 + $0x358] sm:$0xff]
  %v150 = vld [vmem:[%s1 + $0x360] sm:$0xff]
  %v151 = vld [vmem:[%s1 + $0x368] sm:$0xff]
  %v152 = vld [vmem:[%s1 + $0x370] sm:$0xff]
  %v153 = vld [vmem:[%s1 + $0x378] sm:$0xff]
  %v154 = vld [vmem:[%s1 + $0x380] sm:$0xff]
  %v155 = vld [vmem:[%s1 + $0x388] sm:$0xff]
  %v156 = vld [vmem:[%s1 + $0x390] sm:$0xff]
  %v157 = vld [vmem:[%s1 + $0x398] sm:$0xff]
  %v158 = vld [vmem:[%s1 + $0x3a0] sm:$0xff]
  %v159 = vld [vmem:[%s1 + $0x3a8] sm:$0xff]
  %v160 = vld [vmem:[%s1 + $0x3b0] sm:$0xff]
  %v161 = vld [vmem:[%s1 + $0x3b8] sm:$0xff]
  %v162 = vld [vmem:[%s1 + $0x3c0] sm:$0xff]
  %v163 = vld [vmem:[%s1 + $0x3c8] sm:$0xff]
  %v164 = vld [vmem:[%s1 + $0x3d0] sm:$0xff]
  %v165 = vld [vmem:[%s1 + $0x3d8] sm:$0xff]
  %v166 = vld [vmem:[%s1 + $0x3e0] sm:$0xff]
  %v167 = vld [vmem:[%s1 + $0x3e8] sm:$0xff]
  %v168 = vld [vmem:[%s1 + $0x3f0] sm:$0xff]
  %v169 = vld [vmem:[%s1 + $0x3f8] sm:$0xff]
  %v170 = vld [vmem:[%s1 + $0x400] sm:$0xff]
  %v171 = vld [vmem:[%s1 + $0x408] sm:$0xff]
  %v172 = vld [vmem:[%s1 + $0x410] sm:$0xff]
  %v173 = vld [vmem:[%s1 + $0x418] sm:$0xff]
  %v174 = vld [vmem:[%s1 + $0x420] sm:$0xff]
  %v175 = vld [vmem:[%s1 + $0x428] sm:$0xff]
  %v176 = vld [vmem:[%s1 + $0x430] sm:$0xff]
  %v177 = vld [vmem:[%s1 + $0x438] sm:$0xff]
  %v178 = vld [vmem:[%s1 + $0x440] sm:$0xff]
  %v179 = vld [vmem:[%s1 + $0x448] sm:$0xff]
  %v180 = vld [vmem:[%s1 + $0x450] sm:$0xff]
  %v181 = vld [vmem:[%s1 + $0x458] sm:$0xff]
  %v182 = vld [vmem:[%s1 + $0x460] sm:$0xff]
  %v183 = vld [vmem:[%s1 + $0x468] sm:$0xff]
  %v184 = vld [vmem:[%s1 + $0x470] sm:$0xff]
  %v185 = vld [vmem:[%s1 + $0x478] sm:$0xff]
  %v186 = vld [vmem:[%s1 + $0x480] sm:$0xff]
  %v187 = vld [vmem:[%s1 + $0x488] sm:$0xff]
  %v188 = vld [vmem:[%s1 + $0x490] sm:$0xff]
  %v189 = vld [vmem:[%s1 + $0x498] sm:$0xff]
  %v190 = vld [vmem:[%s1 + $0x4a0] sm:$0xff]
  %v191 = vld [vmem:[%s1 + $0x4a8] sm:$0xff]
  %v192 = vld [vmem:[%s1 + $0x4b0] sm:$0xff]
  %v193 = vld [vmem:[%s1 + $0x4b8] sm:$0xff]
  %v194 = vld [vmem:[%s1 + $0x4c0] sm:$0xff]
  %v195 = vld [vmem:[%s1 + $0x4c8] sm:$0xff]
  %v196 = vld [vmem:[%s1 + $0x4d0] sm:$0xff]
  %v197 = vld [vmem:[%s1 + $0x4d8] sm:$0xff]
  %v198 = vld [vmem:[%s1 + $0x4e0] sm:$0xff]
  %v199 = vld [vmem:[%s1 + $0x4e8] sm:$0xff]
  %v200 = vld [vmem:[%s1 + $0x4f0] sm:$0xff]
  %v201 = vld [vmem:[%s1 + $0x4f8] sm:$0xff]
  %v202 = vld [vmem:[%s1 + $0x500] sm:$0xff]
  %v203 = vld [vmem:[%s1 + $0x508] sm:$0xff]
  %v204 = vld [vmem:[%s1 + $0x510] sm:$0xff]
  %v205 = vld [vmem:[%s1 + $0x518] sm:$0xff]
  %v206 = vld [vmem:[%s1 + $0x520] sm:$0xff]
  %v207 = vld [vmem:[%s1 + $0x528] sm:$0xff]
  %v208 = vld [vmem:[%s1 + $0x530] sm:$0xff]
  %v209 = vld [vmem:[%s1 + $0x538] sm:$0xff]
  %v210 = vld [vmem:[%s1 + $0x540] sm:$0xff]
  %v211 = vld [vmem:[%s1 + $0x548] sm:$0xff]
  %v212 = vld [vmem:[%s1 + $0x550] sm:$0xff]
  %v213 = vld [vmem:[%s1 + $0x558] sm:$0xff]
  %v214 = vld [vmem:[%s1 + $0x560] sm:$0xff]
  %v215 = vld [vmem:[%s1 + $0x568] sm:$0xff]
  %v216 = vld [vmem:[%s1 + $0x570] sm:$0xff]
  %v217 = vld [vmem:[%s1 + $0x578] sm:$0xff]
  %v218 = vld [vmem:[%s1 + $0x580] sm:$0xff]
  %v219 = vld [vmem:[%s1 + $0x588] sm:$0xff]
  %v220 = vld [vmem:[%s1 + $0x590] sm:$0xff]
  %v221 = vld [vmem:[%s1 + $0x598] sm:$0xff]
  %v222 = vld [vmem:[%s1 + $0x5a0] sm:$0xff]
  %v223 = vld [vmem:[%s1 + $0x5a8] sm:$0xff]
  %v224 = vld [vmem:[%s1 + $0x5b0] sm:$0xff]
  %v225 = vld [vmem:[%s1 + $0x5b8] sm:$0xff]
  %v226 = vld [vmem:[%s1 + $0x5c0] sm:$0xff]
  %v227 = vld [vmem:[%s1 + $0x5c8] sm:$0xff]
  %v228 = vld [vmem:[%s1 + $0x5d0] sm:$0xff]
  %v229 = vld [vmem:[%s1 + $0x5d8] sm:$0xff]
  %v230 = vld [vmem:[%s1 + $0x5e0] sm:$0xff]
  %v231 = vld [vmem:[%s1 + $0x5e8] sm:$0xff]
  %v232 = vld [vmem:[%s1 + $0x5f0] sm:$0xff]
  %v233 = vld [vmem:[%s1 + $0x5f8] sm:$0xff]
  %v234 = vld [vmem:[%s1 + $0x600] sm:$0xff]
  %v235 = vld [vmem:[%s1 + $0x608] sm:$0xff]
  %v236 = vld [vmem:[%s1 + $0x610] sm:$0xff]
  %v237 = vld [vmem:[%s1 + $0x618] sm:$0xff]
  %v238 = vld [vmem:[%s1 + $0x620] sm:$0xff]
  %v239 = vld [vmem:[%s1 + $0x628] sm:$0xff]
  %v240 = vld [vmem:[%s1 + $0x630] sm:$0xff]
  %v241 = vld [vmem:[%s1 + $0x638] sm:$0xff]
  %v242 = vld [vmem:[%s1 + $0x640] sm:$0xff]
  %v243 = vld [vmem:[%s1 + $0x648] sm:$0xff]
  %v244 = vld [vmem:[%s1 + $0x650] sm:$0xff]
  %v245 = vld [vmem:[%s1 + $0x658] sm:$0xff]
  %v246 = vld [vmem:[%s1 + $0x660] sm:$0xff]
  %v247 = vld [vmem:[%s1 + $0x668] sm:$0xff]
  %v248 = vld [vmem:[%s1 + $0x670] sm:$0xff]
  %v249 = vld [vmem:[%s1 + $0x678] sm:$0xff]
  %v250 = vld [vmem:[%s1 + $0x680] sm:$0xff]
  %v251 = vld [vmem:[%s1 + $0x688] sm:$0xff]
  %v252 = vld [vmem:[%s1 + $0x690] sm:$0xff]
  %v253 = vld [vmem:[%s1 + $0x698] sm:$0xff]
  %v254 = vld [vmem:[%s1 + $0x6a0] sm:$0xff]
  %v255 = vld [vmem:[%s1 + $0x6a8] sm:$0xff]
  %v256 = vld [vmem:[%s1 + $0x6b0] sm:$0xff]
  %v257 = vld [vmem:[%s1 + $0x6b8] sm:$0xff]
  %v258 = vld [vmem:[%s1 + $0x6c0] sm:$0xff]
  %v259 = vld [vmem:[%s1 + $0x6c8] sm:$0xff]
  %v260 = vld [vmem:[%s1 + $0x6d0] sm:$0xff]
  %v261 = vld [vmem:[%s1 + $0x6d8] sm:$0xff]
  %v262 = vld [vmem:[%s1 + $0x6e0] sm:$0xff]
  %v263 = vld [vmem:[%s1 + $0x6e8] sm:$0xff]
  %v264 = vld [vmem:[%s1 + $0x6f0] sm:$0xff]
  %v265 = vld [vmem:[%s1 + $0x6f8] sm:$0xff]
  %v266 = vld [vmem:[%s1 + $0x700] sm:$0xff]
  %v267 = vld [vmem:[%s1 + $0x708] sm:$0xff]
  %v268 = vld [vmem:[%s1 + $0x710] sm:$0xff]
  %v269 = vld [vmem:[%s1 + $0x718] sm:$0xff]
  %v270 = vld [vmem:[%s1 + $0x720] sm:$0xff]
  %v271 = vld [vmem:[%s1 + $0x728] sm:$0xff]
  %v272 = vld [vmem:[%s1 + $0x730] sm:$0xff]
  %v273 = vld [vmem:[%s1 + $0x738] sm:$0xff]
  %v274 = vld [vmem:[%s1 + $0x740] sm:$0xff]
  %v275 = vld [vmem:[%s1 + $0x748] sm:$0xff]
  %v276 = vld [vmem:[%s1 + $0x750] sm:$0xff]
  %v277 = vld [vmem:[%s1 + $0x758] sm:$0xff]
  %v278 = vld [vmem:[%s1 + $0x760] sm:$0xff]
  %v279 = vld [vmem:[%s1 + $0x768] sm:$0xff]
  %v280 = vld [vmem:[%s1 + $0x770] sm:$0xff]
  %v281 = vld [vmem:[%s1 + $0x778] sm:$0xff]
  %v282 = vld [vmem:[%s1 + $0x780] sm:$0xff]
  %v283 = vld [vmem:[%s1 + $0x788] sm:$0xff]
  %v284 = vld [vmem:[%s1 + $0x790] sm:$0xff]
  %v285 = vld [vmem:[%s1 + $0x798] sm:$0xff]
  %v286 = vld [vmem:[%s1 + $0x7a0] sm:$0xff]
  %v287 = vld [vmem:[%s1 + $0x7a8] sm:$0xff]
  %v288 = vld [vmem:[%s1 + $0x7b0] sm:$0xff]
  %v289 = vld [vmem:[%s1 + $0x7b8] sm:$0xff]
  %v290 = vld [vmem:[%s1 + $0x7c0] sm:$0xff]
  %v291 = vld [vmem:[%s1 + $0x7c8] sm:$0xff]
  %v292 = vld [vmem:[%s1 + $0x7d0] sm:$0xff]
  %v293 = vld [vmem:[%s1 + $0x7d8] sm:$0xff]
  %v294 = vld [vmem:[%s1 + $0x7e0] sm:$0xff]
  %v295 = vld [vmem:[%s1 + $0x7e8] sm:$0xff]
  %v296 = vld [vmem:[%s1 + $0x7f0] sm:$0xff]
  %v297 = vld [vmem:[%s1 + $0x7f8] sm:$0xff]
  %v298 = vld [vmem:[%s1 + $0x800] sm:$0xff]
  %v299 = vld [vmem:[%s1 + $0x808] sm:$0xff]
  %v300 = vld [vmem:[%s1 + $0x810] sm:$0xff]
  %v301 = vld [vmem:[%s1 + $0x818] sm:$0xff]
  %v302 = vld [vmem:[%s1 + $0x820] sm:$0xff]
  %v303 = vld [vmem:[%s1 + $0x828] sm:$0xff]
  %v304 = vld [vmem:[%s1 + $0x830] sm:$0xff]
  %v305 = vld [vmem:[%s1 + $0x838] sm:$0xff]
  %v306 = vld [vmem:[%s1 + $0x840] sm:$0xff]
  %v307 = vld [vmem:[%s1 + $0x848] sm:$0xff]
  %v308 = vld [vmem:[%s1 + $0x850] sm:$0xff]
  %v309 = vld [vmem:[%s1 + $0x858] sm:$0xff]
  %v310 = vld [vmem:[%s1 + $0x860] sm:$0xff]
  %v311 = vld [vmem:[%s1 + $0x868] sm:$0xff]
  %v312 = vld [vmem:[%s1 + $0x870] sm:$0xff]
  %v313 = vld [vmem:[%s1 + $0x878] sm:$0xff]
  %v314 = vld [vmem:[%s1 + $0x880] sm:$0xff]
  %v315 = vld [vmem:[%s1 + $0x888] sm:$0xff]
  %v316 = vld [vmem:[%s1 + $0x890] sm:$0xff]
  %v317 = vld [vmem:[%s1 + $0x898] sm:$0xff]
  %v318 = vld [vmem:[%s1 + $0x8a0] sm:$0xff]
  %v319 = vld [vmem:[%s1 + $0x8a8] sm:$0xff]
  %v320 = vld [vmem:[%s1 + $0x8b0] sm:$0xff]
  %v321 = vld [vmem:[%s1 + $0x8b8] sm:$0xff]
  %v322 = vld [vmem:[%s1 + $0x8c0] sm:$0xff]
  %v323 = vld [vmem:[%s1 + $0x8c8] sm:$0xff]
  %v324 = vld [vmem:[%s1 + $0x8d0] sm:$0xff]
  %v325 = vld [vmem:[%s1 + $0x8d8] sm:$0xff]
  %v326 = vld [vmem:[%s1 + $0x8e0] sm:$0xff]
  %v327 = vld [vmem:[%s1 + $0x8e8] sm:$0xff]
  %v328 = vld [vmem:[%s1 + $0x8f0] sm:$0xff]
  %v329 = vld [vmem:[%s1 + $0x8f8] sm:$0xff]
  %v330 = vld [vmem:[%s1 + $0x900] sm:$0xff]
  %v331 = vld [vmem:[%s1 + $0x908] sm:$0xff]
  %v332 = vld [vmem:[%s1 + $0x910] sm:$0xff]
  %v333 = vld [vmem:[%s1 + $0x918] sm:$0xff]
  %v334 = vld [vmem:[%s1 + $0x920] sm:$0xff]
  %v335 = vld [vmem:[%s1 + $0x928] sm:$0xff]
  %v336 = vld [vmem:[%s1 + $0x930] sm:$0xff]
  %v337 = vld [vmem:[%s1 + $0x938] sm:$0xff]
  %v338 = vld [vmem:[%s1 + $0x940] sm:$0xff]
  %v339 = vld [vmem:[%s1 + $0x948] sm:$0xff]
  %v340 = vld [vmem:[%s1 + $0x950] sm:$0xff]
  %v341 = vld [vmem:[%s1 + $0x958] sm:$0xff]
  %v342 = vld [vmem:[%s1 + $0x960] sm:$0xff]
  %v343 = vld [vmem:[%s1 + $0x968] sm:$0xff]
  %v344 = vld [vmem:[%s1 + $0x970] sm:$0xff]
  %v345 = vld [vmem:[%s1 + $0x978] sm:$0xff]
  %v346 = vld [vmem:[%s1 + $0x980] sm:$0xff]
  %v347 = vld [vmem:[%s1 + $0x988] sm:$0xff]
  %v348 = vld [vmem:[%s1 + $0x990] sm:$0xff]
  %v349 = vld [vmem:[%s1 + $0x998] sm:$0xff]
  %v350 = vld [vmem:[%s1 + $0x9a0] sm:$0xff]
  %v351 = vld [vmem:[%s1 + $0x9a8] sm:$0xff]
  %v352 = vld [vmem:[%s1 + $0x9b0] sm:$0xff]
  %v353 = vld [vmem:[%s1 + $0x9b8] sm:$0xff]
  %v354 = vld [vmem:[%s1 + $0x9c0] sm:$0xff]
  %v355 = vld [vmem:[%s1 + $0x9c8] sm:$0xff]
  %v356 = vld [vmem:[%s1 + $0x9d0] sm:$0xff]
  %v357 = vld [vmem:[%s1 + $0x9d8] sm:$0xff]
  %v358 = vld [vmem:[%s1 + $0x9e0] sm:$0xff]
  %v359 = vld [vmem:[%s1 + $0x9e8] sm:$0xff]
  %v360 = vld [vmem:[%s1 + $0x9f0] sm:$0xff]
  %v361 = vld [vmem:[%s1 + $0x9f8] sm:$0xff]
  %v362 = vld [vmem:[%s1 + $0xa00] sm:$0xff]
  %v363 = vld [vmem:[%s1 + $0xa08] sm:$0xff]
  %v364 = vld [vmem:[%s1 + $0xa10] sm:$0xff]
  %v365 = vld [vmem:[%s1 + $0xa18] sm:$0xff]
  %v366 = vld [vmem:[%s1 + $0xa20] sm:$0xff]
  %v367 = vld [vmem:[%s1 + $0xa28] sm:$0xff]
  %v368 = vld [vmem:[%s1 + $0xa30] sm:$0xff]
  %v369 = vld [vmem:[%s1 + $0xa38] sm:$0xff]
  %v370 = vld [vmem:[%s1 + $0xa40] sm:$0xff]
  %v371 = vld [vmem:[%s1 + $0xa48] sm:$0xff]
  %v372 = vld [vmem:[%s1 + $0xa50] sm:$0xff]
  %v373 = vld [vmem:[%s1 + $0xa58] sm:$0xff]
  %v374 = vld [vmem:[%s1 + $0xa60] sm:$0xff]
  %v375 = vld [vmem:[%s1 + $0xa68] sm:$0xff]
  %v376 = vld [vmem:[%s1 + $0xa70] sm:$0xff]
  %v377 = vld [vmem:[%s1 + $0xa78] sm:$0xff]
  %v378 = vld [vmem:[%s1 + $0xa80] sm:$0xff]
  %v379 = vld [vmem:[%s1 + $0xa88] sm:$0xff]
  %v380 = vld [vmem:[%s1 + $0xa90] sm:$0xff]
  %v381 = vld [vmem:[%s1 + $0xa98] sm:$0xff]
  %v382 = vld [vmem:[%s1 + $0xaa0] sm:$0xff]
  %v383 = vld [vmem:[%s1 + $0xaa8] sm:$0xff]
  %v384 = vld [vmem:[%s1 + $0xab0] sm:$0xff]
  %v385 = vld [vmem:[%s1 + $0xab8] sm:$0xff]
  %v386 = vld [vmem:[%s1 + $0xac0] sm:$0xff]
  %v387 = vld [vmem:[%s1 + $0xac8] sm:$0xff]
  %v388 = vld [vmem:[%s1 + $0xad0] sm:$0xff]
  %v389 = vld [vmem:[%s1 + $0xad8] sm:$0xff]
  %v390 = vld [vmem:[%s1 + $0xae0] sm:$0xff]
  %v391 = vld [vmem:[%s1 + $0xae8] sm:$0xff]
  %v392 = vld [vmem:[%s1 + $0xaf0] sm:$0xff]
  %v393 = vld [vmem:[%s1 + $0xaf8] sm:$0xff]
  %v394 = vld [vmem:[%s1 + $0xb00] sm:$0xff]
  %v395 = vld [vmem:[%s1 + $0xb08] sm:$0xff]
  %v396 = vld [vmem:[%s1 + $0xb10] sm:$0xff]
  %v397 = vld [vmem:[%s1 + $0xb18] sm:$0xff]
  %v398 = vld [vmem:[%s1 + $0xb20] sm:$0xff]
  %v399 = vld [vmem:[%s1 + $0xb28] sm:$0xff]
  %v400 = vld [vmem:[%s1 + $0xb30] sm:$0xff]
  %v401 = vld [vmem:[%s1 + $0xb38] sm:$0xff]
  %v402 = vld [vmem:[%s1 + $0xb40] sm:$0xff]
  %v403 = vld [vmem:[%s1 + $0xb48] sm:$0xff]
  %v404 = vld [vmem:[%s1 + $0xb50] sm:$0xff]
  %v405 = vld [vmem:[%s1 + $0xb58] sm:$0xff]
  %v406 = vld [vmem:[%s1 + $0xb60] sm:$0xff]
  %v407 = vld [vmem:[%s1 + $0xb68] sm:$0xff]
  %v408 = vld [vmem:[%s1 + $0xb70] sm:$0xff]
  %v409 = vld [vmem:[%s1 + $0xb78] sm:$0xff]
  %v410 = vld [vmem:[%s1 + $0xb80] sm:$0xff]
  %v411 = vld [vmem:[%s1 + $0xb88] sm:$0xff]
  %v412 = vld [vmem:[%s1 + $0xb90] sm:$0xff]
  %v413 = vld [vmem:[%s1 + $0xb98] sm:$0xff]
  %v414 = vld [vmem:[%s1 + $0xba0] sm:$0xff]
  %v415 = vld [vmem:[%s1 + $0xba8] sm:$0xff]
  %v416 = vld [vmem:[%s1 + $0xbb0] sm:$0xff]
  %v417 = vld [vmem:[%s1 + $0xbb8] sm:$0xff]
  %v418 = vld [vmem:[%s1 + $0xbc0] sm:$0xff]
  %v419 = vld [vmem:[%s1 + $0xbc8] sm:$0xff]
  %v420 = vld [vmem:[%s1 + $0xbd0] sm:$0xff]
  %v421 = vld [vmem:[%s1 + $0xbd8] sm:$0xff]
  %v422 = vld [vmem:[%s1 + $0xbe0] sm:$0xff]
  %v423 = vld [vmem:[%s1 + $0xbe8] sm:$0xff]
  %v424 = vld [vmem:[%s1 + $0xbf0] sm:$0xff]
  %v425 = vld [vmem:[%s1 + $0xbf8] sm:$0xff]
  %v426 = vld [vmem:[%s1 + $0xc00] sm:$0xff]
  %v427 = vld [vmem:[%s1 + $0xc08] sm:$0xff]
  %v428 = vld [vmem:[%s1 + $0xc10] sm:$0xff]
  %v429 = vld [vmem:[%s1 + $0xc18] sm:$0xff]
  %v430 = vld [vmem:[%s1 + $0xc20] sm:$0xff]
  %v431 = vld [vmem:[%s1 + $0xc28] sm:$0xff]
  %v432 = vld [vmem:[%s1 + $0xc30] sm:$0xff]
  %v433 = vld [vmem:[%s1 + $0xc38] sm:$0xff]
  %v434 = vld [vmem:[%s9] ss:$8 sm:$0xf]
  %v436 = vlaneseq
  %v437 = vshrl.u32 %v436, 7
  %v438 = vsub.s32 0, %v437
  %v439 = vrot.slane %v434, %v438
  %v440 = vlaneseq
  %v441 = vshrl.u32 %v440, 7
  %v442 = vsub.s32 1, %v441
  %v443 = vrot.slane %v434, %v442
  %v444 = vlaneseq
  %v445 = vshrl.u32 %v444, 7
  %v446 = vsub.s32 2, %v445
  %v447 = vrot.slane %v434, %v446
  %v448 = vlaneseq
  %v449 = vshrl.u32 %v448, 7
  %v450 = vsub.s32 3, %v449
  %v451 = vrot.slane %v434, %v450
  %vm456 = vcmask 130048
  %v458 = vsel %vm456, %v41, 0
  %460 = vmatprep.subr.mxu0 %v43
  %461 = vmatpush1.msra.mxu0 %v42
  %462 = vmatprep.subr.mxu0 %v47
  %463 = vmatpush1.msra.mxu0 %v46
  %464 = vmatprep.subr.mxu0 %v51
  %465 = vmatpush1.msra.mxu0 %v50
  %466 = vmatprep.subr.mxu0 %v55
  %467 = vmatpush1.msra.mxu0 %v54
  %468 = vmatprep.subr.mxu0 %v59
  %469 = vmatpush1.msra.mxu0 %v58
  %470 = vmatprep.subr.mxu0 %v63
  %471 = vmatpush1.msra.mxu0 %v62
  %472 = vmatprep.subr.mxu0 %v67
  %473 = vmatpush1.msra.mxu0 %v66
  %474 = vmatprep.subr.mxu0 %v71
  %475 = vmatpush1.msra.mxu0 %v70
  %476 = vmatprep.subr.mxu0 %v75
  %477 = vmatpush1.msra.mxu0 %v74
  %478 = vmatprep.subr.mxu0 %v79
  %479 = vmatpush1.msra.mxu0 %v78
  %480 = vmatprep.subr.mxu0 %v83
  %481 = vmatpush1.msra.mxu0 %v82
  %482 = vmatprep.subr.mxu0 %v87
  %483 = vmatpush1.msra.mxu0 %v86
  %484 = vmatprep.subr.mxu0 %v91
  %485 = vmatpush1.msra.mxu0 %v90
  %486 = vmatprep.subr.mxu0 %v95
  %487 = vmatpush1.msra.mxu0 %v94
  %488 = vmatprep.subr.mxu0 %v99
  %489 = vmatpush1.msra.mxu0 %v98
  %490 = vmatprep.subr.mxu0 %v103
  %491 = vmatpush1.msra.mxu0 %v102
  %492 = vmatprep.subr.mxu0 %v107
  %493 = vmatpush1.msra.mxu0 %v106
  %494 = vmatprep.subr.mxu0 %v111
  %495 = vmatpush1.msra.mxu0 %v110
  %496 = vmatprep.subr.mxu0 %v115
  %497 = vmatpush1.msra.mxu0 %v114
  %498 = vmatprep.subr.mxu0 %v119
  %499 = vmatpush1.msra.mxu0 %v118
  %500 = vmatprep.subr.mxu0 %v123
  %501 = vmatpush1.msra.mxu0 %v122
  %502 = vmatprep.subr.mxu0 %v127
  %503 = vmatpush1.msra.mxu0 %v126
  %504 = vmatprep.subr.mxu0 %v131
  %505 = vmatpush1.msra.mxu0 %v130
  %506 = vmatprep.subr.mxu0 %v135
  %507 = vmatpush1.msra.mxu0 %v134
  %508 = vmatprep.subr.mxu0 %v139
  %509 = vmatpush1.msra.mxu0 %v138
  %510 = vmatprep.subr.mxu0 %v143
  %511 = vmatpush1.msra.mxu0 %v142
  %512 = vmatprep.subr.mxu0 %v147
  %513 = vmatpush1.msra.mxu0 %v146
  %514 = vmatprep.subr.mxu0 %v151
  %515 = vmatpush1.msra.mxu0 %v150
  %516 = vmatprep.subr.mxu0 %v155
  %517 = vmatpush1.msra.mxu0 %v154
  %518 = vmatprep.subr.mxu0 %v159
  %519 = vmatpush1.msra.mxu0 %v158
  %520 = vmatprep.subr.mxu0 %v163
  %521 = vmatpush1.msra.mxu0 %v162
  %522 = vmatprep.subr.mxu0 %v167
  %523 = vmatpush1.msra.mxu0 %v166
  %524 = vmatprep.mubr.f32.mxu0 %v36
  %525 = vmatmul.mubr.f32.gmra.mrb[0].mxu0 %v35
  %v526 = vpop.f32.mrb[0].mxu0
  %v527 = vadd.f32 %v439, %v526
  %v528 = vpop.f32.mrb[0].mxu0
  %v529 = vadd.f32 %v443, %v528
  %530 = vdwg.mxu0
  %531 = vmatprep.subr.mxu0 %v171
  %532 = vmatpush1.msra.mxu0 %v170
  %533 = vmatprep.subr.mxu0 %v175
  %534 = vmatpush1.msra.mxu0 %v174
  %535 = vmatprep.subr.mxu0 %v179
  %536 = vmatpush1.msra.mxu0 %v178
  %537 = vmatprep.subr.mxu0 %v183
  %538 = vmatpush1.msra.mxu0 %v182
  %539 = vmatprep.subr.mxu0 %v187
  %540 = vmatpush1.msra.mxu0 %v186
  %541 = vmatprep.subr.mxu0 %v191
  %542 = vmatpush1.msra.mxu0 %v190
  %543 = vmatprep.subr.mxu0 %v195
  %544 = vmatpush1.msra.mxu0 %v194
  %545 = vmatprep.subr.mxu0 %v199
  %546 = vmatpush1.msra.mxu0 %v198
  %547 = vmatprep.subr.mxu0 %v203
  %548 = vmatpush1.msra.mxu0 %v202
  %549 = vmatprep.subr.mxu0 %v207
  %550 = vmatpush1.msra.mxu0 %v206
  %551 = vmatprep.subr.mxu0 %v211
  %552 = vmatpush1.msra.mxu0 %v210
  %553 = vmatprep.subr.mxu0 %v215
  %554 = vmatpush1.msra.mxu0 %v214
  %555 = vmatprep.subr.mxu0 %v219
  %556 = vmatpush1.msra.mxu0 %v218
  %557 = vmatprep.subr.mxu0 %v223
  %558 = vmatpush1.msra.mxu0 %v222
  %559 = vmatprep.subr.mxu0 %v227
  %560 = vmatpush1.msra.mxu0 %v226
  %561 = vmatprep.subr.mxu0 %v231
  %562 = vmatpush1.msra.mxu0 %v230
  %563 = vmatprep.subr.mxu0 %v235
  %564 = vmatpush1.msra.mxu0 %v234
  %565 = vmatprep.subr.mxu0 %v239
  %566 = vmatpush1.msra.mxu0 %v238
  %567 = vmatprep.subr.mxu0 %v243
  %568 = vmatpush1.msra.mxu0 %v242
  %569 = vmatprep.subr.mxu0 %v247
  %570 = vmatpush1.msra.mxu0 %v246
  %571 = vmatprep.subr.mxu0 %v251
  %572 = vmatpush1.msra.mxu0 %v250
  %573 = vmatprep.subr.mxu0 %v255
  %574 = vmatpush1.msra.mxu0 %v254
  %575 = vmatprep.subr.mxu0 %v259
  %576 = vmatpush1.msra.mxu0 %v258
  %577 = vmatprep.subr.mxu0 %v263
  %578 = vmatpush1.msra.mxu0 %v262
  %579 = vmatprep.subr.mxu0 %v267
  %580 = vmatpush1.msra.mxu0 %v266
  %581 = vmatprep.subr.mxu0 %v271
  %582 = vmatpush1.msra.mxu0 %v270
  %583 = vmatprep.subr.mxu0 %v275
  %584 = vmatpush1.msra.mxu0 %v274
  %585 = vmatprep.subr.mxu0 %v279
  %586 = vmatpush1.msra.mxu0 %v278
  %587 = vmatprep.subr.mxu0 %v283
  %588 = vmatpush1.msra.mxu0 %v282
  %589 = vmatprep.subr.mxu0 %v287
  %590 = vmatpush1.msra.mxu0 %v286
  %591 = vmatprep.subr.mxu0 %v291
  %592 = vmatpush1.msra.mxu0 %v290
  %593 = vmatprep.subr.mxu0 %v295
  %594 = vmatpush1.msra.mxu0 %v294
  %595 = vmatprep.mubr.f32.mxu0 %v38
  %596 = vmatmul.mubr.f32.gmra.mrb[0].mxu0 %v37
  %v597 = vpop.f32.mrb[0].mxu0
  %v598 = vadd.f32 %v527, %v597
  %v599 = vpop.f32.mrb[0].mxu0
  %v600 = vadd.f32 %v529, %v599
  %601 = vdwg.mxu0
  %602 = vmatprep.subr.mxu0 %v299
  %603 = vmatpush1.msra.mxu0 %v298
  %604 = vmatprep.subr.mxu0 %v303
  %605 = vmatpush1.msra.mxu0 %v302
  %606 = vmatprep.subr.mxu0 %v307
  %607 = vmatpush1.msra.mxu0 %v306
  %608 = vmatprep.subr.mxu0 %v311
  %609 = vmatpush1.msra.mxu0 %v310
  %610 = vmatprep.subr.mxu0 %v315
  %611 = vmatpush1.msra.mxu0 %v314
  %612 = vmatprep.subr.mxu0 %v319
  %613 = vmatpush1.msra.mxu0 %v318
  %614 = vmatprep.subr.mxu0 %v323
  %615 = vmatpush1.msra.mxu0 %v322
  %616 = vmatprep.subr.mxu0 %v327
  %617 = vmatpush1.msra.mxu0 %v326
  %618 = vmatprep.subr.mxu0 %v331
  %619 = vmatpush1.msra.mxu0 %v330
  %620 = vmatprep.subr.mxu0 %v335
  %621 = vmatpush1.msra.mxu0 %v334
  %622 = vmatprep.subr.mxu0 %v339
  %623 = vmatpush1.msra.mxu0 %v338
  %624 = vmatprep.subr.mxu0 %v343
  %625 = vmatpush1.msra.mxu0 %v342
  %626 = vmatprep.subr.mxu0 %v347
  %627 = vmatpush1.msra.mxu0 %v346
  %628 = vmatprep.subr.mxu0 %v351
  %629 = vmatpush1.msra.mxu0 %v350
  %630 = vmatprep.subr.mxu0 %v355
  %631 = vmatpush1.msra.mxu0 %v354
  %632 = vmatprep.subr.mxu0 %v359
  %633 = vmatpush1.msra.mxu0 %v358
  %634 = vmatprep.subr.mxu0 %v363
  %635 = vmatpush1.msra.mxu0 %v362
  %636 = vmatprep.subr.mxu0 %v367
  %637 = vmatpush1.msra.mxu0 %v366
  %638 = vmatprep.subr.mxu0 %v371
  %639 = vmatpush1.msra.mxu0 %v370
  %640 = vmatprep.subr.mxu0 %v375
  %641 = vmatpush1.msra.mxu0 %v374
  %642 = vmatprep.subr.mxu0 %v379
  %643 = vmatpush1.msra.mxu0 %v378
  %644 = vmatprep.subr.mxu0 %v383
  %645 = vmatpush1.msra.mxu0 %v382
  %646 = vmatprep.subr.mxu0 %v387
  %647 = vmatpush1.msra.mxu0 %v386
  %648 = vmatprep.subr.mxu0 %v391
  %649 = vmatpush1.msra.mxu0 %v390
  %650 = vmatprep.subr.mxu0 %v395
  %651 = vmatpush1.msra.mxu0 %v394
  %652 = vmatprep.subr.mxu0 %v399
  %653 = vmatpush1.msra.mxu0 %v398
  %654 = vmatprep.subr.mxu0 %v403
  %655 = vmatpush1.msra.mxu0 %v402
  %656 = vmatprep.subr.mxu0 %v407
  %657 = vmatpush1.msra.mxu0 %v406
  %658 = vmatprep.subr.mxu0 %v411
  %659 = vmatpush1.msra.mxu0 %v410
  %660 = vmatprep.subr.mxu0 %v415
  %661 = vmatpush1.msra.mxu0 %v414
  %662 = vmatprep.subr.mxu0 %v419
  %663 = vmatpush1.msra.mxu0 %v418
  %664 = vmatprep.subr.mxu0 %v423
  %665 = vmatpush1.msra.mxu0 %v422
  %666 = vmatprep.mubr.f32.mxu0 %v40
  %667 = vmatmul.mubr.f32.gmra.mrb[0].mxu0 %v39
  %v668 = vpop.f32.mrb[0].mxu0
  %v669 = vadd.f32 %v598, %v668
  %v670 = vpop.f32.mrb[0].mxu0
  %v671 = vadd.f32 %v600, %v670
  %672 = vdwg.mxu0
  %673 = vmatprep.subr.mxu0 %v427
  %674 = vmatpush1.msra.mxu0 %v426
  %675 = vmatprep.subr.mxu0 %v431
  %676 = vmatpush1.msra.mxu0 %v430
  %677 = vmatprep.subr.mxu0 0.0
  %678 = vmatpush1.msra.mxu0 0.0
  %679 = vmatprep.subr.mxu0 0.0
  %680 = vmatpush1.msra.mxu0 0.0
  %681 = vmatprep.subr.mxu0 0.0
  %682 = vmatpush1.msra.mxu0 0.0
  %683 = vmatprep.subr.mxu0 0.0
  %684 = vmatpush1.msra.mxu0 0.0
  %685 = vmatprep.subr.mxu0 0.0
  %686 = vmatpush1.msra.mxu0 0.0
  %687 = vmatprep.subr.mxu0 0.0
  %688 = vmatpush1.msra.mxu0 0.0
  %689 = vmatprep.subr.mxu0 0.0
  %690 = vmatpush1.msra.mxu0 0.0
  %691 = vmatprep.subr.mxu0 0.0
  %692 = vmatpush1.msra.mxu0 0.0
  %693 = vmatprep.subr.mxu0 0.0
  %694 = vmatpush1.msra.mxu0 0.0
  %695 = vmatprep.subr.mxu0 0.0
  %696 = vmatpush1.msra.mxu0 0.0
  %697 = vmatprep.subr.mxu0 0.0
  %698 = vmatpush1.msra.mxu0 0.0
  %699 = vmatprep.subr.mxu0 0.0
  %700 = vmatpush1.msra.mxu0 0.0
  %701 = vmatprep.subr.mxu0 0.0
  %702 = vmatpush1.msra.mxu0 0.0
  %703 = vmatprep.subr.mxu0 0.0
  %704 = vmatpush1.msra.mxu0 0.0
  %705 = vmatprep.subr.mxu0 0.0
  %706 = vmatpush1.msra.mxu0 0.0
  %707 = vmatprep.subr.mxu0 0.0
  %708 = vmatpush1.msra.mxu0 0.0
  %709 = vmatprep.subr.mxu0 0.0
  %710 = vmatpush1.msra.mxu0 0.0
  %711 = vmatprep.subr.mxu0 0.0
  %712 = vmatpush1.msra.mxu0 0.0
  %713 = vmatprep.subr.mxu0 0.0
  %714 = vmatpush1.msra.mxu0 0.0
  %715 = vmatprep.subr.mxu0 0.0
  %716 = vmatpush1.msra.mxu0 0.0
  %717 = vmatprep.subr.mxu0 0.0
  %718 = vmatpush1.msra.mxu0 0.0
  %719 = vmatprep.subr.mxu0 0.0
  %720 = vmatpush1.msra.mxu0 0.0
  %721 = vmatprep.subr.mxu0 0.0
  %722 = vmatpush1.msra.mxu0 0.0
  %723 = vmatprep.subr.mxu0 0.0
  %724 = vmatpush1.msra.mxu0 0.0
  %725 = vmatprep.subr.mxu0 0.0
  %726 = vmatpush1.msra.mxu0 0.0
  %727 = vmatprep.subr.mxu0 0.0
  %728 = vmatpush1.msra.mxu0 0.0
  %729 = vmatprep.subr.mxu0 0.0
  %730 = vmatpush1.msra.mxu0 0.0
  %731 = vmatprep.subr.mxu0 0.0
  %732 = vmatpush1.msra.mxu0 0.0
  %733 = vmatprep.subr.mxu0 0.0
  %734 = vmatpush1.msra.mxu0 0.0
  %735 = vmatprep.subr.mxu0 0.0
  %736 = vmatpush1.msra.mxu0 0.0
  %737 = vmatprep.mubr.f32.mxu0 0.0
  %738 = vmatmul.mubr.f32.gmra.mrb[0].mxu0 %v458
  %v739 = vpop.f32.mrb[0].mxu0
  %v740 = vadd.f32 %v669, %v739
  %v741 = vpop.f32.mrb[0].mxu0
  %v742 = vadd.f32 %v671, %v741
  %743 = vdwg.mxu0
  %744 = vmatprep.subr.mxu0 %v45
  %745 = vmatpush1.msra.mxu0 %v44
  %746 = vmatprep.subr.mxu0 %v49
  %747 = vmatpush1.msra.mxu0 %v48
  %748 = vmatprep.subr.mxu0 %v53
  %749 = vmatpush1.msra.mxu0 %v52
  %750 = vmatprep.subr.mxu0 %v57
  %751 = vmatpush1.msra.mxu0 %v56
  %752 = vmatprep.subr.mxu0 %v61
  %753 = vmatpush1.msra.mxu0 %v60
  %754 = vmatprep.subr.mxu0 %v65
  %755 = vmatpush1.msra.mxu0 %v64
  %756 = vmatprep.subr.mxu0 %v69
  %757 = vmatpush1.msra.mxu0 %v68
  %758 = vmatprep.subr.mxu0 %v73
  %759 = vmatpush1.msra.mxu0 %v72
  %760 = vmatprep.subr.mxu0 %v77
  %761 = vmatpush1.msra.mxu0 %v76
  %762 = vmatprep.subr.mxu0 %v81
  %763 = vmatpush1.msra.mxu0 %v80
  %764 = vmatprep.subr.mxu0 %v85
  %765 = vmatpush1.msra.mxu0 %v84
  %766 = vmatprep.subr.mxu0 %v89
  %767 = vmatpush1.msra.mxu0 %v88
  %768 = vmatprep.subr.mxu0 %v93
  %769 = vmatpush1.msra.mxu0 %v92
  %770 = vmatprep.subr.mxu0 %v97
  %771 = vmatpush1.msra.mxu0 %v96
  %772 = vmatprep.subr.mxu0 %v101
  %773 = vmatpush1.msra.mxu0 %v100
  %774 = vmatprep.subr.mxu0 %v105
  %775 = vmatpush1.msra.mxu0 %v104
  %776 = vmatprep.subr.mxu0 %v109
  %777 = vmatpush1.msra.mxu0 %v108
  %778 = vmatprep.subr.mxu0 %v113
  %779 = vmatpush1.msra.mxu0 %v112
  %780 = vmatprep.subr.mxu0 %v117
  %781 = vmatpush1.msra.mxu0 %v116
  %782 = vmatprep.subr.mxu0 %v121
  %783 = vmatpush1.msra.mxu0 %v120
  %784 = vmatprep.subr.mxu0 %v125
  %785 = vmatpush1.msra.mxu0 %v124
  %786 = vmatprep.subr.mxu0 %v129
  %787 = vmatpush1.msra.mxu0 %v128
  %788 = vmatprep.subr.mxu0 %v133
  %789 = vmatpush1.msra.mxu0 %v132
  %790 = vmatprep.subr.mxu0 %v137
  %791 = vmatpush1.msra.mxu0 %v136
  %792 = vmatprep.subr.mxu0 %v141
  %793 = vmatpush1.msra.mxu0 %v140
  %794 = vmatprep.subr.mxu0 %v145
  %795 = vmatpush1.msra.mxu0 %v144
  %796 = vmatprep.subr.mxu0 %v149
  %797 = vmatpush1.msra.mxu0 %v148
  %798 = vmatprep.subr.mxu0 %v153
  %799 = vmatpush1.msra.mxu0 %v152
  %800 = vmatprep.subr.mxu0 %v157
  %801 = vmatpush1.msra.mxu0 %v156
  %802 = vmatprep.subr.mxu0 %v161
  %803 = vmatpush1.msra.mxu0 %v160
  %804 = vmatprep.subr.mxu0 %v165
  %805 = vmatpush1.msra.mxu0 %v164
  %806 = vmatprep.subr.mxu0 %v169
  %807 = vmatpush1.msra.mxu0 %v168
  %808 = vmatprep.mubr.f32.mxu0 %v36
  %809 = vmatmul.mubr.f32.gmra.mrb[0].mxu0 %v35
  %v810 = vpop.f32.mrb[0].mxu0
  %v811 = vadd.f32 %v447, %v810
  %v812 = vpop.f32.mrb[0].mxu0
  %v813 = vadd.f32 %v451, %v812
  %814 = vdwg.mxu0
  %815 = vmatprep.subr.mxu0 %v173
  %816 = vmatpush1.msra.mxu0 %v172
  %817 = vmatprep.subr.mxu0 %v177
  %818 = vmatpush1.msra.mxu0 %v176
  %819 = vmatprep.subr.mxu0 %v181
  %820 = vmatpush1.msra.mxu0 %v180
  %821 = vmatprep.subr.mxu0 %v185
  %822 = vmatpush1.msra.mxu0 %v184
  %823 = vmatprep.subr.mxu0 %v189
  %824 = vmatpush1.msra.mxu0 %v188
  %825 = vmatprep.subr.mxu0 %v193
  %826 = vmatpush1.msra.mxu0 %v192
  %827 = vmatprep.subr.mxu0 %v197
  %828 = vmatpush1.msra.mxu0 %v196
  %829 = vmatprep.subr.mxu0 %v201
  %830 = vmatpush1.msra.mxu0 %v200
  %831 = vmatprep.subr.mxu0 %v205
  %832 = vmatpush1.msra.mxu0 %v204
  %833 = vmatprep.subr.mxu0 %v209
  %834 = vmatpush1.msra.mxu0 %v208
  %835 = vmatprep.subr.mxu0 %v213
  %836 = vmatpush1.msra.mxu0 %v212
  %837 = vmatprep.subr.mxu0 %v217
  %838 = vmatpush1.msra.mxu0 %v216
  %839 = vmatprep.subr.mxu0 %v221
  %840 = vmatpush1.msra.mxu0 %v220
  %841 = vmatprep.subr.mxu0 %v225
  %842 = vmatpush1.msra.mxu0 %v224
  %843 = vmatprep.subr.mxu0 %v229
  %844 = vmatpush1.msra.mxu0 %v228
  %845 = vmatprep.subr.mxu0 %v233
  %846 = vmatpush1.msra.mxu0 %v232
  %847 = vmatprep.subr.mxu0 %v237
  %848 = vmatpush1.msra.mxu0 %v236
  %849 = vmatprep.subr.mxu0 %v241
  %850 = vmatpush1.msra.mxu0 %v240
  %851 = vmatprep.subr.mxu0 %v245
  %852 = vmatpush1.msra.mxu0 %v244
  %853 = vmatprep.subr.mxu0 %v249
  %854 = vmatpush1.msra.mxu0 %v248
  %855 = vmatprep.subr.mxu0 %v253
  %856 = vmatpush1.msra.mxu0 %v252
  %857 = vmatprep.subr.mxu0 %v257
  %858 = vmatpush1.msra.mxu0 %v256
  %859 = vmatprep.subr.mxu0 %v261
  %860 = vmatpush1.msra.mxu0 %v260
  %861 = vmatprep.subr.mxu0 %v265
  %862 = vmatpush1.msra.mxu0 %v264
  %863 = vmatprep.subr.mxu0 %v269
  %864 = vmatpush1.msra.mxu0 %v268
  %865 = vmatprep.subr.mxu0 %v273
  %866 = vmatpush1.msra.mxu0 %v272
  %867 = vmatprep.subr.mxu0 %v277
  %868 = vmatpush1.msra.mxu0 %v276
  %869 = vmatprep.subr.mxu0 %v281
  %870 = vmatpush1.msra.mxu0 %v280
  %871 = vmatprep.subr.mxu0 %v285
  %872 = vmatpush1.msra.mxu0 %v284
  %873 = vmatprep.subr.mxu0 %v289
  %874 = vmatpush1.msra.mxu0 %v288
  %875 = vmatprep.subr.mxu0 %v293
  %876 = vmatpush1.msra.mxu0 %v292
  %877 = vmatprep.subr.mxu0 %v297
  %878 = vmatpush1.msra.mxu0 %v296
  %879 = vmatprep.mubr.f32.mxu0 %v38
  %880 = vmatmul.mubr.f32.gmra.mrb[0].mxu0 %v37
  %v881 = vpop.f32.mrb[0].mxu0
  %v882 = vadd.f32 %v811, %v881
  %v883 = vpop.f32.mrb[0].mxu0
  %v884 = vadd.f32 %v813, %v883
  %885 = vdwg.mxu0
  %886 = vmatprep.subr.mxu0 %v301
  %887 = vmatpush1.msra.mxu0 %v300
  %888 = vmatprep.subr.mxu0 %v305
  %889 = vmatpush1.msra.mxu0 %v304
  %890 = vmatprep.subr.mxu0 %v309
  %891 = vmatpush1.msra.mxu0 %v308
  %892 = vmatprep.subr.mxu0 %v313
  %893 = vmatpush1.msra.mxu0 %v312
  %894 = vmatprep.subr.mxu0 %v317
  %895 = vmatpush1.msra.mxu0 %v316
  %896 = vmatprep.subr.mxu0 %v321
  %897 = vmatpush1.msra.mxu0 %v320
  %898 = vmatprep.subr.mxu0 %v325
  %899 = vmatpush1.msra.mxu0 %v324
  %900 = vmatprep.subr.mxu0 %v329
  %901 = vmatpush1.msra.mxu0 %v328
  %902 = vmatprep.subr.mxu0 %v333
  %903 = vmatpush1.msra.mxu0 %v332
  %904 = vmatprep.subr.mxu0 %v337
  %905 = vmatpush1.msra.mxu0 %v336
  %906 = vmatprep.subr.mxu0 %v341
  %907 = vmatpush1.msra.mxu0 %v340
  %908 = vmatprep.subr.mxu0 %v345
  %909 = vmatpush1.msra.mxu0 %v344
  %910 = vmatprep.subr.mxu0 %v349
  %911 = vmatpush1.msra.mxu0 %v348
  %912 = vmatprep.subr.mxu0 %v353
  %913 = vmatpush1.msra.mxu0 %v352
  %914 = vmatprep.subr.mxu0 %v357
  %915 = vmatpush1.msra.mxu0 %v356
  %916 = vmatprep.subr.mxu0 %v361
  %917 = vmatpush1.msra.mxu0 %v360
  %918 = vmatprep.subr.mxu0 %v365
  %919 = vmatpush1.msra.mxu0 %v364
  %920 = vmatprep.subr.mxu0 %v369
  %921 = vmatpush1.msra.mxu0 %v368
  %922 = vmatprep.subr.mxu0 %v373
  %923 = vmatpush1.msra.mxu0 %v372
  %924 = vmatprep.subr.mxu0 %v377
  %925 = vmatpush1.msra.mxu0 %v376
  %926 = vmatprep.subr.mxu0 %v381
  %927 = vmatpush1.msra.mxu0 %v380
  %928 = vmatprep.subr.mxu0 %v385
  %929 = vmatpush1.msra.mxu0 %v384
  %930 = vmatprep.subr.mxu0 %v389
  %931 = vmatpush1.msra.mxu0 %v388
  %932 = vmatprep.subr.mxu0 %v393
  %933 = vmatpush1.msra.mxu0 %v392
  %934 = vmatprep.subr.mxu0 %v397
  %935 = vmatpush1.msra.mxu0 %v396
  %936 = vmatprep.subr.mxu0 %v401
  %937 = vmatpush1.msra.mxu0 %v400
  %938 = vmatprep.subr.mxu0 %v405
  %939 = vmatpush1.msra.mxu0 %v404
  %940 = vmatprep.subr.mxu0 %v409
  %941 = vmatpush1.msra.mxu0 %v408
  %942 = vmatprep.subr.mxu0 %v413
  %943 = vmatpush1.msra.mxu0 %v412
  %944 = vmatprep.subr.mxu0 %v417
  %945 = vmatpush1.msra.mxu0 %v416
  %946 = vmatprep.subr.mxu0 %v421
  %947 = vmatpush1.msra.mxu0 %v420
  %948 = vmatprep.subr.mxu0 %v425
  %949 = vmatpush1.msra.mxu0 %v424
  %950 = vmatprep.mubr.f32.mxu0 %v40
  %951 = vmatmul.mubr.f32.gmra.mrb[0].mxu0 %v39
  %v952 = vpop.f32.mrb[0].mxu0
  %v953 = vadd.f32 %v882, %v952
  %v954 = vpop.f32.mrb[0].mxu0
  %v955 = vadd.f32 %v884, %v954
  %956 = vdwg.mxu0
  %957 = vmatprep.subr.mxu0 %v429
  %958 = vmatpush1.msra.mxu0 %v428
  %959 = vmatprep.subr.mxu0 %v433
  %960 = vmatpush1.msra.mxu0 %v432
  %961 = vmatprep.subr.mxu0 0.0
  %962 = vmatpush1.msra.mxu0 0.0
  %963 = vmatprep.subr.mxu0 0.0
  %964 = vmatpush1.msra.mxu0 0.0
  %965 = vmatprep.subr.mxu0 0.0
  %966 = vmatpush1.msra.mxu0 0.0
  %967 = vmatprep.subr.mxu0 0.0
  %968 = vmatpush1.msra.mxu0 0.0
  %969 = vmatprep.subr.mxu0 0.0
  %970 = vmatpush1.msra.mxu0 0.0
  %971 = vmatprep.subr.mxu0 0.0
  %972 = vmatpush1.msra.mxu0 0.0
  %973 = vmatprep.subr.mxu0 0.0
  %974 = vmatpush1.msra.mxu0 0.0
  %975 = vmatprep.subr.mxu0 0.0
  %976 = vmatpush1.msra.mxu0 0.0
  %977 = vmatprep.subr.mxu0 0.0
  %978 = vmatpush1.msra.mxu0 0.0
  %979 = vmatprep.subr.mxu0 0.0
  %980 = vmatpush1.msra.mxu0 0.0
  %981 = vmatprep.subr.mxu0 0.0
  %982 = vmatpush1.msra.mxu0 0.0
  %983 = vmatprep.subr.mxu0 0.0
  %984 = vmatpush1.msra.mxu0 0.0
  %985 = vmatprep.subr.mxu0 0.0
  %986 = vmatpush1.msra.mxu0 0.0
  %987 = vmatprep.subr.mxu0 0.0
  %988 = vmatpush1.msra.mxu0 0.0
  %989 = vmatprep.subr.mxu0 0.0
  %990 = vmatpush1.msra.mxu0 0.0
  %991 = vmatprep.subr.mxu0 0.0
  %992 = vmatpush1.msra.mxu0 0.0
  %993 = vmatprep.subr.mxu0 0.0
  %994 = vmatpush1.msra.mxu0 0.0
  %995 = vmatprep.subr.mxu0 0.0
  %996 = vmatpush1.msra.mxu0 0.0
  %997 = vmatprep.subr.mxu0 0.0
  %998 = vmatpush1.msra.mxu0 0.0
  %999 = vmatprep.subr.mxu0 0.0
  %1000 = vmatpush1.msra.mxu0 0.0
  %1001 = vmatprep.subr.mxu0 0.0
  %1002 = vmatpush1.msra.mxu0 0.0
  %1003 = vmatprep.subr.mxu0 0.0
  %1004 = vmatpush1.msra.mxu0 0.0
  %1005 = vmatprep.subr.mxu0 0.0
  %1006 = vmatpush1.msra.mxu0 0.0
  %1007 = vmatprep.subr.mxu0 0.0
  %1008 = vmatpush1.msra.mxu0 0.0
  %1009 = vmatprep.subr.mxu0 0.0
  %1010 = vmatpush1.msra.mxu0 0.0
  %1011 = vmatprep.subr.mxu0 0.0
  %1012 = vmatpush1.msra.mxu0 0.0
  %1013 = vmatprep.subr.mxu0 0.0
  %1014 = vmatpush1.msra.mxu0 0.0
  %1015 = vmatprep.subr.mxu0 0.0
  %1016 = vmatpush1.msra.mxu0 0.0
  %1017 = vmatprep.subr.mxu0 0.0
  %1018 = vmatpush1.msra.mxu0 0.0
  %1019 = vmatprep.subr.mxu0 0.0
  %1020 = vmatpush1.msra.mxu0 0.0
  %1021 = vmatprep.mubr.f32.mxu0 0.0
  %1022 = vmatmul.mubr.f32.gmra.mrb[0].mxu0 %v458
  %v1023 = vpop.f32.mrb[0].mxu0
  %v1024 = vadd.f32 %v953, %v1023
  %v1025 = vpop.f32.mrb[0].mxu0
  %v1026 = vadd.f32 %v955, %v1025
  %1027 = vdwg.mxu0
  %v1028 = vld [vmem:[%s8] sm:$0xff]
  %v1029 = vld [vmem:[%s8 + $0x8] sm:$0xff]
  %v1030 = vld [vmem:[%s8 + $0x10] sm:$0xff]
  %v1031 = vld [vmem:[%s8 + $0x18] sm:$0xff]
  %v1032 = vld [vmem:[%s8 + $0x20] sm:$0xff]
  %v1033 = vld [vmem:[%s8 + $0x28] sm:$0xff]
  %v1034 = vld [vmem:[%s8 + $0x30] sm:$0xff]
  %v1035 = vld [vmem:[%s8 + $0x38] sm:$0xff]
  %v1036 = vld [vmem:[%s8 + $0x40] sm:$0xff]
  %v1037 = vld [vmem:[%s8 + $0x48] sm:$0xff]
  %v1038 = vld [vmem:[%s8 + $0x50] sm:$0xff]
  %v1039 = vld [vmem:[%s8 + $0x58] sm:$0xff]
  %v1040 = vld [vmem:[%s8 + $0x60] sm:$0xff]
  %v1041 = vld [vmem:[%s8 + $0x68] sm:$0xff]
  %v1042 = vld [vmem:[%s8 + $0x70] sm:$0xff]
  %v1043 = vld [vmem:[%s8 + $0x78] sm:$0xff]
  %v1044 = vld [vmem:[%s8 + $0x80] sm:$0xff]
  %v1045 = vld [vmem:[%s8 + $0x88] sm:$0xff]
  %v1046 = vld [vmem:[%s8 + $0x90] sm:$0xff]
  %v1047 = vld [vmem:[%s8 + $0x98] sm:$0xff]
  %v1048 = vld [vmem:[%s8 + $0xa0] sm:$0xff]
  %v1049 = vld [vmem:[%s8 + $0xa8] sm:$0xff]
  %v1050 = vld [vmem:[%s8 + $0xb0] sm:$0xff]
  %v1051 = vld [vmem:[%s8 + $0xb8] sm:$0xff]
  %v1052 = vld [vmem:[%s8 + $0xc0] sm:$0xf]
  %v1053 = vld [vmem:[%s8 + $0xc8] sm:$0xff]
  %v1054 = vld [vmem:[%s8 + $0xd0] sm:$0xff]
  %v1055 = vld [vmem:[%s8 + $0xd8] sm:$0xff]
  %v1056 = vld [vmem:[%s8 + $0xe0] sm:$0xff]
  %v1057 = vld [vmem:[%s8 + $0xe8] sm:$0xff]
  %v1058 = vld [vmem:[%s8 + $0xf0] sm:$0xff]
  %v1059 = vld [vmem:[%s8 + $0xf8] sm:$0xff]
  %v1060 = vld [vmem:[%s8 + $0x100] sm:$0xff]
  %v1061 = vld [vmem:[%s8 + $0x108] sm:$0xff]
  %v1062 = vld [vmem:[%s8 + $0x110] sm:$0xff]
  %v1063 = vld [vmem:[%s8 + $0x118] sm:$0xff]
  %v1064 = vld [vmem:[%s8 + $0x120] sm:$0xff]
  %v1065 = vld [vmem:[%s8 + $0x128] sm:$0x3]
  %v1066 = vld [vmem:[%s8 + $0x130] sm:$0xff]
  %v1067 = vld [vmem:[%s8 + $0x138] sm:$0xff]
  %v1068 = vld [vmem:[%s8 + $0x140] sm:$0xff]
  %v1069 = vld [vmem:[%s8 + $0x148] sm:$0xff]
  %v1070 = vld [vmem:[%s2] sm:$0xff]
  %v1071 = vld [vmem:[%s2 + $0x8] sm:$0xff]
  %v1072 = vld [vmem:[%s2 + $0x10] sm:$0xff]
  %v1073 = vld [vmem:[%s2 + $0x18] sm:$0xff]
  %v1074 = vld [vmem:[%s2 + $0x20] sm:$0xff]
  %v1075 = vld [vmem:[%s2 + $0x28] sm:$0xff]
  %v1076 = vld [vmem:[%s2 + $0x30] sm:$0xff]
  %v1077 = vld [vmem:[%s2 + $0x38] sm:$0xff]
  %v1078 = vld [vmem:[%s2 + $0x40] sm:$0xff]
  %v1079 = vld [vmem:[%s2 + $0x48] sm:$0xff]
  %v1080 = vld [vmem:[%s2 + $0x50] sm:$0xff]
  %v1081 = vld [vmem:[%s2 + $0x58] sm:$0xff]
  %v1082 = vld [vmem:[%s2 + $0x60] sm:$0xff]
  %v1083 = vld [vmem:[%s2 + $0x68] sm:$0xff]
  %v1084 = vld [vmem:[%s2 + $0x70] sm:$0xff]
  %v1085 = vld [vmem:[%s2 + $0x78] sm:$0xff]
  %v1086 = vld [vmem:[%s2 + $0x80] sm:$0xff]
  %v1087 = vld [vmem:[%s2 + $0x88] sm:$0xff]
  %v1088 = vld [vmem:[%s2 + $0x90] sm:$0xff]
  %v1089 = vld [vmem:[%s2 + $0x98] sm:$0xff]
  %v1090 = vld [vmem:[%s2 + $0xa0] sm:$0xff]
  %v1091 = vld [vmem:[%s2 + $0xa8] sm:$0xff]
  %v1092 = vld [vmem:[%s2 + $0xb0] sm:$0xff]
  %v1093 = vld [vmem:[%s2 + $0xb8] sm:$0xff]
  %v1094 = vld [vmem:[%s2 + $0xc0] sm:$0xff]
  %v1095 = vld [vmem:[%s2 + $0xc8] sm:$0xff]
  %v1096 = vld [vmem:[%s2 + $0xd0] sm:$0xff]
  %v1097 = vld [vmem:[%s2 + $0xd8] sm:$0xff]
  %v1098 = vld [vmem:[%s2 + $0xe0] sm:$0xff]
  %v1099 = vld [vmem:[%s2 + $0xe8] sm:$0xff]
  %v1100 = vld [vmem:[%s2 + $0xf0] sm:$0xff]
  %v1101 = vld [vmem:[%s2 + $0xf8] sm:$0xff]
  %v1102 = vld [vmem:[%s2 + $0x100] sm:$0xff]
  %v1103 = vld [vmem:[%s2 + $0x108] sm:$0xff]
  %v1104 = vld [vmem:[%s2 + $0x110] sm:$0xff]
  %v1105 = vld [vmem:[%s2 + $0x118] sm:$0xff]
  %v1106 = vld [vmem:[%s2 + $0x120] sm:$0xff]
  %v1107 = vld [vmem:[%s2 + $0x128] sm:$0xff]
  %v1108 = vld [vmem:[%s2 + $0x130] sm:$0xff]
  %v1109 = vld [vmem:[%s2 + $0x138] sm:$0xff]
  %v1110 = vld [vmem:[%s2 + $0x140] sm:$0xff]
  %v1111 = vld [vmem:[%s2 + $0x148] sm:$0xff]
  %v1112 = vld [vmem:[%s2 + $0x150] sm:$0xff]
  %v1113 = vld [vmem:[%s2 + $0x158] sm:$0xff]
  %v1114 = vld [vmem:[%s2 + $0x160] sm:$0xff]
  %v1115 = vld [vmem:[%s2 + $0x168] sm:$0xff]
  %v1116 = vld [vmem:[%s2 + $0x170] sm:$0xff]
  %v1117 = vld [vmem:[%s2 + $0x178] sm:$0xff]
  %v1118 = vld [vmem:[%s2 + $0x180] sm:$0xff]
  %v1119 = vld [vmem:[%s2 + $0x188] sm:$0xff]
  %v1120 = vld [vmem:[%s2 + $0x190] sm:$0xff]
  %v1121 = vld [vmem:[%s2 + $0x198] sm:$0xff]
  %v1122 = vld [vmem:[%s2 + $0x1a0] sm:$0xff]
  %v1123 = vld [vmem:[%s2 + $0x1a8] sm:$0xff]
  %v1124 = vld [vmem:[%s2 + $0x1b0] sm:$0xff]
  %v1125 = vld [vmem:[%s2 + $0x1b8] sm:$0xff]
  %v1126 = vld [vmem:[%s2 + $0x1c0] sm:$0xff]
  %v1127 = vld [vmem:[%s2 + $0x1c8] sm:$0xff]
  %v1128 = vld [vmem:[%s2 + $0x1d0] sm:$0xff]
  %v1129 = vld [vmem:[%s2 + $0x1d8] sm:$0xff]
  %v1130 = vld [vmem:[%s2 + $0x1e0] sm:$0xff]
  %v1131 = vld [vmem:[%s2 + $0x1e8] sm:$0xff]
  %v1132 = vld [vmem:[%s2 + $0x1f0] sm:$0xff]
  %v1133 = vld [vmem:[%s2 + $0x1f8] sm:$0xff]
  %v1134 = vld [vmem:[%s2 + $0x200] sm:$0xff]
  %v1135 = vld [vmem:[%s2 + $0x208] sm:$0xff]
  %v1136 = vld [vmem:[%s2 + $0x210] sm:$0xff]
  %v1137 = vld [vmem:[%s2 + $0x218] sm:$0xff]
  %v1138 = vld [vmem:[%s2 + $0x220] sm:$0xff]
  %v1139 = vld [vmem:[%s2 + $0x228] sm:$0xff]
  %v1140 = vld [vmem:[%s2 + $0x230] sm:$0xff]
  %v1141 = vld [vmem:[%s2 + $0x238] sm:$0xff]
  %v1142 = vld [vmem:[%s2 + $0x240] sm:$0xff]
  %v1143 = vld [vmem:[%s2 + $0x248] sm:$0xff]
  %v1144 = vld [vmem:[%s2 + $0x250] sm:$0xff]
  %v1145 = vld [vmem:[%s2 + $0x258] sm:$0xff]
  %v1146 = vld [vmem:[%s2 + $0x260] sm:$0xff]
  %v1147 = vld [vmem:[%s2 + $0x268] sm:$0xff]
  %v1148 = vld [vmem:[%s2 + $0x270] sm:$0xff]
  %v1149 = vld [vmem:[%s2 + $0x278] sm:$0xff]
  %v1150 = vld [vmem:[%s2 + $0x280] sm:$0xff]
  %v1151 = vld [vmem:[%s2 + $0x288] sm:$0xff]
  %v1152 = vld [vmem:[%s2 + $0x290] sm:$0xff]
  %v1153 = vld [vmem:[%s2 + $0x298] sm:$0xff]
  %v1154 = vld [vmem:[%s2 + $0x2a0] sm:$0xff]
  %v1155 = vld [vmem:[%s2 + $0x2a8] sm:$0xff]
  %v1156 = vld [vmem:[%s2 + $0x2b0] sm:$0xff]
  %v1157 = vld [vmem:[%s2 + $0x2b8] sm:$0xff]
  %v1158 = vld [vmem:[%s2 + $0x2c0] sm:$0xff]
  %v1159 = vld [vmem:[%s2 + $0x2c8] sm:$0xff]
  %v1160 = vld [vmem:[%s2 + $0x2d0] sm:$0xff]
  %v1161 = vld [vmem:[%s2 + $0x2d8] sm:$0xff]
  %v1162 = vld [vmem:[%s2 + $0x2e0] sm:$0xff]
  %v1163 = vld [vmem:[%s2 + $0x2e8] sm:$0xff]
  %v1164 = vld [vmem:[%s2 + $0x2f0] sm:$0xff]
  %v1165 = vld [vmem:[%s2 + $0x2f8] sm:$0xff]
  %v1166 = vld [vmem:[%s2 + $0x300] sm:$0xff]
  %v1167 = vld [vmem:[%s2 + $0x308] sm:$0xff]
  %s1168 = scalar_lea.vmem %s9, 1
  %v1169 = vld [vmem:[%s1168] ss:$8 sm:$0x3]
  %v1171 = vlaneseq
  %v1172 = vshrl.u32 %v1171, 7
  %v1173 = vsub.s32 0, %v1172
  %v1174 = vrot.slane %v1169, %v1173
  %v1175 = vlaneseq
  %v1176 = vshrl.u32 %v1175, 7
  %v1177 = vsub.s32 1, %v1176
  %v1178 = vrot.slane %v1169, %v1177
  %vm1181 = vcmask 64512
  %v1183 = vsel %vm1181, %v1026, 0
  %1185 = vmatprep.subr.mxu0 %v1071
  %1186 = vmatpush1.msra.mxu0 %v1070
  %1187 = vmatprep.subr.mxu0 %v1073
  %1188 = vmatpush1.msra.mxu0 %v1072
  %1189 = vmatprep.subr.mxu0 %v1075
  %1190 = vmatpush1.msra.mxu0 %v1074
  %1191 = vmatprep.subr.mxu0 %v1077
  %1192 = vmatpush1.msra.mxu0 %v1076
  %1193 = vmatprep.subr.mxu0 %v1079
  %1194 = vmatpush1.msra.mxu0 %v1078
  %1195 = vmatprep.subr.mxu0 %v1081
  %1196 = vmatpush1.msra.mxu0 %v1080
  %1197 = vmatprep.subr.mxu0 %v1083
  %1198 = vmatpush1.msra.mxu0 %v1082
  %1199 = vmatprep.subr.mxu0 %v1085
  %1200 = vmatpush1.msra.mxu0 %v1084
  %1201 = vmatprep.subr.mxu0 %v1087
  %1202 = vmatpush1.msra.mxu0 %v1086
  %1203 = vmatprep.subr.mxu0 %v1089
  %1204 = vmatpush1.msra.mxu0 %v1088
  %1205 = vmatprep.subr.mxu0 %v1091
  %1206 = vmatpush1.msra.mxu0 %v1090
  %1207 = vmatprep.subr.mxu0 %v1093
  %1208 = vmatpush1.msra.mxu0 %v1092
  %1209 = vmatprep.subr.mxu0 %v1095
  %1210 = vmatpush1.msra.mxu0 %v1094
  %1211 = vmatprep.subr.mxu0 %v1097
  %1212 = vmatpush1.msra.mxu0 %v1096
  %1213 = vmatprep.subr.mxu0 %v1099
  %1214 = vmatpush1.msra.mxu0 %v1098
  %1215 = vmatprep.subr.mxu0 %v1101
  %1216 = vmatpush1.msra.mxu0 %v1100
  %1217 = vmatprep.subr.mxu0 %v1103
  %1218 = vmatpush1.msra.mxu0 %v1102
  %1219 = vmatprep.subr.mxu0 %v1105
  %1220 = vmatpush1.msra.mxu0 %v1104
  %1221 = vmatprep.subr.mxu0 %v1107
  %1222 = vmatpush1.msra.mxu0 %v1106
  %1223 = vmatprep.subr.mxu0 %v1109
  %1224 = vmatpush1.msra.mxu0 %v1108
  %1225 = vmatprep.subr.mxu0 %v1111
  %1226 = vmatpush1.msra.mxu0 %v1110
  %1227 = vmatprep.subr.mxu0 %v1113
  %1228 = vmatpush1.msra.mxu0 %v1112
  %1229 = vmatprep.subr.mxu0 %v1115
  %1230 = vmatpush1.msra.mxu0 %v1114
  %1231 = vmatprep.subr.mxu0 %v1117
  %1232 = vmatpush1.msra.mxu0 %v1116
  %1233 = vmatprep.subr.mxu0 %v1119
  %1234 = vmatpush1.msra.mxu0 %v1118
  %1235 = vmatprep.subr.mxu0 %v1121
  %1236 = vmatpush1.msra.mxu0 %v1120
  %1237 = vmatprep.subr.mxu0 %v1123
  %1238 = vmatpush1.msra.mxu0 %v1122
  %1239 = vmatprep.subr.mxu0 %v1125
  %1240 = vmatpush1.msra.mxu0 %v1124
  %1241 = vmatprep.subr.mxu0 %v1127
  %1242 = vmatpush1.msra.mxu0 %v1126
  %1243 = vmatprep.subr.mxu0 %v1129
  %1244 = vmatpush1.msra.mxu0 %v1128
  %1245 = vmatprep.subr.mxu0 %v1131
  %1246 = vmatpush1.msra.mxu0 %v1130
  %1247 = vmatprep.subr.mxu0 %v1133
  %1248 = vmatpush1.msra.mxu0 %v1132
  %1249 = vmatprep.mubr.f32.mxu0 %v742
  %1250 = vmatmul.mubr.f32.gmra.mrb[0].mxu0 %v740
  %v1251 = vpop.f32.mrb[0].mxu0
  %v1252 = vadd.f32 %v1174, %v1251
  %v1253 = vpop.f32.mrb[0].mxu0
  %v1254 = vadd.f32 %v1178, %v1253
  %1255 = vdwg.mxu0
  %1256 = vmatprep.subr.mxu0 %v1135
  %1257 = vmatpush1.msra.mxu0 %v1134
  %1258 = vmatprep.subr.mxu0 %v1137
  %1259 = vmatpush1.msra.mxu0 %v1136
  %1260 = vmatprep.subr.mxu0 %v1139
  %1261 = vmatpush1.msra.mxu0 %v1138
  %1262 = vmatprep.subr.mxu0 %v1141
  %1263 = vmatpush1.msra.mxu0 %v1140
  %1264 = vmatprep.subr.mxu0 %v1143
  %1265 = vmatpush1.msra.mxu0 %v1142
  %1266 = vmatprep.subr.mxu0 %v1145
  %1267 = vmatpush1.msra.mxu0 %v1144
  %1268 = vmatprep.subr.mxu0 %v1147
  %1269 = vmatpush1.msra.mxu0 %v1146
  %1270 = vmatprep.subr.mxu0 %v1149
  %1271 = vmatpush1.msra.mxu0 %v1148
  %1272 = vmatprep.subr.mxu0 %v1151
  %1273 = vmatpush1.msra.mxu0 %v1150
  %1274 = vmatprep.subr.mxu0 %v1153
  %1275 = vmatpush1.msra.mxu0 %v1152
  %1276 = vmatprep.subr.mxu0 %v1155
  %1277 = vmatpush1.msra.mxu0 %v1154
  %1278 = vmatprep.subr.mxu0 %v1157
  %1279 = vmatpush1.msra.mxu0 %v1156
  %1280 = vmatprep.subr.mxu0 %v1159
  %1281 = vmatpush1.msra.mxu0 %v1158
  %1282 = vmatprep.subr.mxu0 %v1161
  %1283 = vmatpush1.msra.mxu0 %v1160
  %1284 = vmatprep.subr.mxu0 %v1163
  %1285 = vmatpush1.msra.mxu0 %v1162
  %1286 = vmatprep.subr.mxu0 %v1165
  %1287 = vmatpush1.msra.mxu0 %v1164
  %1288 = vmatprep.subr.mxu0 %v1167
  %1289 = vmatpush1.msra.mxu0 %v1166
  %1290 = vmatprep.subr.mxu0 0.0
  %1291 = vmatpush1.msra.mxu0 0.0
  %1292 = vmatprep.subr.mxu0 0.0
  %1293 = vmatpush1.msra.mxu0 0.0
  %1294 = vmatprep.subr.mxu0 0.0
  %1295 = vmatpush1.msra.mxu0 0.0
  %1296 = vmatprep.subr.mxu0 0.0
  %1297 = vmatpush1.msra.mxu0 0.0
  %1298 = vmatprep.subr.mxu0 0.0
  %1299 = vmatpush1.msra.mxu0 0.0
  %1300 = vmatprep.subr.mxu0 0.0
  %1301 = vmatpush1.msra.mxu0 0.0
  %1302 = vmatprep.subr.mxu0 0.0
  %1303 = vmatpush1.msra.mxu0 0.0
  %1304 = vmatprep.subr.mxu0 0.0
  %1305 = vmatpush1.msra.mxu0 0.0
  %1306 = vmatprep.subr.mxu0 0.0
  %1307 = vmatpush1.msra.mxu0 0.0
  %1308 = vmatprep.subr.mxu0 0.0
  %1309 = vmatpush1.msra.mxu0 0.0
  %1310 = vmatprep.subr.mxu0 0.0
  %1311 = vmatpush1.msra.mxu0 0.0
  %1312 = vmatprep.subr.mxu0 0.0
  %1313 = vmatpush1.msra.mxu0 0.0
  %1314 = vmatprep.subr.mxu0 0.0
  %1315 = vmatpush1.msra.mxu0 0.0
  %1316 = vmatprep.subr.mxu0 0.0
  %1317 = vmatpush1.msra.mxu0 0.0
  %1318 = vmatprep.subr.mxu0 0.0
  %1319 = vmatpush1.msra.mxu0 0.0
  %1320 = vmatprep.mubr.f32.mxu0 %v1183
  %1321 = vmatmul.mubr.f32.gmra.mrb[0].mxu0 %v1024
  %v1322 = vpop.f32.mrb[0].mxu0
  %v1323 = vadd.f32 %v1252, %v1322
  %v1324 = vpop.f32.mrb[0].mxu0
  %v1325 = vadd.f32 %v1254, %v1324
  %1326 = vdwg.mxu0
  %v1327 = vxor.u32 %v1323, 2147483648
  %v1328 = vxor.u32 %v1325, 2147483648
  %v1329 = vmul.f32 %v1327, 1.442695
  %v1330 = vpow.pop %v1329
  %v1331 = vmul.f32 %v1328, 1.442695
  %v1332 = vpow.pop %v1331
  %v1333 = vadd.f32 %v1330, 1.0
  %v1334 = vadd.f32 %v1332, 1.0
  %v1335 = vrcp.pop %v1333
  %v1336 = vmul.f32 1.0, %v1335
  %v1337 = vrcp.pop %v1334
  %v1338 = vmul.f32 1.0, %v1337
  %v1339 = vmul.f32 %v1323, %v1336
  %v1340 = vmul.f32 %v1325, %v1338
  %v1341 = vld [vmem:[%s9 + $0x21] ss:$0 sm:$0xff]
  %vm1342 = vcmask 556032
  %v1344 = vsel %vm1342, %v1340, 0
  %vm1346 = vcmask 1043456
  %v1348 = vsel %vm1346, %v1052, 0
  %1350 = vmatprep.subr.mxu0 0.0
  %1351 = vmatpush1.msra.mxu0 %v1028
  %1352 = vmatprep.subr.mxu0 0.0
  %1353 = vmatpush1.msra.mxu0 %v1029
  %1354 = vmatprep.subr.mxu0 0.0
  %1355 = vmatpush1.msra.mxu0 %v1030
  %1356 = vmatprep.subr.mxu0 0.0
  %1357 = vmatpush1.msra.mxu0 %v1031
  %1358 = vmatprep.subr.mxu0 0.0
  %1359 = vmatpush1.msra.mxu0 %v1032
  %1360 = vmatprep.subr.mxu0 0.0
  %1361 = vmatpush1.msra.mxu0 %v1033
  %1362 = vmatprep.subr.mxu0 0.0
  %1363 = vmatpush1.msra.mxu0 %v1034
  %1364 = vmatprep.subr.mxu0 0.0
  %1365 = vmatpush1.msra.mxu0 %v1035
  %1366 = vmatprep.subr.mxu0 0.0
  %1367 = vmatpush1.msra.mxu0 %v1036
  %1368 = vmatprep.subr.mxu0 0.0
  %1369 = vmatpush1.msra.mxu0 %v1037
  %1370 = vmatprep.subr.mxu0 0.0
  %1371 = vmatpush1.msra.mxu0 %v1038
  %1372 = vmatprep.subr.mxu0 0.0
  %1373 = vmatpush1.msra.mxu0 %v1039
  %1374 = vmatprep.subr.mxu0 0.0
  %1375 = vmatpush1.msra.mxu0 %v1040
  %1376 = vmatprep.subr.mxu0 0.0
  %1377 = vmatpush1.msra.mxu0 %v1041
  %1378 = vmatprep.subr.mxu0 0.0
  %1379 = vmatpush1.msra.mxu0 %v1042
  %1380 = vmatprep.subr.mxu0 0.0
  %1381 = vmatpush1.msra.mxu0 %v1043
  %1382 = vmatprep.subr.mxu0 0.0
  %1383 = vmatpush1.msra.mxu0 %v1044
  %1384 = vmatprep.subr.mxu0 0.0
  %1385 = vmatpush1.msra.mxu0 %v1045
  %1386 = vmatprep.subr.mxu0 0.0
  %1387 = vmatpush1.msra.mxu0 %v1046
  %1388 = vmatprep.subr.mxu0 0.0
  %1389 = vmatpush1.msra.mxu0 %v1047
  %1390 = vmatprep.subr.mxu0 0.0
  %1391 = vmatpush1.msra.mxu0 %v1048
  %1392 = vmatprep.subr.mxu0 0.0
  %1393 = vmatpush1.msra.mxu0 %v1049
  %1394 = vmatprep.subr.mxu0 0.0
  %1395 = vmatpush1.msra.mxu0 %v1050
  %1396 = vmatprep.subr.mxu0 0.0
  %1397 = vmatpush1.msra.mxu0 %v1051
  %1398 = vmatprep.subr.mxu0 0.0
  %1399 = vmatpush1.msra.mxu0 %v1348
  %1400 = vmatprep.subr.mxu0 0.0
  %1401 = vmatpush1.msra.mxu0 0.0
  %1402 = vmatprep.subr.mxu0 0.0
  %1403 = vmatpush1.msra.mxu0 0.0
  %1404 = vmatprep.subr.mxu0 0.0
  %1405 = vmatpush1.msra.mxu0 0.0
  %1406 = vmatprep.subr.mxu0 0.0
  %1407 = vmatpush1.msra.mxu0 0.0
  %1408 = vmatprep.subr.mxu0 0.0
  %1409 = vmatpush1.msra.mxu0 0.0
  %1410 = vmatprep.subr.mxu0 0.0
  %1411 = vmatpush1.msra.mxu0 0.0
  %1412 = vmatprep.subr.mxu0 0.0
  %1413 = vmatpush1.msra.mxu0 0.0
  %1414 = vmatprep.mubr.f32.mxu0 %v1344
  %1415 = vmatmul.mubr.f32.gmra.mrb[0].mxu0 %v1339
  %v1416 = vpop.f32.mrb[0].mxu0
  %v1417 = vadd.f32 %v1341, %v1416
  %v1418 = vpop.f32.mrb[0].mxu0
  %1419 = vdwg.mxu0
  %v1420 = vld [vmem:[%s3] sm:$0xff]
  %v1421 = vld [vmem:[%s3 + $0x8] sm:$0xff]
  %v1422 = vld [vmem:[%s3 + $0x10] sm:$0xff]
  %v1423 = vld [vmem:[%s3 + $0x18] sm:$0xff]
  %v1424 = vld [vmem:[%s3 + $0x20] sm:$0xff]
  %v1425 = vld [vmem:[%s3 + $0x28] sm:$0xff]
  %v1426 = vld [vmem:[%s3 + $0x30] sm:$0xff]
  %v1427 = vld [vmem:[%s3 + $0x38] sm:$0xff]
  %v1428 = vld [vmem:[%s3 + $0x40] sm:$0xff]
  %v1429 = vld [vmem:[%s3 + $0x48] sm:$0xff]
  %v1430 = vld [vmem:[%s3 + $0x50] sm:$0xff]
  %v1431 = vld [vmem:[%s3 + $0x58] sm:$0xff]
  %v1432 = vld [vmem:[%s3 + $0x60] sm:$0xff]
  %v1433 = vld [vmem:[%s3 + $0x68] sm:$0xff]
  %v1434 = vld [vmem:[%s3 + $0x70] sm:$0xff]
  %v1435 = vld [vmem:[%s3 + $0x78] sm:$0xff]
  %v1436 = vld [vmem:[%s3 + $0x80] sm:$0xff]
  %v1437 = vld [vmem:[%s3 + $0x88] sm:$0xff]
  %v1438 = vld [vmem:[%s3 + $0x90] sm:$0xff]
  %v1439 = vld [vmem:[%s3 + $0x98] sm:$0xff]
  %v1440 = vld [vmem:[%s3 + $0xa0] sm:$0xff]
  %v1441 = vld [vmem:[%s3 + $0xa8] sm:$0xff]
  %v1442 = vld [vmem:[%s3 + $0xb0] sm:$0xff]
  %v1443 = vld [vmem:[%s3 + $0xb8] sm:$0xff]
  %v1444 = vld [vmem:[%s3 + $0xc0] sm:$0xff]
  %v1445 = vld [vmem:[%s3 + $0xc8] sm:$0xff]
  %v1446 = vld [vmem:[%s3 + $0xd0] sm:$0xff]
  %v1447 = vld [vmem:[%s3 + $0xd8] sm:$0xff]
  %v1448 = vld [vmem:[%s3 + $0xe0] sm:$0xff]
  %v1449 = vld [vmem:[%s3 + $0xe8] sm:$0xff]
  %v1450 = vld [vmem:[%s3 + $0xf0] sm:$0xff]
  %v1451 = vld [vmem:[%s3 + $0xf8] sm:$0xff]
  %v1452 = vld [vmem:[%s3 + $0x100] sm:$0xff]
  %v1453 = vld [vmem:[%s3 + $0x108] sm:$0xff]
  %v1454 = vld [vmem:[%s3 + $0x110] sm:$0xff]
  %v1455 = vld [vmem:[%s3 + $0x118] sm:$0xff]
  %v1456 = vld [vmem:[%s3 + $0x120] sm:$0xff]
  %v1457 = vld [vmem:[%s3 + $0x128] sm:$0xff]
  %v1458 = vld [vmem:[%s3 + $0x130] sm:$0xff]
  %v1459 = vld [vmem:[%s3 + $0x138] sm:$0xff]
  %v1460 = vld [vmem:[%s3 + $0x140] sm:$0xff]
  %v1461 = vld [vmem:[%s3 + $0x148] sm:$0xff]
  %v1462 = vld [vmem:[%s3 + $0x150] sm:$0xff]
  %v1463 = vld [vmem:[%s3 + $0x158] sm:$0xff]
  %v1464 = vld [vmem:[%s3 + $0x160] sm:$0xff]
  %v1465 = vld [vmem:[%s3 + $0x168] sm:$0xff]
  %v1466 = vld [vmem:[%s3 + $0x170] sm:$0xff]
  %v1467 = vld [vmem:[%s3 + $0x178] sm:$0xff]
  %v1468 = vld [vmem:[%s3 + $0x180] sm:$0xff]
  %v1469 = vld [vmem:[%s3 + $0x188] sm:$0xff]
  %v1470 = vld [vmem:[%s3 + $0x190] sm:$0xff]
  %v1471 = vld [vmem:[%s3 + $0x198] sm:$0xff]
  %v1472 = vld [vmem:[%s3 + $0x1a0] sm:$0xff]
  %v1473 = vld [vmem:[%s3 + $0x1a8] sm:$0xff]
  %v1474 = vld [vmem:[%s3 + $0x1b0] sm:$0xff]
  %v1475 = vld [vmem:[%s3 + $0x1b8] sm:$0xff]
  %v1476 = vld [vmem:[%s3 + $0x1c0] sm:$0xff]
  %v1477 = vld [vmem:[%s3 + $0x1c8] sm:$0xff]
  %v1478 = vld [vmem:[%s3 + $0x1d0] sm:$0xff]
  %v1479 = vld [vmem:[%s3 + $0x1d8] sm:$0xff]
  %v1480 = vld [vmem:[%s3 + $0x1e0] sm:$0xff]
  %v1481 = vld [vmem:[%s3 + $0x1e8] sm:$0xff]
  %v1482 = vld [vmem:[%s3 + $0x1f0] sm:$0xff]
  %v1483 = vld [vmem:[%s3 + $0x1f8] sm:$0xff]
  %v1484 = vld [vmem:[%s3 + $0x200] sm:$0xff]
  %v1485 = vld [vmem:[%s3 + $0x208] sm:$0xff]
  %v1486 = vld [vmem:[%s3 + $0x210] sm:$0xff]
  %v1487 = vld [vmem:[%s3 + $0x218] sm:$0xff]
  %v1488 = vld [vmem:[%s3 + $0x220] sm:$0xff]
  %v1489 = vld [vmem:[%s3 + $0x228] sm:$0xff]
  %v1490 = vld [vmem:[%s3 + $0x230] sm:$0xff]
  %v1491 = vld [vmem:[%s3 + $0x238] sm:$0xff]
  %v1492 = vld [vmem:[%s3 + $0x240] sm:$0xff]
  %v1493 = vld [vmem:[%s3 + $0x248] sm:$0xff]
  %v1494 = vld [vmem:[%s3 + $0x250] sm:$0xff]
  %v1495 = vld [vmem:[%s3 + $0x258] sm:$0xff]
  %v1496 = vld [vmem:[%s3 + $0x260] sm:$0xff]
  %v1497 = vld [vmem:[%s3 + $0x268] sm:$0xff]
  %v1498 = vld [vmem:[%s3 + $0x270] sm:$0xff]
  %v1499 = vld [vmem:[%s3 + $0x278] sm:$0xff]
  %v1500 = vld [vmem:[%s3 + $0x280] sm:$0xff]
  %v1501 = vld [vmem:[%s3 + $0x288] sm:$0xff]
  %v1502 = vld [vmem:[%s3 + $0x290] sm:$0xff]
  %v1503 = vld [vmem:[%s3 + $0x298] sm:$0xff]
  %v1504 = vld [vmem:[%s3 + $0x2a0] sm:$0xff]
  %v1505 = vld [vmem:[%s3 + $0x2a8] sm:$0xff]
  %v1506 = vld [vmem:[%s3 + $0x2b0] sm:$0xff]
  %v1507 = vld [vmem:[%s3 + $0x2b8] sm:$0xff]
  %v1508 = vld [vmem:[%s3 + $0x2c0] sm:$0xff]
  %v1509 = vld [vmem:[%s3 + $0x2c8] sm:$0xff]
  %v1510 = vld [vmem:[%s3 + $0x2d0] sm:$0xff]
  %v1511 = vld [vmem:[%s3 + $0x2d8] sm:$0xff]
  %v1512 = vld [vmem:[%s3 + $0x2e0] sm:$0xff]
  %v1513 = vld [vmem:[%s3 + $0x2e8] sm:$0xff]
  %v1514 = vld [vmem:[%s3 + $0x2f0] sm:$0xff]
  %v1515 = vld [vmem:[%s3 + $0x2f8] sm:$0xff]
  %v1516 = vld [vmem:[%s3 + $0x300] sm:$0xff]
  %v1517 = vld [vmem:[%s3 + $0x308] sm:$0xff]
  %v1518 = vld [vmem:[%s3 + $0x310] sm:$0xff]
  %v1519 = vld [vmem:[%s3 + $0x318] sm:$0xff]
  %v1520 = vld [vmem:[%s3 + $0x320] sm:$0xff]
  %v1521 = vld [vmem:[%s3 + $0x328] sm:$0xff]
  %v1522 = vld [vmem:[%s3 + $0x330] sm:$0xff]
  %v1523 = vld [vmem:[%s3 + $0x338] sm:$0xff]
  %v1524 = vld [vmem:[%s3 + $0x340] sm:$0xff]
  %v1525 = vld [vmem:[%s3 + $0x348] sm:$0xff]
  %v1526 = vld [vmem:[%s3 + $0x350] sm:$0xff]
  %v1527 = vld [vmem:[%s3 + $0x358] sm:$0xff]
  %v1528 = vld [vmem:[%s3 + $0x360] sm:$0xff]
  %v1529 = vld [vmem:[%s3 + $0x368] sm:$0xff]
  %v1530 = vld [vmem:[%s3 + $0x370] sm:$0xff]
  %v1531 = vld [vmem:[%s3 + $0x378] sm:$0xff]
  %v1532 = vld [vmem:[%s3 + $0x380] sm:$0xff]
  %v1533 = vld [vmem:[%s3 + $0x388] sm:$0xff]
  %v1534 = vld [vmem:[%s3 + $0x390] sm:$0xff]
  %v1535 = vld [vmem:[%s3 + $0x398] sm:$0xff]
  %v1536 = vld [vmem:[%s3 + $0x3a0] sm:$0xff]
  %v1537 = vld [vmem:[%s3 + $0x3a8] sm:$0xff]
  %v1538 = vld [vmem:[%s3 + $0x3b0] sm:$0xff]
  %v1539 = vld [vmem:[%s3 + $0x3b8] sm:$0xff]
  %v1540 = vld [vmem:[%s3 + $0x3c0] sm:$0xff]
  %v1541 = vld [vmem:[%s3 + $0x3c8] sm:$0xff]
  %v1542 = vld [vmem:[%s3 + $0x3d0] sm:$0xff]
  %v1543 = vld [vmem:[%s3 + $0x3d8] sm:$0xff]
  %v1544 = vld [vmem:[%s3 + $0x3e0] sm:$0xff]
  %v1545 = vld [vmem:[%s3 + $0x3e8] sm:$0xff]
  %v1546 = vld [vmem:[%s3 + $0x3f0] sm:$0xff]
  %v1547 = vld [vmem:[%s3 + $0x3f8] sm:$0xff]
  %v1548 = vld [vmem:[%s3 + $0x400] sm:$0xff]
  %v1549 = vld [vmem:[%s3 + $0x408] sm:$0xff]
  %v1550 = vld [vmem:[%s3 + $0x410] sm:$0xff]
  %v1551 = vld [vmem:[%s3 + $0x418] sm:$0xff]
  %v1552 = vld [vmem:[%s3 + $0x420] sm:$0xff]
  %v1553 = vld [vmem:[%s3 + $0x428] sm:$0xff]
  %v1554 = vld [vmem:[%s3 + $0x430] sm:$0xff]
  %v1555 = vld [vmem:[%s3 + $0x438] sm:$0xff]
  %v1556 = vld [vmem:[%s3 + $0x440] sm:$0xff]
  %v1557 = vld [vmem:[%s3 + $0x448] sm:$0xff]
  %v1558 = vld [vmem:[%s3 + $0x450] sm:$0xff]
  %v1559 = vld [vmem:[%s3 + $0x458] sm:$0xff]
  %v1560 = vld [vmem:[%s3 + $0x460] sm:$0xff]
  %v1561 = vld [vmem:[%s3 + $0x468] sm:$0xff]
  %v1562 = vld [vmem:[%s3 + $0x470] sm:$0xff]
  %v1563 = vld [vmem:[%s3 + $0x478] sm:$0xff]
  %v1564 = vld [vmem:[%s3 + $0x480] sm:$0xff]
  %v1565 = vld [vmem:[%s3 + $0x488] sm:$0xff]
  %v1566 = vld [vmem:[%s3 + $0x490] sm:$0xff]
  %v1567 = vld [vmem:[%s3 + $0x498] sm:$0xff]
  %v1568 = vld [vmem:[%s3 + $0x4a0] sm:$0xff]
  %v1569 = vld [vmem:[%s3 + $0x4a8] sm:$0xff]
  %v1570 = vld [vmem:[%s3 + $0x4b0] sm:$0xff]
  %v1571 = vld [vmem:[%s3 + $0x4b8] sm:$0xff]
  %v1572 = vld [vmem:[%s3 + $0x4c0] sm:$0xff]
  %v1573 = vld [vmem:[%s3 + $0x4c8] sm:$0xff]
  %v1574 = vld [vmem:[%s3 + $0x4d0] sm:$0xff]
  %v1575 = vld [vmem:[%s3 + $0x4d8] sm:$0xff]
  %v1576 = vld [vmem:[%s3 + $0x4e0] sm:$0xff]
  %v1577 = vld [vmem:[%s3 + $0x4e8] sm:$0xff]
  %v1578 = vld [vmem:[%s3 + $0x4f0] sm:$0xff]
  %v1579 = vld [vmem:[%s3 + $0x4f8] sm:$0xff]
  %v1580 = vld [vmem:[%s3 + $0x500] sm:$0xff]
  %v1581 = vld [vmem:[%s3 + $0x508] sm:$0xff]
  %v1582 = vld [vmem:[%s3 + $0x510] sm:$0xff]
  %v1583 = vld [vmem:[%s3 + $0x518] sm:$0xff]
  %v1584 = vld [vmem:[%s3 + $0x520] sm:$0xff]
  %v1585 = vld [vmem:[%s3 + $0x528] sm:$0xff]
  %v1586 = vld [vmem:[%s3 + $0x530] sm:$0xff]
  %v1587 = vld [vmem:[%s3 + $0x538] sm:$0xff]
  %v1588 = vld [vmem:[%s3 + $0x540] sm:$0xff]
  %v1589 = vld [vmem:[%s3 + $0x548] sm:$0xff]
  %v1590 = vld [vmem:[%s3 + $0x550] sm:$0xff]
  %v1591 = vld [vmem:[%s3 + $0x558] sm:$0xff]
  %v1592 = vld [vmem:[%s3 + $0x560] sm:$0xff]
  %v1593 = vld [vmem:[%s3 + $0x568] sm:$0xff]
  %v1594 = vld [vmem:[%s3 + $0x570] sm:$0xff]
  %v1595 = vld [vmem:[%s3 + $0x578] sm:$0xff]
  %v1596 = vld [vmem:[%s3 + $0x580] sm:$0xff]
  %v1597 = vld [vmem:[%s3 + $0x588] sm:$0xff]
  %v1598 = vld [vmem:[%s3 + $0x590] sm:$0xff]
  %v1599 = vld [vmem:[%s3 + $0x598] sm:$0xff]
  %v1600 = vld [vmem:[%s3 + $0x5a0] sm:$0xff]
  %v1601 = vld [vmem:[%s3 + $0x5a8] sm:$0xff]
  %v1602 = vld [vmem:[%s3 + $0x5b0] sm:$0xff]
  %v1603 = vld [vmem:[%s3 + $0x5b8] sm:$0xff]
  %v1604 = vld [vmem:[%s3 + $0x5c0] sm:$0xff]
  %v1605 = vld [vmem:[%s3 + $0x5c8] sm:$0xff]
  %v1606 = vld [vmem:[%s3 + $0x5d0] sm:$0xff]
  %v1607 = vld [vmem:[%s3 + $0x5d8] sm:$0xff]
  %v1608 = vld [vmem:[%s3 + $0x5e0] sm:$0xff]
  %v1609 = vld [vmem:[%s3 + $0x5e8] sm:$0xff]
  %v1610 = vld [vmem:[%s3 + $0x5f0] sm:$0xff]
  %v1611 = vld [vmem:[%s3 + $0x5f8] sm:$0xff]
  %v1612 = vld [vmem:[%s3 + $0x600] sm:$0xff]
  %v1613 = vld [vmem:[%s3 + $0x608] sm:$0xff]
  %v1614 = vld [vmem:[%s3 + $0x610] sm:$0xff]
  %v1615 = vld [vmem:[%s3 + $0x618] sm:$0xff]
  %v1616 = vld [vmem:[%s4] sm:$0xff]
  %v1617 = vld [vmem:[%s4 + $0x8] sm:$0xff]
  %v1618 = vld [vmem:[%s4 + $0x10] sm:$0xff]
  %v1619 = vld [vmem:[%s4 + $0x18] sm:$0xff]
  %v1620 = vld [vmem:[%s4 + $0x20] sm:$0xff]
  %v1621 = vld [vmem:[%s4 + $0x28] sm:$0xff]
  %v1622 = vld [vmem:[%s4 + $0x30] sm:$0xff]
  %v1623 = vld [vmem:[%s4 + $0x38] sm:$0xff]
  %v1624 = vld [vmem:[%s4 + $0x40] sm:$0xff]
  %v1625 = vld [vmem:[%s4 + $0x48] sm:$0xff]
  %v1626 = vld [vmem:[%s4 + $0x50] sm:$0xff]
  %v1627 = vld [vmem:[%s4 + $0x58] sm:$0xff]
  %v1628 = vld [vmem:[%s4 + $0x60] sm:$0xff]
  %v1629 = vld [vmem:[%s4 + $0x68] sm:$0xff]
  %v1630 = vld [vmem:[%s4 + $0x70] sm:$0xff]
  %v1631 = vld [vmem:[%s4 + $0x78] sm:$0xff]
  %v1632 = vld [vmem:[%s4 + $0x80] sm:$0xff]
  %v1633 = vld [vmem:[%s4 + $0x88] sm:$0xff]
  %v1634 = vld [vmem:[%s4 + $0x90] sm:$0xff]
  %v1635 = vld [vmem:[%s4 + $0x98] sm:$0xff]
  %v1636 = vld [vmem:[%s4 + $0xa0] sm:$0xff]
  %v1637 = vld [vmem:[%s4 + $0xa8] sm:$0xff]
  %v1638 = vld [vmem:[%s4 + $0xb0] sm:$0xff]
  %v1639 = vld [vmem:[%s4 + $0xb8] sm:$0xff]
  %v1640 = vld [vmem:[%s4 + $0xc0] sm:$0xff]
  %v1641 = vld [vmem:[%s4 + $0xc8] sm:$0xff]
  %v1642 = vld [vmem:[%s4 + $0xd0] sm:$0xff]
  %v1643 = vld [vmem:[%s4 + $0xd8] sm:$0xff]
  %v1644 = vld [vmem:[%s4 + $0xe0] sm:$0xff]
  %v1645 = vld [vmem:[%s4 + $0xe8] sm:$0xff]
  %v1646 = vld [vmem:[%s4 + $0xf0] sm:$0xff]
  %v1647 = vld [vmem:[%s4 + $0xf8] sm:$0xff]
  %v1648 = vld [vmem:[%s4 + $0x100] sm:$0xff]
  %v1649 = vld [vmem:[%s4 + $0x108] sm:$0xff]
  %v1650 = vld [vmem:[%s4 + $0x110] sm:$0xff]
  %v1651 = vld [vmem:[%s4 + $0x118] sm:$0xff]
  %v1652 = vld [vmem:[%s4 + $0x120] sm:$0xff]
  %v1653 = vld [vmem:[%s4 + $0x128] sm:$0xff]
  %v1654 = vld [vmem:[%s4 + $0x130] sm:$0xff]
  %v1655 = vld [vmem:[%s4 + $0x138] sm:$0xff]
  %v1656 = vld [vmem:[%s4 + $0x140] sm:$0xff]
  %v1657 = vld [vmem:[%s4 + $0x148] sm:$0xff]
  %v1658 = vld [vmem:[%s4 + $0x150] sm:$0xff]
  %v1659 = vld [vmem:[%s4 + $0x158] sm:$0xff]
  %v1660 = vld [vmem:[%s4 + $0x160] sm:$0xff]
  %v1661 = vld [vmem:[%s4 + $0x168] sm:$0xff]
  %v1662 = vld [vmem:[%s4 + $0x170] sm:$0xff]
  %v1663 = vld [vmem:[%s4 + $0x178] sm:$0xff]
  %v1664 = vld [vmem:[%s4 + $0x180] sm:$0xff]
  %v1665 = vld [vmem:[%s4 + $0x188] sm:$0xff]
  %v1666 = vld [vmem:[%s4 + $0x190] sm:$0xff]
  %v1667 = vld [vmem:[%s4 + $0x198] sm:$0xff]
  %v1668 = vld [vmem:[%s4 + $0x1a0] sm:$0xff]
  %v1669 = vld [vmem:[%s4 + $0x1a8] sm:$0xff]
  %v1670 = vld [vmem:[%s4 + $0x1b0] sm:$0xff]
  %v1671 = vld [vmem:[%s4 + $0x1b8] sm:$0xff]
  %v1672 = vld [vmem:[%s4 + $0x1c0] sm:$0xff]
  %v1673 = vld [vmem:[%s4 + $0x1c8] sm:$0xff]
  %v1674 = vld [vmem:[%s4 + $0x1d0] sm:$0xff]
  %v1675 = vld [vmem:[%s4 + $0x1d8] sm:$0xff]
  %v1676 = vld [vmem:[%s4 + $0x1e0] sm:$0xff]
  %v1677 = vld [vmem:[%s4 + $0x1e8] sm:$0xff]
  %v1678 = vld [vmem:[%s4 + $0x1f0] sm:$0xff]
  %v1679 = vld [vmem:[%s4 + $0x1f8] sm:$0xff]
  %v1680 = vld [vmem:[%s4 + $0x200] sm:$0xff]
  %v1681 = vld [vmem:[%s4 + $0x208] sm:$0xff]
  %v1682 = vld [vmem:[%s4 + $0x210] sm:$0xff]
  %v1683 = vld [vmem:[%s4 + $0x218] sm:$0xff]
  %v1684 = vld [vmem:[%s4 + $0x220] sm:$0xff]
  %v1685 = vld [vmem:[%s4 + $0x228] sm:$0xff]
  %v1686 = vld [vmem:[%s4 + $0x230] sm:$0xff]
  %v1687 = vld [vmem:[%s4 + $0x238] sm:$0xff]
  %v1688 = vld [vmem:[%s4 + $0x240] sm:$0xff]
  %v1689 = vld [vmem:[%s4 + $0x248] sm:$0xff]
  %v1690 = vld [vmem:[%s4 + $0x250] sm:$0xff]
  %v1691 = vld [vmem:[%s4 + $0x258] sm:$0xff]
  %v1692 = vld [vmem:[%s4 + $0x260] sm:$0xff]
  %v1693 = vld [vmem:[%s4 + $0x268] sm:$0xff]
  %v1694 = vld [vmem:[%s4 + $0x270] sm:$0xff]
  %v1695 = vld [vmem:[%s4 + $0x278] sm:$0xff]
  %v1696 = vld [vmem:[%s4 + $0x280] sm:$0xff]
  %v1697 = vld [vmem:[%s4 + $0x288] sm:$0xff]
  %v1698 = vld [vmem:[%s4 + $0x290] sm:$0xff]
  %v1699 = vld [vmem:[%s4 + $0x298] sm:$0xff]
  %v1700 = vld [vmem:[%s4 + $0x2a0] sm:$0xff]
  %v1701 = vld [vmem:[%s4 + $0x2a8] sm:$0xff]
  %v1702 = vld [vmem:[%s4 + $0x2b0] sm:$0xff]
  %v1703 = vld [vmem:[%s4 + $0x2b8] sm:$0xff]
  %v1704 = vld [vmem:[%s4 + $0x2c0] sm:$0xff]
  %v1705 = vld [vmem:[%s4 + $0x2c8] sm:$0xff]
  %v1706 = vld [vmem:[%s4 + $0x2d0] sm:$0xff]
  %v1707 = vld [vmem:[%s4 + $0x2d8] sm:$0xff]
  %v1708 = vld [vmem:[%s4 + $0x2e0] sm:$0xff]
  %v1709 = vld [vmem:[%s4 + $0x2e8] sm:$0xff]
  %v1710 = vld [vmem:[%s4 + $0x2f0] sm:$0xff]
  %v1711 = vld [vmem:[%s4 + $0x2f8] sm:$0xff]
  %v1712 = vld [vmem:[%s4 + $0x300] sm:$0xff]
  %v1713 = vld [vmem:[%s4 + $0x308] sm:$0xff]
  %v1714 = vld [vmem:[%s4 + $0x310] sm:$0xff]
  %v1715 = vld [vmem:[%s4 + $0x318] sm:$0xff]
  %v1716 = vld [vmem:[%s4 + $0x320] sm:$0xff]
  %v1717 = vld [vmem:[%s4 + $0x328] sm:$0xff]
  %v1718 = vld [vmem:[%s4 + $0x330] sm:$0xff]
  %v1719 = vld [vmem:[%s4 + $0x338] sm:$0xff]
  %v1720 = vld [vmem:[%s4 + $0x340] sm:$0xff]
  %v1721 = vld [vmem:[%s4 + $0x348] sm:$0xff]
  %v1722 = vld [vmem:[%s4 + $0x350] sm:$0xff]
  %v1723 = vld [vmem:[%s4 + $0x358] sm:$0xff]
  %v1724 = vld [vmem:[%s4 + $0x360] sm:$0xff]
  %v1725 = vld [vmem:[%s4 + $0x368] sm:$0xff]
  %v1726 = vld [vmem:[%s4 + $0x370] sm:$0xff]
  %v1727 = vld [vmem:[%s4 + $0x378] sm:$0xff]
  %v1728 = vld [vmem:[%s4 + $0x380] sm:$0xff]
  %v1729 = vld [vmem:[%s4 + $0x388] sm:$0xff]
  %v1730 = vld [vmem:[%s4 + $0x390] sm:$0xff]
  %v1731 = vld [vmem:[%s4 + $0x398] sm:$0xff]
  %v1732 = vld [vmem:[%s4 + $0x3a0] sm:$0xff]
  %v1733 = vld [vmem:[%s4 + $0x3a8] sm:$0xff]
  %v1734 = vld [vmem:[%s4 + $0x3b0] sm:$0xff]
  %v1735 = vld [vmem:[%s4 + $0x3b8] sm:$0xff]
  %v1736 = vld [vmem:[%s4 + $0x3c0] sm:$0xff]
  %v1737 = vld [vmem:[%s4 + $0x3c8] sm:$0xff]
  %v1738 = vld [vmem:[%s4 + $0x3d0] sm:$0xff]
  %v1739 = vld [vmem:[%s4 + $0x3d8] sm:$0xff]
  %v1740 = vld [vmem:[%s4 + $0x3e0] sm:$0xff]
  %v1741 = vld [vmem:[%s4 + $0x3e8] sm:$0xff]
  %v1742 = vld [vmem:[%s4 + $0x3f0] sm:$0xff]
  %v1743 = vld [vmem:[%s4 + $0x3f8] sm:$0xff]
  %v1744 = vld [vmem:[%s4 + $0x400] sm:$0xff]
  %v1745 = vld [vmem:[%s4 + $0x408] sm:$0xff]
  %v1746 = vld [vmem:[%s4 + $0x410] sm:$0xff]
  %v1747 = vld [vmem:[%s4 + $0x418] sm:$0xff]
  %v1748 = vld [vmem:[%s4 + $0x420] sm:$0xff]
  %v1749 = vld [vmem:[%s4 + $0x428] sm:$0xff]
  %v1750 = vld [vmem:[%s4 + $0x430] sm:$0xff]
  %v1751 = vld [vmem:[%s4 + $0x438] sm:$0xff]
  %v1752 = vld [vmem:[%s4 + $0x440] sm:$0xff]
  %v1753 = vld [vmem:[%s4 + $0x448] sm:$0xff]
  %v1754 = vld [vmem:[%s4 + $0x450] sm:$0xff]
  %v1755 = vld [vmem:[%s4 + $0x458] sm:$0xff]
  %v1756 = vld [vmem:[%s4 + $0x460] sm:$0xff]
  %v1757 = vld [vmem:[%s4 + $0x468] sm:$0xff]
  %v1758 = vld [vmem:[%s4 + $0x470] sm:$0xff]
  %v1759 = vld [vmem:[%s4 + $0x478] sm:$0xff]
  %v1760 = vld [vmem:[%s4 + $0x480] sm:$0xff]
  %v1761 = vld [vmem:[%s4 + $0x488] sm:$0xff]
  %v1762 = vld [vmem:[%s4 + $0x490] sm:$0xff]
  %v1763 = vld [vmem:[%s4 + $0x498] sm:$0xff]
  %v1764 = vld [vmem:[%s4 + $0x4a0] sm:$0xff]
  %v1765 = vld [vmem:[%s4 + $0x4a8] sm:$0xff]
  %v1766 = vld [vmem:[%s4 + $0x4b0] sm:$0xff]
  %v1767 = vld [vmem:[%s4 + $0x4b8] sm:$0xff]
  %v1768 = vld [vmem:[%s4 + $0x4c0] sm:$0xff]
  %v1769 = vld [vmem:[%s4 + $0x4c8] sm:$0xff]
  %v1770 = vld [vmem:[%s4 + $0x4d0] sm:$0xff]
  %v1771 = vld [vmem:[%s4 + $0x4d8] sm:$0xff]
  %v1772 = vld [vmem:[%s4 + $0x4e0] sm:$0xff]
  %v1773 = vld [vmem:[%s4 + $0x4e8] sm:$0xff]
  %v1774 = vld [vmem:[%s4 + $0x4f0] sm:$0xff]
  %v1775 = vld [vmem:[%s4 + $0x4f8] sm:$0xff]
  %v1776 = vld [vmem:[%s4 + $0x500] sm:$0xff]
  %v1777 = vld [vmem:[%s4 + $0x508] sm:$0xff]
  %v1778 = vld [vmem:[%s4 + $0x510] sm:$0xff]
  %v1779 = vld [vmem:[%s4 + $0x518] sm:$0xff]
  %v1780 = vld [vmem:[%s4 + $0x520] sm:$0xff]
  %v1781 = vld [vmem:[%s4 + $0x528] sm:$0xff]
  %v1782 = vld [vmem:[%s4 + $0x530] sm:$0xff]
  %v1783 = vld [vmem:[%s4 + $0x538] sm:$0xff]
  %v1784 = vld [vmem:[%s4 + $0x540] sm:$0xff]
  %v1785 = vld [vmem:[%s4 + $0x548] sm:$0xff]
  %v1786 = vld [vmem:[%s4 + $0x550] sm:$0xff]
  %v1787 = vld [vmem:[%s4 + $0x558] sm:$0xff]
  %v1788 = vld [vmem:[%s4 + $0x560] sm:$0xff]
  %v1789 = vld [vmem:[%s4 + $0x568] sm:$0xff]
  %v1790 = vld [vmem:[%s4 + $0x570] sm:$0xff]
  %v1791 = vld [vmem:[%s4 + $0x578] sm:$0xff]
  %v1792 = vld [vmem:[%s4 + $0x580] sm:$0xff]
  %v1793 = vld [vmem:[%s4 + $0x588] sm:$0xff]
  %v1794 = vld [vmem:[%s4 + $0x590] sm:$0xff]
  %v1795 = vld [vmem:[%s4 + $0x598] sm:$0xff]
  %v1796 = vld [vmem:[%s4 + $0x5a0] sm:$0xff]
  %v1797 = vld [vmem:[%s4 + $0x5a8] sm:$0xff]
  %v1798 = vld [vmem:[%s4 + $0x5b0] sm:$0xff]
  %v1799 = vld [vmem:[%s4 + $0x5b8] sm:$0xff]
  %v1800 = vld [vmem:[%s4 + $0x5c0] sm:$0xff]
  %v1801 = vld [vmem:[%s4 + $0x5c8] sm:$0xff]
  %v1802 = vld [vmem:[%s4 + $0x5d0] sm:$0xff]
  %v1803 = vld [vmem:[%s4 + $0x5d8] sm:$0xff]
  %v1804 = vld [vmem:[%s4 + $0x5e0] sm:$0xff]
  %v1805 = vld [vmem:[%s4 + $0x5e8] sm:$0xff]
  %v1806 = vld [vmem:[%s4 + $0x5f0] sm:$0xff]
  %v1807 = vld [vmem:[%s4 + $0x5f8] sm:$0xff]
  %v1808 = vld [vmem:[%s4 + $0x600] sm:$0xff]
  %v1809 = vld [vmem:[%s4 + $0x608] sm:$0xff]
  %v1810 = vld [vmem:[%s4 + $0x610] sm:$0xff]
  %v1811 = vld [vmem:[%s4 + $0x618] sm:$0xff]
  %s1812 = scalar_lea.vmem %s9, 2
  %v1813 = vld [vmem:[%s1812] ss:$8 sm:$0xf]
  %v1815 = vlaneseq
  %v1816 = vshrl.u32 %v1815, 7
  %v1817 = vsub.s32 0, %v1816
  %v1818 = vrot.slane %v1813, %v1817
  %v1819 = vlaneseq
  %v1820 = vshrl.u32 %v1819, 7
  %v1821 = vsub.s32 1, %v1820
  %v1822 = vrot.slane %v1813, %v1821
  %v1823 = vlaneseq
  %v1824 = vshrl.u32 %v1823, 7
  %v1825 = vsub.s32 2, %v1824
  %v1826 = vrot.slane %v1813, %v1825
  %v1827 = vlaneseq
  %v1828 = vshrl.u32 %v1827, 7
  %v1829 = vsub.s32 3, %v1828
  %v1830 = vrot.slane %v1813, %v1829
  %1835 = vmatprep.subr.mxu0 %v1421
  %1836 = vmatpush1.msra.mxu0 %v1420
  %1837 = vmatprep.subr.mxu0 %v1425
  %1838 = vmatpush1.msra.mxu0 %v1424
  %1839 = vmatprep.subr.mxu0 %v1429
  %1840 = vmatpush1.msra.mxu0 %v1428
  %1841 = vmatprep.subr.mxu0 %v1433
  %1842 = vmatpush1.msra.mxu0 %v1432
  %1843 = vmatprep.subr.mxu0 %v1437
  %1844 = vmatpush1.msra.mxu0 %v1436
  %1845 = vmatprep.subr.mxu0 %v1441
  %1846 = vmatpush1.msra.mxu0 %v1440
  %1847 = vmatprep.subr.mxu0 %v1445
  %1848 = vmatpush1.msra.mxu0 %v1444
  %1849 = vmatprep.subr.mxu0 %v1449
  %1850 = vmatpush1.msra.mxu0 %v1448
  %1851 = vmatprep.subr.mxu0 %v1453
  %1852 = vmatpush1.msra.mxu0 %v1452
  %1853 = vmatprep.subr.mxu0 %v1457
  %1854 = vmatpush1.msra.mxu0 %v1456
  %1855 = vmatprep.subr.mxu0 %v1461
  %1856 = vmatpush1.msra.mxu0 %v1460
  %1857 = vmatprep.subr.mxu0 %v1465
  %1858 = vmatpush1.msra.mxu0 %v1464
  %1859 = vmatprep.subr.mxu0 %v1469
  %1860 = vmatpush1.msra.mxu0 %v1468
  %1861 = vmatprep.subr.mxu0 %v1473
  %1862 = vmatpush1.msra.mxu0 %v1472
  %1863 = vmatprep.subr.mxu0 %v1477
  %1864 = vmatpush1.msra.mxu0 %v1476
  %1865 = vmatprep.subr.mxu0 %v1481
  %1866 = vmatpush1.msra.mxu0 %v1480
  %1867 = vmatprep.subr.mxu0 %v1485
  %1868 = vmatpush1.msra.mxu0 %v1484
  %1869 = vmatprep.subr.mxu0 %v1489
  %1870 = vmatpush1.msra.mxu0 %v1488
  %1871 = vmatprep.subr.mxu0 %v1493
  %1872 = vmatpush1.msra.mxu0 %v1492
  %1873 = vmatprep.subr.mxu0 %v1497
  %1874 = vmatpush1.msra.mxu0 %v1496
  %1875 = vmatprep.subr.mxu0 %v1501
  %1876 = vmatpush1.msra.mxu0 %v1500
  %1877 = vmatprep.subr.mxu0 %v1505
  %1878 = vmatpush1.msra.mxu0 %v1504
  %1879 = vmatprep.subr.mxu0 %v1509
  %1880 = vmatpush1.msra.mxu0 %v1508
  %1881 = vmatprep.subr.mxu0 %v1513
  %1882 = vmatpush1.msra.mxu0 %v1512
  %1883 = vmatprep.subr.mxu0 %v1517
  %1884 = vmatpush1.msra.mxu0 %v1516
  %1885 = vmatprep.subr.mxu0 %v1521
  %1886 = vmatpush1.msra.mxu0 %v1520
  %1887 = vmatprep.subr.mxu0 %v1525
  %1888 = vmatpush1.msra.mxu0 %v1524
  %1889 = vmatprep.subr.mxu0 %v1529
  %1890 = vmatpush1.msra.mxu0 %v1528
  %1891 = vmatprep.subr.mxu0 %v1533
  %1892 = vmatpush1.msra.mxu0 %v1532
  %1893 = vmatprep.subr.mxu0 %v1537
  %1894 = vmatpush1.msra.mxu0 %v1536
  %1895 = vmatprep.subr.mxu0 %v1541
  %1896 = vmatpush1.msra.mxu0 %v1540
  %1897 = vmatprep.subr.mxu0 %v1545
  %1898 = vmatpush1.msra.mxu0 %v1544
  %1899 = vmatprep.mubr.f32.mxu0 %v742
  %1900 = vmatmul.mubr.f32.gmra.mrb[0].mxu0 %v740
  %v1901 = vpop.f32.mrb[0].mxu0
  %v1902 = vadd.f32 %v1818, %v1901
  %v1903 = vpop.f32.mrb[0].mxu0
  %v1904 = vadd.f32 %v1822, %v1903
  %1905 = vdwg.mxu0
  %1906 = vmatprep.subr.mxu0 %v1549
  %1907 = vmatpush1.msra.mxu0 %v1548
  %1908 = vmatprep.subr.mxu0 %v1553
  %1909 = vmatpush1.msra.mxu0 %v1552
  %1910 = vmatprep.subr.mxu0 %v1557
  %1911 = vmatpush1.msra.mxu0 %v1556
  %1912 = vmatprep.subr.mxu0 %v1561
  %1913 = vmatpush1.msra.mxu0 %v1560
  %1914 = vmatprep.subr.mxu0 %v1565
  %1915 = vmatpush1.msra.mxu0 %v1564
  %1916 = vmatprep.subr.mxu0 %v1569
  %1917 = vmatpush1.msra.mxu0 %v1568
  %1918 = vmatprep.subr.mxu0 %v1573
  %1919 = vmatpush1.msra.mxu0 %v1572
  %1920 = vmatprep.subr.mxu0 %v1577
  %1921 = vmatpush1.msra.mxu0 %v1576
  %1922 = vmatprep.subr.mxu0 %v1581
  %1923 = vmatpush1.msra.mxu0 %v1580
  %1924 = vmatprep.subr.mxu0 %v1585
  %1925 = vmatpush1.msra.mxu0 %v1584
  %1926 = vmatprep.subr.mxu0 %v1589
  %1927 = vmatpush1.msra.mxu0 %v1588
  %1928 = vmatprep.subr.mxu0 %v1593
  %1929 = vmatpush1.msra.mxu0 %v1592
  %1930 = vmatprep.subr.mxu0 %v1597
  %1931 = vmatpush1.msra.mxu0 %v1596
  %1932 = vmatprep.subr.mxu0 %v1601
  %1933 = vmatpush1.msra.mxu0 %v1600
  %1934 = vmatprep.subr.mxu0 %v1605
  %1935 = vmatpush1.msra.mxu0 %v1604
  %1936 = vmatprep.subr.mxu0 %v1609
  %1937 = vmatpush1.msra.mxu0 %v1608
  %1938 = vmatprep.subr.mxu0 %v1613
  %1939 = vmatpush1.msra.mxu0 %v1612
  %1940 = vmatprep.subr.mxu0 0.0
  %1941 = vmatpush1.msra.mxu0 0.0
  %1942 = vmatprep.subr.mxu0 0.0
  %1943 = vmatpush1.msra.mxu0 0.0
  %1944 = vmatprep.subr.mxu0 0.0
  %1945 = vmatpush1.msra.mxu0 0.0
  %1946 = vmatprep.subr.mxu0 0.0
  %1947 = vmatpush1.msra.mxu0 0.0
  %1948 = vmatprep.subr.mxu0 0.0
  %1949 = vmatpush1.msra.mxu0 0.0
  %1950 = vmatprep.subr.mxu0 0.0
  %1951 = vmatpush1.msra.mxu0 0.0
  %1952 = vmatprep.subr.mxu0 0.0
  %1953 = vmatpush1.msra.mxu0 0.0
  %1954 = vmatprep.subr.mxu0 0.0
  %1955 = vmatpush1.msra.mxu0 0.0
  %1956 = vmatprep.subr.mxu0 0.0
  %1957 = vmatpush1.msra.mxu0 0.0
  %1958 = vmatprep.subr.mxu0 0.0
  %1959 = vmatpush1.msra.mxu0 0.0
  %1960 = vmatprep.subr.mxu0 0.0
  %1961 = vmatpush1.msra.mxu0 0.0
  %1962 = vmatprep.subr.mxu0 0.0
  %1963 = vmatpush1.msra.mxu0 0.0
  %1964 = vmatprep.subr.mxu0 0.0
  %1965 = vmatpush1.msra.mxu0 0.0
  %1966 = vmatprep.subr.mxu0 0.0
  %1967 = vmatpush1.msra.mxu0 0.0
  %1968 = vmatprep.subr.mxu0 0.0
  %1969 = vmatpush1.msra.mxu0 0.0
  %1970 = vmatprep.mubr.f32.mxu0 %v1183
  %1971 = vmatmul.mubr.f32.gmra.mrb[0].mxu0 %v1024
  %v1972 = vpop.f32.mrb[0].mxu0
  %v1973 = vadd.f32 %v1902, %v1972
  %v1974 = vpop.f32.mrb[0].mxu0
  %v1975 = vadd.f32 %v1904, %v1974
  %1976 = vdwg.mxu0
  %1977 = vmatprep.subr.mxu0 %v1423
  %1978 = vmatpush1.msra.mxu0 %v1422
  %1979 = vmatprep.subr.mxu0 %v1427
  %1980 = vmatpush1.msra.mxu0 %v1426
  %1981 = vmatprep.subr.mxu0 %v1431
  %1982 = vmatpush1.msra.mxu0 %v1430
  %1983 = vmatprep.subr.mxu0 %v1435
  %1984 = vmatpush1.msra.mxu0 %v1434
  %1985 = vmatprep.subr.mxu0 %v1439
  %1986 = vmatpush1.msra.mxu0 %v1438
  %1987 = vmatprep.subr.mxu0 %v1443
  %1988 = vmatpush1.msra.mxu0 %v1442
  %1989 = vmatprep.subr.mxu0 %v1447
  %1990 = vmatpush1.msra.mxu0 %v1446
  %1991 = vmatprep.subr.mxu0 %v1451
  %1992 = vmatpush1.msra.mxu0 %v1450
  %1993 = vmatprep.subr.mxu0 %v1455
  %1994 = vmatpush1.msra.mxu0 %v1454
  %1995 = vmatprep.subr.mxu0 %v1459
  %1996 = vmatpush1.msra.mxu0 %v1458
  %1997 = vmatprep.subr.mxu0 %v1463
  %1998 = vmatpush1.msra.mxu0 %v1462
  %1999 = vmatprep.subr.mxu0 %v1467
  %2000 = vmatpush1.msra.mxu0 %v1466
  %2001 = vmatprep.subr.mxu0 %v1471
  %2002 = vmatpush1.msra.mxu0 %v1470
  %2003 = vmatprep.subr.mxu0 %v1475
  %2004 = vmatpush1.msra.mxu0 %v1474
  %2005 = vmatprep.subr.mxu0 %v1479
  %2006 = vmatpush1.msra.mxu0 %v1478
  %2007 = vmatprep.subr.mxu0 %v1483
  %2008 = vmatpush1.msra.mxu0 %v1482
  %2009 = vmatprep.subr.mxu0 %v1487
  %2010 = vmatpush1.msra.mxu0 %v1486
  %2011 = vmatprep.subr.mxu0 %v1491
  %2012 = vmatpush1.msra.mxu0 %v1490
  %2013 = vmatprep.subr.mxu0 %v1495
  %2014 = vmatpush1.msra.mxu0 %v1494
  %2015 = vmatprep.subr.mxu0 %v1499
  %2016 = vmatpush1.msra.mxu0 %v1498
  %2017 = vmatprep.subr.mxu0 %v1503
  %2018 = vmatpush1.msra.mxu0 %v1502
  %2019 = vmatprep.subr.mxu0 %v1507
  %2020 = vmatpush1.msra.mxu0 %v1506
  %2021 = vmatprep.subr.mxu0 %v1511
  %2022 = vmatpush1.msra.mxu0 %v1510
  %2023 = vmatprep.subr.mxu0 %v1515
  %2024 = vmatpush1.msra.mxu0 %v1514
  %2025 = vmatprep.subr.mxu0 %v1519
  %2026 = vmatpush1.msra.mxu0 %v1518
  %2027 = vmatprep.subr.mxu0 %v1523
  %2028 = vmatpush1.msra.mxu0 %v1522
  %2029 = vmatprep.subr.mxu0 %v1527
  %2030 = vmatpush1.msra.mxu0 %v1526
  %2031 = vmatprep.subr.mxu0 %v1531
  %2032 = vmatpush1.msra.mxu0 %v1530
  %2033 = vmatprep.subr.mxu0 %v1535
  %2034 = vmatpush1.msra.mxu0 %v1534
  %2035 = vmatprep.subr.mxu0 %v1539
  %2036 = vmatpush1.msra.mxu0 %v1538
  %2037 = vmatprep.subr.mxu0 %v1543
  %2038 = vmatpush1.msra.mxu0 %v1542
  %2039 = vmatprep.subr.mxu0 %v1547
  %2040 = vmatpush1.msra.mxu0 %v1546
  %2041 = vmatprep.mubr.f32.mxu0 %v742
  %2042 = vmatmul.mubr.f32.gmra.mrb[0].mxu0 %v740
  %v2043 = vpop.f32.mrb[0].mxu0
  %v2044 = vadd.f32 %v1826, %v2043
  %v2045 = vpop.f32.mrb[0].mxu0
  %v2046 = vadd.f32 %v1830, %v2045
  %2047 = vdwg.mxu0
  %2048 = vmatprep.subr.mxu0 %v1551
  %2049 = vmatpush1.msra.mxu0 %v1550
  %2050 = vmatprep.subr.mxu0 %v1555
  %2051 = vmatpush1.msra.mxu0 %v1554
  %2052 = vmatprep.subr.mxu0 %v1559
  %2053 = vmatpush1.msra.mxu0 %v1558
  %2054 = vmatprep.subr.mxu0 %v1563
  %2055 = vmatpush1.msra.mxu0 %v1562
  %2056 = vmatprep.subr.mxu0 %v1567
  %2057 = vmatpush1.msra.mxu0 %v1566
  %2058 = vmatprep.subr.mxu0 %v1571
  %2059 = vmatpush1.msra.mxu0 %v1570
  %2060 = vmatprep.subr.mxu0 %v1575
  %2061 = vmatpush1.msra.mxu0 %v1574
  %2062 = vmatprep.subr.mxu0 %v1579
  %2063 = vmatpush1.msra.mxu0 %v1578
  %2064 = vmatprep.subr.mxu0 %v1583
  %2065 = vmatpush1.msra.mxu0 %v1582
  %2066 = vmatprep.subr.mxu0 %v1587
  %2067 = vmatpush1.msra.mxu0 %v1586
  %2068 = vmatprep.subr.mxu0 %v1591
  %2069 = vmatpush1.msra.mxu0 %v1590
  %2070 = vmatprep.subr.mxu0 %v1595
  %2071 = vmatpush1.msra.mxu0 %v1594
  %2072 = vmatprep.subr.mxu0 %v1599
  %2073 = vmatpush1.msra.mxu0 %v1598
  %2074 = vmatprep.subr.mxu0 %v1603
  %2075 = vmatpush1.msra.mxu0 %v1602
  %2076 = vmatprep.subr.mxu0 %v1607
  %2077 = vmatpush1.msra.mxu0 %v1606
  %2078 = vmatprep.subr.mxu0 %v1611
  %2079 = vmatpush1.msra.mxu0 %v1610
  %2080 = vmatprep.subr.mxu0 %v1615
  %2081 = vmatpush1.msra.mxu0 %v1614
  %2082 = vmatprep.subr.mxu0 0.0
  %2083 = vmatpush1.msra.mxu0 0.0
  %2084 = vmatprep.subr.mxu0 0.0
  %2085 = vmatpush1.msra.mxu0 0.0
  %2086 = vmatprep.subr.mxu0 0.0
  %2087 = vmatpush1.msra.mxu0 0.0
  %2088 = vmatprep.subr.mxu0 0.0
  %2089 = vmatpush1.msra.mxu0 0.0
  %2090 = vmatprep.subr.mxu0 0.0
  %2091 = vmatpush1.msra.mxu0 0.0
  %2092 = vmatprep.subr.mxu0 0.0
  %2093 = vmatpush1.msra.mxu0 0.0
  %2094 = vmatprep.subr.mxu0 0.0
  %2095 = vmatpush1.msra.mxu0 0.0
  %2096 = vmatprep.subr.mxu0 0.0
  %2097 = vmatpush1.msra.mxu0 0.0
  %2098 = vmatprep.subr.mxu0 0.0
  %2099 = vmatpush1.msra.mxu0 0.0
  %2100 = vmatprep.subr.mxu0 0.0
  %2101 = vmatpush1.msra.mxu0 0.0
  %2102 = vmatprep.subr.mxu0 0.0
  %2103 = vmatpush1.msra.mxu0 0.0
  %2104 = vmatprep.subr.mxu0 0.0
  %2105 = vmatpush1.msra.mxu0 0.0
  %2106 = vmatprep.subr.mxu0 0.0
  %2107 = vmatpush1.msra.mxu0 0.0
  %2108 = vmatprep.subr.mxu0 0.0
  %2109 = vmatpush1.msra.mxu0 0.0
  %2110 = vmatprep.subr.mxu0 0.0
  %2111 = vmatpush1.msra.mxu0 0.0
  %2112 = vmatprep.mubr.f32.mxu0 %v1183
  %2113 = vmatmul.mubr.f32.gmra.mrb[0].mxu0 %v1024
  %v2114 = vpop.f32.mrb[0].mxu0
  %v2115 = vadd.f32 %v2044, %v2114
  %v2116 = vpop.f32.mrb[0].mxu0
  %v2117 = vadd.f32 %v2046, %v2116
  %2118 = vdwg.mxu0
  %v2119 = vxor.u32 %v1973, 2147483648
  %v2120 = vxor.u32 %v1975, 2147483648
  %v2121 = vxor.u32 %v2115, 2147483648
  %v2122 = vxor.u32 %v2117, 2147483648
  %v2123 = vmul.f32 %v2119, 1.442695
  %v2124 = vpow.pop %v2123
  %v2125 = vmul.f32 %v2120, 1.442695
  %v2126 = vpow.pop %v2125
  %v2127 = vmul.f32 %v2121, 1.442695
  %v2128 = vpow.pop %v2127
  %v2129 = vmul.f32 %v2122, 1.442695
  %v2130 = vpow.pop %v2129
  %v2131 = vadd.f32 %v2124, 1.0
  %v2132 = vadd.f32 %v2126, 1.0
  %v2133 = vadd.f32 %v2128, 1.0
  %v2134 = vadd.f32 %v2130, 1.0
  %v2135 = vrcp.pop %v2131
  %v2136 = vmul.f32 1.0, %v2135
  %v2137 = vrcp.pop %v2132
  %v2138 = vmul.f32 1.0, %v2137
  %v2139 = vrcp.pop %v2133
  %v2140 = vmul.f32 1.0, %v2139
  %v2141 = vrcp.pop %v2134
  %v2142 = vmul.f32 1.0, %v2141
  %v2143 = vmul.f32 %v1973, %v2136
  %v2144 = vmul.f32 %v1975, %v2138
  %v2145 = vmul.f32 %v2115, %v2140
  %v2146 = vmul.f32 %v2117, %v2142
  %s2147 = scalar_lea.vmem %s9, 3
  %v2148 = vld [vmem:[%s2147] ss:$8 sm:$0xf]
  %v2150 = vlaneseq
  %v2151 = vshrl.u32 %v2150, 7
  %v2152 = vsub.s32 0, %v2151
  %v2153 = vrot.slane %v2148, %v2152
  %v2154 = vlaneseq
  %v2155 = vshrl.u32 %v2154, 7
  %v2156 = vsub.s32 1, %v2155
  %v2157 = vrot.slane %v2148, %v2156
  %v2158 = vlaneseq
  %v2159 = vshrl.u32 %v2158, 7
  %v2160 = vsub.s32 2, %v2159
  %v2161 = vrot.slane %v2148, %v2160
  %v2162 = vlaneseq
  %v2163 = vshrl.u32 %v2162, 7
  %v2164 = vsub.s32 3, %v2163
  %v2165 = vrot.slane %v2148, %v2164
  %v2171 = vsel %vm1181, %v2146, 0
  %2173 = vmatprep.subr.mxu0 %v1617
  %2174 = vmatpush1.msra.mxu0 %v1616
  %2175 = vmatprep.subr.mxu0 %v1621
  %2176 = vmatpush1.msra.mxu0 %v1620
  %2177 = vmatprep.subr.mxu0 %v1625
  %2178 = vmatpush1.msra.mxu0 %v1624
  %2179 = vmatprep.subr.mxu0 %v1629
  %2180 = vmatpush1.msra.mxu0 %v1628
  %2181 = vmatprep.subr.mxu0 %v1633
  %2182 = vmatpush1.msra.mxu0 %v1632
  %2183 = vmatprep.subr.mxu0 %v1637
  %2184 = vmatpush1.msra.mxu0 %v1636
  %2185 = vmatprep.subr.mxu0 %v1641
  %2186 = vmatpush1.msra.mxu0 %v1640
  %2187 = vmatprep.subr.mxu0 %v1645
  %2188 = vmatpush1.msra.mxu0 %v1644
  %2189 = vmatprep.subr.mxu0 %v1649
  %2190 = vmatpush1.msra.mxu0 %v1648
  %2191 = vmatprep.subr.mxu0 %v1653
  %2192 = vmatpush1.msra.mxu0 %v1652
  %2193 = vmatprep.subr.mxu0 %v1657
  %2194 = vmatpush1.msra.mxu0 %v1656
  %2195 = vmatprep.subr.mxu0 %v1661
  %2196 = vmatpush1.msra.mxu0 %v1660
  %2197 = vmatprep.subr.mxu0 %v1665
  %2198 = vmatpush1.msra.mxu0 %v1664
  %2199 = vmatprep.subr.mxu0 %v1669
  %2200 = vmatpush1.msra.mxu0 %v1668
  %2201 = vmatprep.subr.mxu0 %v1673
  %2202 = vmatpush1.msra.mxu0 %v1672
  %2203 = vmatprep.subr.mxu0 %v1677
  %2204 = vmatpush1.msra.mxu0 %v1676
  %2205 = vmatprep.subr.mxu0 %v1681
  %2206 = vmatpush1.msra.mxu0 %v1680
  %2207 = vmatprep.subr.mxu0 %v1685
  %2208 = vmatpush1.msra.mxu0 %v1684
  %2209 = vmatprep.subr.mxu0 %v1689
  %2210 = vmatpush1.msra.mxu0 %v1688
  %2211 = vmatprep.subr.mxu0 %v1693
  %2212 = vmatpush1.msra.mxu0 %v1692
  %2213 = vmatprep.subr.mxu0 %v1697
  %2214 = vmatpush1.msra.mxu0 %v1696
  %2215 = vmatprep.subr.mxu0 %v1701
  %2216 = vmatpush1.msra.mxu0 %v1700
  %2217 = vmatprep.subr.mxu0 %v1705
  %2218 = vmatpush1.msra.mxu0 %v1704
  %2219 = vmatprep.subr.mxu0 %v1709
  %2220 = vmatpush1.msra.mxu0 %v1708
  %2221 = vmatprep.subr.mxu0 %v1713
  %2222 = vmatpush1.msra.mxu0 %v1712
  %2223 = vmatprep.subr.mxu0 %v1717
  %2224 = vmatpush1.msra.mxu0 %v1716
  %2225 = vmatprep.subr.mxu0 %v1721
  %2226 = vmatpush1.msra.mxu0 %v1720
  %2227 = vmatprep.subr.mxu0 %v1725
  %2228 = vmatpush1.msra.mxu0 %v1724
  %2229 = vmatprep.subr.mxu0 %v1729
  %2230 = vmatpush1.msra.mxu0 %v1728
  %2231 = vmatprep.subr.mxu0 %v1733
  %2232 = vmatpush1.msra.mxu0 %v1732
  %2233 = vmatprep.subr.mxu0 %v1737
  %2234 = vmatpush1.msra.mxu0 %v1736
  %2235 = vmatprep.subr.mxu0 %v1741
  %2236 = vmatpush1.msra.mxu0 %v1740
  %2237 = vmatprep.mubr.f32.mxu0 %v2144
  %2238 = vmatmul.mubr.f32.gmra.mrb[0].mxu0 %v2143
  %v2239 = vpop.f32.mrb[0].mxu0
  %v2240 = vadd.f32 %v2153, %v2239
  %v2241 = vpop.f32.mrb[0].mxu0
  %v2242 = vadd.f32 %v2157, %v2241
  %2243 = vdwg.mxu0
  %2244 = vmatprep.subr.mxu0 %v1745
  %2245 = vmatpush1.msra.mxu0 %v1744
  %2246 = vmatprep.subr.mxu0 %v1749
  %2247 = vmatpush1.msra.mxu0 %v1748
  %2248 = vmatprep.subr.mxu0 %v1753
  %2249 = vmatpush1.msra.mxu0 %v1752
  %2250 = vmatprep.subr.mxu0 %v1757
  %2251 = vmatpush1.msra.mxu0 %v1756
  %2252 = vmatprep.subr.mxu0 %v1761
  %2253 = vmatpush1.msra.mxu0 %v1760
  %2254 = vmatprep.subr.mxu0 %v1765
  %2255 = vmatpush1.msra.mxu0 %v1764
  %2256 = vmatprep.subr.mxu0 %v1769
  %2257 = vmatpush1.msra.mxu0 %v1768
  %2258 = vmatprep.subr.mxu0 %v1773
  %2259 = vmatpush1.msra.mxu0 %v1772
  %2260 = vmatprep.subr.mxu0 %v1777
  %2261 = vmatpush1.msra.mxu0 %v1776
  %2262 = vmatprep.subr.mxu0 %v1781
  %2263 = vmatpush1.msra.mxu0 %v1780
  %2264 = vmatprep.subr.mxu0 %v1785
  %2265 = vmatpush1.msra.mxu0 %v1784
  %2266 = vmatprep.subr.mxu0 %v1789
  %2267 = vmatpush1.msra.mxu0 %v1788
  %2268 = vmatprep.subr.mxu0 %v1793
  %2269 = vmatpush1.msra.mxu0 %v1792
  %2270 = vmatprep.subr.mxu0 %v1797
  %2271 = vmatpush1.msra.mxu0 %v1796
  %2272 = vmatprep.subr.mxu0 %v1801
  %2273 = vmatpush1.msra.mxu0 %v1800
  %2274 = vmatprep.subr.mxu0 %v1805
  %2275 = vmatpush1.msra.mxu0 %v1804
  %2276 = vmatprep.subr.mxu0 %v1809
  %2277 = vmatpush1.msra.mxu0 %v1808
  %2278 = vmatprep.subr.mxu0 0.0
  %2279 = vmatpush1.msra.mxu0 0.0
  %2280 = vmatprep.subr.mxu0 0.0
  %2281 = vmatpush1.msra.mxu0 0.0
  %2282 = vmatprep.subr.mxu0 0.0
  %2283 = vmatpush1.msra.mxu0 0.0
  %2284 = vmatprep.subr.mxu0 0.0
  %2285 = vmatpush1.msra.mxu0 0.0
  %2286 = vmatprep.subr.mxu0 0.0
  %2287 = vmatpush1.msra.mxu0 0.0
  %2288 = vmatprep.subr.mxu0 0.0
  %2289 = vmatpush1.msra.mxu0 0.0
  %2290 = vmatprep.subr.mxu0 0.0
  %2291 = vmatpush1.msra.mxu0 0.0
  %2292 = vmatprep.subr.mxu0 0.0
  %2293 = vmatpush1.msra.mxu0 0.0
  %2294 = vmatprep.subr.mxu0 0.0
  %2295 = vmatpush1.msra.mxu0 0.0
  %2296 = vmatprep.subr.mxu0 0.0
  %2297 = vmatpush1.msra.mxu0 0.0
  %2298 = vmatprep.subr.mxu0 0.0
  %2299 = vmatpush1.msra.mxu0 0.0
  %2300 = vmatprep.subr.mxu0 0.0
  %2301 = vmatpush1.msra.mxu0 0.0
  %2302 = vmatprep.subr.mxu0 0.0
  %2303 = vmatpush1.msra.mxu0 0.0
  %2304 = vmatprep.subr.mxu0 0.0
  %2305 = vmatpush1.msra.mxu0 0.0
  %2306 = vmatprep.subr.mxu0 0.0
  %2307 = vmatpush1.msra.mxu0 0.0
  %2308 = vmatprep.mubr.f32.mxu0 %v2171
  %2309 = vmatmul.mubr.f32.gmra.mrb[0].mxu0 %v2145
  %v2310 = vpop.f32.mrb[0].mxu0
  %v2311 = vadd.f32 %v2240, %v2310
  %v2312 = vpop.f32.mrb[0].mxu0
  %v2313 = vadd.f32 %v2242, %v2312
  %2314 = vdwg.mxu0
  %2315 = vmatprep.subr.mxu0 %v1619
  %2316 = vmatpush1.msra.mxu0 %v1618
  %2317 = vmatprep.subr.mxu0 %v1623
  %2318 = vmatpush1.msra.mxu0 %v1622
  %2319 = vmatprep.subr.mxu0 %v1627
  %2320 = vmatpush1.msra.mxu0 %v1626
  %2321 = vmatprep.subr.mxu0 %v1631
  %2322 = vmatpush1.msra.mxu0 %v1630
  %2323 = vmatprep.subr.mxu0 %v1635
  %2324 = vmatpush1.msra.mxu0 %v1634
  %2325 = vmatprep.subr.mxu0 %v1639
  %2326 = vmatpush1.msra.mxu0 %v1638
  %2327 = vmatprep.subr.mxu0 %v1643
  %2328 = vmatpush1.msra.mxu0 %v1642
  %2329 = vmatprep.subr.mxu0 %v1647
  %2330 = vmatpush1.msra.mxu0 %v1646
  %2331 = vmatprep.subr.mxu0 %v1651
  %2332 = vmatpush1.msra.mxu0 %v1650
  %2333 = vmatprep.subr.mxu0 %v1655
  %2334 = vmatpush1.msra.mxu0 %v1654
  %2335 = vmatprep.subr.mxu0 %v1659
  %2336 = vmatpush1.msra.mxu0 %v1658
  %2337 = vmatprep.subr.mxu0 %v1663
  %2338 = vmatpush1.msra.mxu0 %v1662
  %2339 = vmatprep.subr.mxu0 %v1667
  %2340 = vmatpush1.msra.mxu0 %v1666
  %2341 = vmatprep.subr.mxu0 %v1671
  %2342 = vmatpush1.msra.mxu0 %v1670
  %2343 = vmatprep.subr.mxu0 %v1675
  %2344 = vmatpush1.msra.mxu0 %v1674
  %2345 = vmatprep.subr.mxu0 %v1679
  %2346 = vmatpush1.msra.mxu0 %v1678
  %2347 = vmatprep.subr.mxu0 %v1683
  %2348 = vmatpush1.msra.mxu0 %v1682
  %2349 = vmatprep.subr.mxu0 %v1687
  %2350 = vmatpush1.msra.mxu0 %v1686
  %2351 = vmatprep.subr.mxu0 %v1691
  %2352 = vmatpush1.msra.mxu0 %v1690
  %2353 = vmatprep.subr.mxu0 %v1695
  %2354 = vmatpush1.msra.mxu0 %v1694
  %2355 = vmatprep.subr.mxu0 %v1699
  %2356 = vmatpush1.msra.mxu0 %v1698
  %2357 = vmatprep.subr.mxu0 %v1703
  %2358 = vmatpush1.msra.mxu0 %v1702
  %2359 = vmatprep.subr.mxu0 %v1707
  %2360 = vmatpush1.msra.mxu0 %v1706
  %2361 = vmatprep.subr.mxu0 %v1711
  %2362 = vmatpush1.msra.mxu0 %v1710
  %2363 = vmatprep.subr.mxu0 %v1715
  %2364 = vmatpush1.msra.mxu0 %v1714
  %2365 = vmatprep.subr.mxu0 %v1719
  %2366 = vmatpush1.msra.mxu0 %v1718
  %2367 = vmatprep.subr.mxu0 %v1723
  %2368 = vmatpush1.msra.mxu0 %v1722
  %2369 = vmatprep.subr.mxu0 %v1727
  %2370 = vmatpush1.msra.mxu0 %v1726
  %2371 = vmatprep.subr.mxu0 %v1731
  %2372 = vmatpush1.msra.mxu0 %v1730
  %2373 = vmatprep.subr.mxu0 %v1735
  %2374 = vmatpush1.msra.mxu0 %v1734
  %2375 = vmatprep.subr.mxu0 %v1739
  %2376 = vmatpush1.msra.mxu0 %v1738
  %2377 = vmatprep.subr.mxu0 %v1743
  %2378 = vmatpush1.msra.mxu0 %v1742
  %2379 = vmatprep.mubr.f32.mxu0 %v2144
  %2380 = vmatmul.mubr.f32.gmra.mrb[0].mxu0 %v2143
  %v2381 = vpop.f32.mrb[0].mxu0
  %v2382 = vadd.f32 %v2161, %v2381
  %v2383 = vpop.f32.mrb[0].mxu0
  %v2384 = vadd.f32 %v2165, %v2383
  %2385 = vdwg.mxu0
  %2386 = vmatprep.subr.mxu0 %v1747
  %2387 = vmatpush1.msra.mxu0 %v1746
  %2388 = vmatprep.subr.mxu0 %v1751
  %2389 = vmatpush1.msra.mxu0 %v1750
  %2390 = vmatprep.subr.mxu0 %v1755
  %2391 = vmatpush1.msra.mxu0 %v1754
  %2392 = vmatprep.subr.mxu0 %v1759
  %2393 = vmatpush1.msra.mxu0 %v1758
  %2394 = vmatprep.subr.mxu0 %v1763
  %2395 = vmatpush1.msra.mxu0 %v1762
  %2396 = vmatprep.subr.mxu0 %v1767
  %2397 = vmatpush1.msra.mxu0 %v1766
  %2398 = vmatprep.subr.mxu0 %v1771
  %2399 = vmatpush1.msra.mxu0 %v1770
  %2400 = vmatprep.subr.mxu0 %v1775
  %2401 = vmatpush1.msra.mxu0 %v1774
  %2402 = vmatprep.subr.mxu0 %v1779
  %2403 = vmatpush1.msra.mxu0 %v1778
  %2404 = vmatprep.subr.mxu0 %v1783
  %2405 = vmatpush1.msra.mxu0 %v1782
  %2406 = vmatprep.subr.mxu0 %v1787
  %2407 = vmatpush1.msra.mxu0 %v1786
  %2408 = vmatprep.subr.mxu0 %v1791
  %2409 = vmatpush1.msra.mxu0 %v1790
  %2410 = vmatprep.subr.mxu0 %v1795
  %2411 = vmatpush1.msra.mxu0 %v1794
  %2412 = vmatprep.subr.mxu0 %v1799
  %2413 = vmatpush1.msra.mxu0 %v1798
  %2414 = vmatprep.subr.mxu0 %v1803
  %2415 = vmatpush1.msra.mxu0 %v1802
  %2416 = vmatprep.subr.mxu0 %v1807
  %2417 = vmatpush1.msra.mxu0 %v1806
  %2418 = vmatprep.subr.mxu0 %v1811
  %2419 = vmatpush1.msra.mxu0 %v1810
  %2420 = vmatprep.subr.mxu0 0.0
  %2421 = vmatpush1.msra.mxu0 0.0
  %2422 = vmatprep.subr.mxu0 0.0
  %2423 = vmatpush1.msra.mxu0 0.0
  %2424 = vmatprep.subr.mxu0 0.0
  %2425 = vmatpush1.msra.mxu0 0.0
  %2426 = vmatprep.subr.mxu0 0.0
  %2427 = vmatpush1.msra.mxu0 0.0
  %2428 = vmatprep.subr.mxu0 0.0
  %2429 = vmatpush1.msra.mxu0 0.0
  %2430 = vmatprep.subr.mxu0 0.0
  %2431 = vmatpush1.msra.mxu0 0.0
  %2432 = vmatprep.subr.mxu0 0.0
  %2433 = vmatpush1.msra.mxu0 0.0
  %2434 = vmatprep.subr.mxu0 0.0
  %2435 = vmatpush1.msra.mxu0 0.0
  %2436 = vmatprep.subr.mxu0 0.0
  %2437 = vmatpush1.msra.mxu0 0.0
  %2438 = vmatprep.subr.mxu0 0.0
  %2439 = vmatpush1.msra.mxu0 0.0
  %2440 = vmatprep.subr.mxu0 0.0
  %2441 = vmatpush1.msra.mxu0 0.0
  %2442 = vmatprep.subr.mxu0 0.0
  %2443 = vmatpush1.msra.mxu0 0.0
  %2444 = vmatprep.subr.mxu0 0.0
  %2445 = vmatpush1.msra.mxu0 0.0
  %2446 = vmatprep.subr.mxu0 0.0
  %2447 = vmatpush1.msra.mxu0 0.0
  %2448 = vmatprep.subr.mxu0 0.0
  %2449 = vmatpush1.msra.mxu0 0.0
  %2450 = vmatprep.mubr.f32.mxu0 %v2171
  %2451 = vmatmul.mubr.f32.gmra.mrb[0].mxu0 %v2145
  %v2452 = vpop.f32.mrb[0].mxu0
  %v2453 = vadd.f32 %v2382, %v2452
  %v2454 = vpop.f32.mrb[0].mxu0
  %v2455 = vadd.f32 %v2384, %v2454
  %2456 = vdwg.mxu0
  %v2457 = vld [vmem:[%s9 + $0x40] sm:$0xff]
  %v2458 = vld [vmem:[%s9 + $0x48] sm:$0xff]
  %v2459 = vld [vmem:[%s9 + $0x50] sm:$0xff]
  %v2460 = vld [vmem:[%s9 + $0x58] sm:$0xff]
  %s2461 = scalar_lea.vmem %s9, 4
  %v2462 = vld [vmem:[%s2461] ss:$8 sm:$0xf]
  %v2464 = vlaneseq
  %v2465 = vshrl.u32 %v2464, 7
  %v2466 = vsub.s32 0, %v2465
  %v2467 = vrot.slane %v2462, %v2466
  %v2468 = vlaneseq
  %v2469 = vshrl.u32 %v2468, 7
  %v2470 = vsub.s32 1, %v2469
  %v2471 = vrot.slane %v2462, %v2470
  %v2472 = vlaneseq
  %v2473 = vshrl.u32 %v2472, 7
  %v2474 = vsub.s32 2, %v2473
  %v2475 = vrot.slane %v2462, %v2474
  %v2476 = vlaneseq
  %v2477 = vshrl.u32 %v2476, 7
  %v2478 = vsub.s32 3, %v2477
  %v2479 = vrot.slane %v2462, %v2478
  %v2485 = vsel %vm1181, %v1417, 0
  %2487 = vmatprep.subr.mxu0 %v2458
  %2488 = vmatpush1.msra.mxu0 %v2457
  %2489 = vmatprep.subr.mxu0 0.0
  %2490 = vmatpush1.msra.mxu0 0.0
  %2491 = vmatprep.subr.mxu0 0.0
  %2492 = vmatpush1.msra.mxu0 0.0
  %2493 = vmatprep.subr.mxu0 0.0
  %2494 = vmatpush1.msra.mxu0 0.0
  %2495 = vmatprep.subr.mxu0 0.0
  %2496 = vmatpush1.msra.mxu0 0.0
  %2497 = vmatprep.subr.mxu0 0.0
  %2498 = vmatpush1.msra.mxu0 0.0
  %2499 = vmatprep.subr.mxu0 0.0
  %2500 = vmatpush1.msra.mxu0 0.0
  %2501 = vmatprep.subr.mxu0 0.0
  %2502 = vmatpush1.msra.mxu0 0.0
  %2503 = vmatprep.subr.mxu0 0.0
  %2504 = vmatpush1.msra.mxu0 0.0
  %2505 = vmatprep.subr.mxu0 0.0
  %2506 = vmatpush1.msra.mxu0 0.0
  %2507 = vmatprep.subr.mxu0 0.0
  %2508 = vmatpush1.msra.mxu0 0.0
  %2509 = vmatprep.subr.mxu0 0.0
  %2510 = vmatpush1.msra.mxu0 0.0
  %2511 = vmatprep.subr.mxu0 0.0
  %2512 = vmatpush1.msra.mxu0 0.0
  %2513 = vmatprep.subr.mxu0 0.0
  %2514 = vmatpush1.msra.mxu0 0.0
  %2515 = vmatprep.subr.mxu0 0.0
  %2516 = vmatpush1.msra.mxu0 0.0
  %2517 = vmatprep.subr.mxu0 0.0
  %2518 = vmatpush1.msra.mxu0 0.0
  %2519 = vmatprep.subr.mxu0 0.0
  %2520 = vmatpush1.msra.mxu0 0.0
  %2521 = vmatprep.subr.mxu0 0.0
  %2522 = vmatpush1.msra.mxu0 0.0
  %2523 = vmatprep.subr.mxu0 0.0
  %2524 = vmatpush1.msra.mxu0 0.0
  %2525 = vmatprep.subr.mxu0 0.0
  %2526 = vmatpush1.msra.mxu0 0.0
  %2527 = vmatprep.subr.mxu0 0.0
  %2528 = vmatpush1.msra.mxu0 0.0
  %2529 = vmatprep.subr.mxu0 0.0
  %2530 = vmatpush1.msra.mxu0 0.0
  %2531 = vmatprep.subr.mxu0 0.0
  %2532 = vmatpush1.msra.mxu0 0.0
  %2533 = vmatprep.subr.mxu0 0.0
  %2534 = vmatpush1.msra.mxu0 0.0
  %2535 = vmatprep.subr.mxu0 0.0
  %2536 = vmatpush1.msra.mxu0 0.0
  %2537 = vmatprep.subr.mxu0 0.0
  %2538 = vmatpush1.msra.mxu0 0.0
  %2539 = vmatprep.subr.mxu0 0.0
  %2540 = vmatpush1.msra.mxu0 0.0
  %2541 = vmatprep.subr.mxu0 0.0
  %2542 = vmatpush1.msra.mxu0 0.0
  %2543 = vmatprep.subr.mxu0 0.0
  %2544 = vmatpush1.msra.mxu0 0.0
  %2545 = vmatprep.subr.mxu0 0.0
  %2546 = vmatpush1.msra.mxu0 0.0
  %2547 = vmatprep.subr.mxu0 0.0
  %2548 = vmatpush1.msra.mxu0 0.0
  %2549 = vmatprep.subr.mxu0 0.0
  %2550 = vmatpush1.msra.mxu0 0.0
  %2551 = vmatprep.mubr.f32.mxu0 0.0
  %2552 = vmatmul.mubr.f32.gmra.mrb[0].mxu0 %v2485
  %v2553 = vpop.f32.mrb[0].mxu0
  %v2554 = vadd.f32 %v2467, %v2553
  %v2555 = vpop.f32.mrb[0].mxu0
  %v2556 = vadd.f32 %v2471, %v2555
  %2557 = vdwg.mxu0
  %2558 = vmatprep.subr.mxu0 %v2460
  %2559 = vmatpush1.msra.mxu0 %v2459
  %2560 = vmatprep.subr.mxu0 0.0
  %2561 = vmatpush1.msra.mxu0 0.0
  %2562 = vmatprep.subr.mxu0 0.0
  %2563 = vmatpush1.msra.mxu0 0.0
  %2564 = vmatprep.subr.mxu0 0.0
  %2565 = vmatpush1.msra.mxu0 0.0
  %2566 = vmatprep.subr.mxu0 0.0
  %2567 = vmatpush1.msra.mxu0 0.0
  %2568 = vmatprep.subr.mxu0 0.0
  %2569 = vmatpush1.msra.mxu0 0.0
  %2570 = vmatprep.subr.mxu0 0.0
  %2571 = vmatpush1.msra.mxu0 0.0
  %2572 = vmatprep.subr.mxu0 0.0
  %2573 = vmatpush1.msra.mxu0 0.0
  %2574 = vmatprep.subr.mxu0 0.0
  %2575 = vmatpush1.msra.mxu0 0.0
  %2576 = vmatprep.subr.mxu0 0.0
  %2577 = vmatpush1.msra.mxu0 0.0
  %2578 = vmatprep.subr.mxu0 0.0
  %2579 = vmatpush1.msra.mxu0 0.0
  %2580 = vmatprep.subr.mxu0 0.0
  %2581 = vmatpush1.msra.mxu0 0.0
  %2582 = vmatprep.subr.mxu0 0.0
  %2583 = vmatpush1.msra.mxu0 0.0
  %2584 = vmatprep.subr.mxu0 0.0
  %2585 = vmatpush1.msra.mxu0 0.0
  %2586 = vmatprep.subr.mxu0 0.0
  %2587 = vmatpush1.msra.mxu0 0.0
  %2588 = vmatprep.subr.mxu0 0.0
  %2589 = vmatpush1.msra.mxu0 0.0
  %2590 = vmatprep.subr.mxu0 0.0
  %2591 = vmatpush1.msra.mxu0 0.0
  %2592 = vmatprep.subr.mxu0 0.0
  %2593 = vmatpush1.msra.mxu0 0.0
  %2594 = vmatprep.subr.mxu0 0.0
  %2595 = vmatpush1.msra.mxu0 0.0
  %2596 = vmatprep.subr.mxu0 0.0
  %2597 = vmatpush1.msra.mxu0 0.0
  %2598 = vmatprep.subr.mxu0 0.0
  %2599 = vmatpush1.msra.mxu0 0.0
  %2600 = vmatprep.subr.mxu0 0.0
  %2601 = vmatpush1.msra.mxu0 0.0
  %2602 = vmatprep.subr.mxu0 0.0
  %2603 = vmatpush1.msra.mxu0 0.0
  %2604 = vmatprep.subr.mxu0 0.0
  %2605 = vmatpush1.msra.mxu0 0.0
  %2606 = vmatprep.subr.mxu0 0.0
  %2607 = vmatpush1.msra.mxu0 0.0
  %2608 = vmatprep.subr.mxu0 0.0
  %2609 = vmatpush1.msra.mxu0 0.0
  %2610 = vmatprep.subr.mxu0 0.0
  %2611 = vmatpush1.msra.mxu0 0.0
  %2612 = vmatprep.subr.mxu0 0.0
  %2613 = vmatpush1.msra.mxu0 0.0
  %2614 = vmatprep.subr.mxu0 0.0
  %2615 = vmatpush1.msra.mxu0 0.0
  %2616 = vmatprep.subr.mxu0 0.0
  %2617 = vmatpush1.msra.mxu0 0.0
  %2618 = vmatprep.subr.mxu0 0.0
  %2619 = vmatpush1.msra.mxu0 0.0
  %2620 = vmatprep.subr.mxu0 0.0
  %2621 = vmatpush1.msra.mxu0 0.0
  %2622 = vmatprep.mubr.f32.mxu0 0.0
  %2623 = vmatmul.mubr.f32.gmra.mrb[0].mxu0 %v2485
  %v2624 = vpop.f32.mrb[0].mxu0
  %v2625 = vadd.f32 %v2475, %v2624
  %v2626 = vpop.f32.mrb[0].mxu0
  %v2627 = vadd.f32 %v2479, %v2626
  %2628 = vdwg.mxu0
  %v2629 = vxor.u32 %v2554, 2147483648
  %v2630 = vxor.u32 %v2556, 2147483648
  %v2631 = vxor.u32 %v2625, 2147483648
  %v2632 = vxor.u32 %v2627, 2147483648
  %v2633 = vmul.f32 %v2629, 1.442695
  %v2634 = vpow.pop %v2633
  %v2635 = vmul.f32 %v2630, 1.442695
  %v2636 = vpow.pop %v2635
  %v2637 = vmul.f32 %v2631, 1.442695
  %v2638 = vpow.pop %v2637
  %v2639 = vmul.f32 %v2632, 1.442695
  %v2640 = vpow.pop %v2639
  %v2641 = vadd.f32 %v2634, 1.0
  %v2642 = vadd.f32 %v2636, 1.0
  %v2643 = vadd.f32 %v2638, 1.0
  %v2644 = vadd.f32 %v2640, 1.0
  %v2645 = vrcp.pop %v2641
  %v2646 = vmul.f32 1.0, %v2645
  %v2647 = vrcp.pop %v2642
  %v2648 = vmul.f32 1.0, %v2647
  %v2649 = vrcp.pop %v2643
  %v2650 = vmul.f32 1.0, %v2649
  %v2651 = vrcp.pop %v2644
  %v2652 = vmul.f32 1.0, %v2651
  %v2653 = vmul.f32 %v2311, %v2646
  %v2654 = vmul.f32 %v2313, %v2648
  %v2655 = vmul.f32 %v2453, %v2650
  %v2656 = vmul.f32 %v2455, %v2652
  %v2657 = vadd.f32 %v740, %v2653
  %v2658 = vadd.f32 %v742, %v2654
  %v2659 = vadd.f32 %v1024, %v2655
  %v2660 = vadd.f32 %v1026, %v2656
  %v2661 = vxor.u32 %v2657, 2147483648
  %v2662 = vxor.u32 %v2658, 2147483648
  %v2663 = vxor.u32 %v2659, 2147483648
  %v2664 = vxor.u32 %v2660, 2147483648
  %v2665 = vmul.f32 %v2661, 1.442695
  %v2666 = vpow.pop %v2665
  %v2667 = vmul.f32 %v2662, 1.442695
  %v2668 = vpow.pop %v2667
  %v2669 = vmul.f32 %v2663, 1.442695
  %v2670 = vpow.pop %v2669
  %v2671 = vmul.f32 %v2664, 1.442695
  %v2672 = vpow.pop %v2671
  %v2673 = vadd.f32 %v2666, 1.0
  %v2674 = vadd.f32 %v2668, 1.0
  %v2675 = vadd.f32 %v2670, 1.0
  %v2676 = vadd.f32 %v2672, 1.0
  %v2677 = vrcp.pop %v2673
  %v2678 = vmul.f32 1.0, %v2677
  %v2679 = vrcp.pop %v2674
  %v2680 = vmul.f32 1.0, %v2679
  %v2681 = vrcp.pop %v2675
  %v2682 = vmul.f32 1.0, %v2681
  %v2683 = vrcp.pop %v2676
  %v2684 = vmul.f32 1.0, %v2683
  %v2685 = vmul.f32 %v2657, %v2678
  %v2686 = vmul.f32 %v2658, %v2680
  %v2687 = vmul.f32 %v2659, %v2682
  %v2688 = vmul.f32 %v2660, %v2684
  %v2690 = vsel %vm1181, %v2688, 0
  %2692 = vmatprep.subr.mxu0 %v1071
  %2693 = vmatpush1.msra.mxu0 %v1070
  %2694 = vmatprep.subr.mxu0 %v1073
  %2695 = vmatpush1.msra.mxu0 %v1072
  %2696 = vmatprep.subr.mxu0 %v1075
  %2697 = vmatpush1.msra.mxu0 %v1074
  %2698 = vmatprep.subr.mxu0 %v1077
  %2699 = vmatpush1.msra.mxu0 %v1076
  %2700 = vmatprep.subr.mxu0 %v1079
  %2701 = vmatpush1.msra.mxu0 %v1078
  %2702 = vmatprep.subr.mxu0 %v1081
  %2703 = vmatpush1.msra.mxu0 %v1080
  %2704 = vmatprep.subr.mxu0 %v1083
  %2705 = vmatpush1.msra.mxu0 %v1082
  %2706 = vmatprep.subr.mxu0 %v1085
  %2707 = vmatpush1.msra.mxu0 %v1084
  %2708 = vmatprep.subr.mxu0 %v1087
  %2709 = vmatpush1.msra.mxu0 %v1086
  %2710 = vmatprep.subr.mxu0 %v1089
  %2711 = vmatpush1.msra.mxu0 %v1088
  %2712 = vmatprep.subr.mxu0 %v1091
  %2713 = vmatpush1.msra.mxu0 %v1090
  %2714 = vmatprep.subr.mxu0 %v1093
  %2715 = vmatpush1.msra.mxu0 %v1092
  %2716 = vmatprep.subr.mxu0 %v1095
  %2717 = vmatpush1.msra.mxu0 %v1094
  %2718 = vmatprep.subr.mxu0 %v1097
  %2719 = vmatpush1.msra.mxu0 %v1096
  %2720 = vmatprep.subr.mxu0 %v1099
  %2721 = vmatpush1.msra.mxu0 %v1098
  %2722 = vmatprep.subr.mxu0 %v1101
  %2723 = vmatpush1.msra.mxu0 %v1100
  %2724 = vmatprep.subr.mxu0 %v1103
  %2725 = vmatpush1.msra.mxu0 %v1102
  %2726 = vmatprep.subr.mxu0 %v1105
  %2727 = vmatpush1.msra.mxu0 %v1104
  %2728 = vmatprep.subr.mxu0 %v1107
  %2729 = vmatpush1.msra.mxu0 %v1106
  %2730 = vmatprep.subr.mxu0 %v1109
  %2731 = vmatpush1.msra.mxu0 %v1108
  %2732 = vmatprep.subr.mxu0 %v1111
  %2733 = vmatpush1.msra.mxu0 %v1110
  %2734 = vmatprep.subr.mxu0 %v1113
  %2735 = vmatpush1.msra.mxu0 %v1112
  %2736 = vmatprep.subr.mxu0 %v1115
  %2737 = vmatpush1.msra.mxu0 %v1114
  %2738 = vmatprep.subr.mxu0 %v1117
  %2739 = vmatpush1.msra.mxu0 %v1116
  %2740 = vmatprep.subr.mxu0 %v1119
  %2741 = vmatpush1.msra.mxu0 %v1118
  %2742 = vmatprep.subr.mxu0 %v1121
  %2743 = vmatpush1.msra.mxu0 %v1120
  %2744 = vmatprep.subr.mxu0 %v1123
  %2745 = vmatpush1.msra.mxu0 %v1122
  %2746 = vmatprep.subr.mxu0 %v1125
  %2747 = vmatpush1.msra.mxu0 %v1124
  %2748 = vmatprep.subr.mxu0 %v1127
  %2749 = vmatpush1.msra.mxu0 %v1126
  %2750 = vmatprep.subr.mxu0 %v1129
  %2751 = vmatpush1.msra.mxu0 %v1128
  %2752 = vmatprep.subr.mxu0 %v1131
  %2753 = vmatpush1.msra.mxu0 %v1130
  %2754 = vmatprep.subr.mxu0 %v1133
  %2755 = vmatpush1.msra.mxu0 %v1132
  %2756 = vmatprep.mubr.f32.mxu0 %v2686
  %2757 = vmatmul.mubr.f32.gmra.mrb[0].mxu0 %v2685
  %v2758 = vpop.f32.mrb[0].mxu0
  %v2759 = vadd.f32 %v1174, %v2758
  %v2760 = vpop.f32.mrb[0].mxu0
  %v2761 = vadd.f32 %v1178, %v2760
  %2762 = vdwg.mxu0
  %2763 = vmatprep.subr.mxu0 %v1135
  %2764 = vmatpush1.msra.mxu0 %v1134
  %2765 = vmatprep.subr.mxu0 %v1137
  %2766 = vmatpush1.msra.mxu0 %v1136
  %2767 = vmatprep.subr.mxu0 %v1139
  %2768 = vmatpush1.msra.mxu0 %v1138
  %2769 = vmatprep.subr.mxu0 %v1141
  %2770 = vmatpush1.msra.mxu0 %v1140
  %2771 = vmatprep.subr.mxu0 %v1143
  %2772 = vmatpush1.msra.mxu0 %v1142
  %2773 = vmatprep.subr.mxu0 %v1145
  %2774 = vmatpush1.msra.mxu0 %v1144
  %2775 = vmatprep.subr.mxu0 %v1147
  %2776 = vmatpush1.msra.mxu0 %v1146
  %2777 = vmatprep.subr.mxu0 %v1149
  %2778 = vmatpush1.msra.mxu0 %v1148
  %2779 = vmatprep.subr.mxu0 %v1151
  %2780 = vmatpush1.msra.mxu0 %v1150
  %2781 = vmatprep.subr.mxu0 %v1153
  %2782 = vmatpush1.msra.mxu0 %v1152
  %2783 = vmatprep.subr.mxu0 %v1155
  %2784 = vmatpush1.msra.mxu0 %v1154
  %2785 = vmatprep.subr.mxu0 %v1157
  %2786 = vmatpush1.msra.mxu0 %v1156
  %2787 = vmatprep.subr.mxu0 %v1159
  %2788 = vmatpush1.msra.mxu0 %v1158
  %2789 = vmatprep.subr.mxu0 %v1161
  %2790 = vmatpush1.msra.mxu0 %v1160
  %2791 = vmatprep.subr.mxu0 %v1163
  %2792 = vmatpush1.msra.mxu0 %v1162
  %2793 = vmatprep.subr.mxu0 %v1165
  %2794 = vmatpush1.msra.mxu0 %v1164
  %2795 = vmatprep.subr.mxu0 %v1167
  %2796 = vmatpush1.msra.mxu0 %v1166
  %2797 = vmatprep.subr.mxu0 0.0
  %2798 = vmatpush1.msra.mxu0 0.0
  %2799 = vmatprep.subr.mxu0 0.0
  %2800 = vmatpush1.msra.mxu0 0.0
  %2801 = vmatprep.subr.mxu0 0.0
  %2802 = vmatpush1.msra.mxu0 0.0
  %2803 = vmatprep.subr.mxu0 0.0
  %2804 = vmatpush1.msra.mxu0 0.0
  %2805 = vmatprep.subr.mxu0 0.0
  %2806 = vmatpush1.msra.mxu0 0.0
  %2807 = vmatprep.subr.mxu0 0.0
  %2808 = vmatpush1.msra.mxu0 0.0
  %2809 = vmatprep.subr.mxu0 0.0
  %2810 = vmatpush1.msra.mxu0 0.0
  %2811 = vmatprep.subr.mxu0 0.0
  %2812 = vmatpush1.msra.mxu0 0.0
  %2813 = vmatprep.subr.mxu0 0.0
  %2814 = vmatpush1.msra.mxu0 0.0
  %2815 = vmatprep.subr.mxu0 0.0
  %2816 = vmatpush1.msra.mxu0 0.0
  %2817 = vmatprep.subr.mxu0 0.0
  %2818 = vmatpush1.msra.mxu0 0.0
  %2819 = vmatprep.subr.mxu0 0.0
  %2820 = vmatpush1.msra.mxu0 0.0
  %2821 = vmatprep.subr.mxu0 0.0
  %2822 = vmatpush1.msra.mxu0 0.0
  %2823 = vmatprep.subr.mxu0 0.0
  %2824 = vmatpush1.msra.mxu0 0.0
  %2825 = vmatprep.subr.mxu0 0.0
  %2826 = vmatpush1.msra.mxu0 0.0
  %2827 = vmatprep.mubr.f32.mxu0 %v2690
  %2828 = vmatmul.mubr.f32.gmra.mrb[0].mxu0 %v2687
  %v2829 = vpop.f32.mrb[0].mxu0
  %v2830 = vadd.f32 %v2759, %v2829
  %v2831 = vpop.f32.mrb[0].mxu0
  %v2832 = vadd.f32 %v2761, %v2831
  %2833 = vdwg.mxu0
  %v2834 = vxor.u32 %v2830, 2147483648
  %v2835 = vxor.u32 %v2832, 2147483648
  %v2836 = vmul.f32 %v2834, 1.442695
  %v2837 = vpow.pop %v2836
  %v2838 = vmul.f32 %v2835, 1.442695
  %v2839 = vpow.pop %v2838
  %v2840 = vadd.f32 %v2837, 1.0
  %v2841 = vadd.f32 %v2839, 1.0
  %v2842 = vrcp.pop %v2840
  %v2843 = vmul.f32 1.0, %v2842
  %v2844 = vrcp.pop %v2841
  %v2845 = vmul.f32 1.0, %v2844
  %v2846 = vmul.f32 %v2830, %v2843
  %v2847 = vmul.f32 %v2832, %v2845
  %v2849 = vsel %vm1342, %v2847, 0
  %2851 = vmatprep.subr.mxu0 0.0
  %2852 = vmatpush1.msra.mxu0 %v1028
  %2853 = vmatprep.subr.mxu0 0.0
  %2854 = vmatpush1.msra.mxu0 %v1029
  %2855 = vmatprep.subr.mxu0 0.0
  %2856 = vmatpush1.msra.mxu0 %v1030
  %2857 = vmatprep.subr.mxu0 0.0
  %2858 = vmatpush1.msra.mxu0 %v1031
  %2859 = vmatprep.subr.mxu0 0.0
  %2860 = vmatpush1.msra.mxu0 %v1032
  %2861 = vmatprep.subr.mxu0 0.0
  %2862 = vmatpush1.msra.mxu0 %v1033
  %2863 = vmatprep.subr.mxu0 0.0
  %2864 = vmatpush1.msra.mxu0 %v1034
  %2865 = vmatprep.subr.mxu0 0.0
  %2866 = vmatpush1.msra.mxu0 %v1035
  %2867 = vmatprep.subr.mxu0 0.0
  %2868 = vmatpush1.msra.mxu0 %v1036
  %2869 = vmatprep.subr.mxu0 0.0
  %2870 = vmatpush1.msra.mxu0 %v1037
  %2871 = vmatprep.subr.mxu0 0.0
  %2872 = vmatpush1.msra.mxu0 %v1038
  %2873 = vmatprep.subr.mxu0 0.0
  %2874 = vmatpush1.msra.mxu0 %v1039
  %2875 = vmatprep.subr.mxu0 0.0
  %2876 = vmatpush1.msra.mxu0 %v1040
  %2877 = vmatprep.subr.mxu0 0.0
  %2878 = vmatpush1.msra.mxu0 %v1041
  %2879 = vmatprep.subr.mxu0 0.0
  %2880 = vmatpush1.msra.mxu0 %v1042
  %2881 = vmatprep.subr.mxu0 0.0
  %2882 = vmatpush1.msra.mxu0 %v1043
  %2883 = vmatprep.subr.mxu0 0.0
  %2884 = vmatpush1.msra.mxu0 %v1044
  %2885 = vmatprep.subr.mxu0 0.0
  %2886 = vmatpush1.msra.mxu0 %v1045
  %2887 = vmatprep.subr.mxu0 0.0
  %2888 = vmatpush1.msra.mxu0 %v1046
  %2889 = vmatprep.subr.mxu0 0.0
  %2890 = vmatpush1.msra.mxu0 %v1047
  %2891 = vmatprep.subr.mxu0 0.0
  %2892 = vmatpush1.msra.mxu0 %v1048
  %2893 = vmatprep.subr.mxu0 0.0
  %2894 = vmatpush1.msra.mxu0 %v1049
  %2895 = vmatprep.subr.mxu0 0.0
  %2896 = vmatpush1.msra.mxu0 %v1050
  %2897 = vmatprep.subr.mxu0 0.0
  %2898 = vmatpush1.msra.mxu0 %v1051
  %2899 = vmatprep.subr.mxu0 0.0
  %2900 = vmatpush1.msra.mxu0 %v1348
  %2901 = vmatprep.subr.mxu0 0.0
  %2902 = vmatpush1.msra.mxu0 0.0
  %2903 = vmatprep.subr.mxu0 0.0
  %2904 = vmatpush1.msra.mxu0 0.0
  %2905 = vmatprep.subr.mxu0 0.0
  %2906 = vmatpush1.msra.mxu0 0.0
  %2907 = vmatprep.subr.mxu0 0.0
  %2908 = vmatpush1.msra.mxu0 0.0
  %2909 = vmatprep.subr.mxu0 0.0
  %2910 = vmatpush1.msra.mxu0 0.0
  %2911 = vmatprep.subr.mxu0 0.0
  %2912 = vmatpush1.msra.mxu0 0.0
  %2913 = vmatprep.subr.mxu0 0.0
  %2914 = vmatpush1.msra.mxu0 0.0
  %2915 = vmatprep.mubr.f32.mxu0 %v2849
  %2916 = vmatmul.mubr.f32.gmra.mrb[0].mxu0 %v2846
  %v2917 = vpop.f32.mrb[0].mxu0
  %v2918 = vadd.f32 %v1341, %v2917
  %v2919 = vpop.f32.mrb[0].mxu0
  %2920 = vdwg.mxu0
  %v2921 = vld [vmem:[%s5] sm:$0xff]
  %v2922 = vld [vmem:[%s5 + $0x8] sm:$0xff]
  %v2923 = vld [vmem:[%s5 + $0x10] sm:$0xff]
  %v2924 = vld [vmem:[%s5 + $0x18] sm:$0xff]
  %v2925 = vld [vmem:[%s5 + $0x20] sm:$0xff]
  %v2926 = vld [vmem:[%s5 + $0x28] sm:$0xff]
  %v2927 = vld [vmem:[%s5 + $0x30] sm:$0xff]
  %v2928 = vld [vmem:[%s5 + $0x38] sm:$0xff]
  %v2929 = vld [vmem:[%s5 + $0x40] sm:$0xff]
  %v2930 = vld [vmem:[%s5 + $0x48] sm:$0xff]
  %v2931 = vld [vmem:[%s5 + $0x50] sm:$0xff]
  %v2932 = vld [vmem:[%s5 + $0x58] sm:$0xff]
  %v2933 = vld [vmem:[%s5 + $0x60] sm:$0xff]
  %v2934 = vld [vmem:[%s5 + $0x68] sm:$0xff]
  %v2935 = vld [vmem:[%s5 + $0x70] sm:$0xff]
  %v2936 = vld [vmem:[%s5 + $0x78] sm:$0xff]
  %v2937 = vld [vmem:[%s5 + $0x80] sm:$0xff]
  %v2938 = vld [vmem:[%s5 + $0x88] sm:$0xff]
  %v2939 = vld [vmem:[%s5 + $0x90] sm:$0xff]
  %v2940 = vld [vmem:[%s5 + $0x98] sm:$0xff]
  %v2941 = vld [vmem:[%s5 + $0xa0] sm:$0xff]
  %v2942 = vld [vmem:[%s5 + $0xa8] sm:$0xff]
  %v2943 = vld [vmem:[%s5 + $0xb0] sm:$0xff]
  %v2944 = vld [vmem:[%s5 + $0xb8] sm:$0xff]
  %v2945 = vld [vmem:[%s5 + $0xc0] sm:$0xff]
  %v2946 = vld [vmem:[%s5 + $0xc8] sm:$0xff]
  %v2947 = vld [vmem:[%s5 + $0xd0] sm:$0xff]
  %v2948 = vld [vmem:[%s5 + $0xd8] sm:$0xff]
  %v2949 = vld [vmem:[%s5 + $0xe0] sm:$0xff]
  %v2950 = vld [vmem:[%s5 + $0xe8] sm:$0xff]
  %v2951 = vld [vmem:[%s5 + $0xf0] sm:$0xff]
  %v2952 = vld [vmem:[%s5 + $0xf8] sm:$0xff]
  %v2953 = vld [vmem:[%s5 + $0x100] sm:$0xff]
  %v2954 = vld [vmem:[%s5 + $0x108] sm:$0xff]
  %v2955 = vld [vmem:[%s5 + $0x110] sm:$0xff]
  %v2956 = vld [vmem:[%s5 + $0x118] sm:$0xff]
  %v2957 = vld [vmem:[%s5 + $0x120] sm:$0xff]
  %v2958 = vld [vmem:[%s5 + $0x128] sm:$0xff]
  %v2959 = vld [vmem:[%s5 + $0x130] sm:$0xff]
  %v2960 = vld [vmem:[%s5 + $0x138] sm:$0xff]
  %v2961 = vld [vmem:[%s5 + $0x140] sm:$0xff]
  %v2962 = vld [vmem:[%s5 + $0x148] sm:$0xff]
  %v2963 = vld [vmem:[%s5 + $0x150] sm:$0xff]
  %v2964 = vld [vmem:[%s5 + $0x158] sm:$0xff]
  %v2965 = vld [vmem:[%s5 + $0x160] sm:$0xff]
  %v2966 = vld [vmem:[%s5 + $0x168] sm:$0xff]
  %v2967 = vld [vmem:[%s5 + $0x170] sm:$0xff]
  %v2968 = vld [vmem:[%s5 + $0x178] sm:$0xff]
  %v2969 = vld [vmem:[%s5 + $0x180] sm:$0xff]
  %v2970 = vld [vmem:[%s5 + $0x188] sm:$0xff]
  %v2971 = vld [vmem:[%s5 + $0x190] sm:$0xff]
  %v2972 = vld [vmem:[%s5 + $0x198] sm:$0xff]
  %v2973 = vld [vmem:[%s5 + $0x1a0] sm:$0xff]
  %v2974 = vld [vmem:[%s5 + $0x1a8] sm:$0xff]
  %v2975 = vld [vmem:[%s5 + $0x1b0] sm:$0xff]
  %v2976 = vld [vmem:[%s5 + $0x1b8] sm:$0xff]
  %v2977 = vld [vmem:[%s5 + $0x1c0] sm:$0xff]
  %v2978 = vld [vmem:[%s5 + $0x1c8] sm:$0xff]
  %v2979 = vld [vmem:[%s5 + $0x1d0] sm:$0xff]
  %v2980 = vld [vmem:[%s5 + $0x1d8] sm:$0xff]
  %v2981 = vld [vmem:[%s5 + $0x1e0] sm:$0xff]
  %v2982 = vld [vmem:[%s5 + $0x1e8] sm:$0xff]
  %v2983 = vld [vmem:[%s5 + $0x1f0] sm:$0xff]
  %v2984 = vld [vmem:[%s5 + $0x1f8] sm:$0xff]
  %v2985 = vld [vmem:[%s5 + $0x200] sm:$0xff]
  %v2986 = vld [vmem:[%s5 + $0x208] sm:$0xff]
  %v2987 = vld [vmem:[%s5 + $0x210] sm:$0xff]
  %v2988 = vld [vmem:[%s5 + $0x218] sm:$0xff]
  %v2989 = vld [vmem:[%s5 + $0x220] sm:$0xff]
  %v2990 = vld [vmem:[%s5 + $0x228] sm:$0xff]
  %v2991 = vld [vmem:[%s5 + $0x230] sm:$0xff]
  %v2992 = vld [vmem:[%s5 + $0x238] sm:$0xff]
  %v2993 = vld [vmem:[%s5 + $0x240] sm:$0xff]
  %v2994 = vld [vmem:[%s5 + $0x248] sm:$0xff]
  %v2995 = vld [vmem:[%s5 + $0x250] sm:$0xff]
  %v2996 = vld [vmem:[%s5 + $0x258] sm:$0xff]
  %v2997 = vld [vmem:[%s5 + $0x260] sm:$0xff]
  %v2998 = vld [vmem:[%s5 + $0x268] sm:$0xff]
  %v2999 = vld [vmem:[%s5 + $0x270] sm:$0xff]
  %v3000 = vld [vmem:[%s5 + $0x278] sm:$0xff]
  %v3001 = vld [vmem:[%s5 + $0x280] sm:$0xff]
  %v3002 = vld [vmem:[%s5 + $0x288] sm:$0xff]
  %v3003 = vld [vmem:[%s5 + $0x290] sm:$0xff]
  %v3004 = vld [vmem:[%s5 + $0x298] sm:$0xff]
  %v3005 = vld [vmem:[%s5 + $0x2a0] sm:$0xff]
  %v3006 = vld [vmem:[%s5 + $0x2a8] sm:$0xff]
  %v3007 = vld [vmem:[%s5 + $0x2b0] sm:$0xff]
  %v3008 = vld [vmem:[%s5 + $0x2b8] sm:$0xff]
  %v3009 = vld [vmem:[%s5 + $0x2c0] sm:$0xff]
  %v3010 = vld [vmem:[%s5 + $0x2c8] sm:$0xff]
  %v3011 = vld [vmem:[%s5 + $0x2d0] sm:$0xff]
  %v3012 = vld [vmem:[%s5 + $0x2d8] sm:$0xff]
  %v3013 = vld [vmem:[%s5 + $0x2e0] sm:$0xff]
  %v3014 = vld [vmem:[%s5 + $0x2e8] sm:$0xff]
  %v3015 = vld [vmem:[%s5 + $0x2f0] sm:$0xff]
  %v3016 = vld [vmem:[%s5 + $0x2f8] sm:$0xff]
  %v3017 = vld [vmem:[%s5 + $0x300] sm:$0xff]
  %v3018 = vld [vmem:[%s5 + $0x308] sm:$0xff]
  %v3019 = vld [vmem:[%s5 + $0x310] sm:$0xff]
  %v3020 = vld [vmem:[%s5 + $0x318] sm:$0xff]
  %v3021 = vld [vmem:[%s5 + $0x320] sm:$0xff]
  %v3022 = vld [vmem:[%s5 + $0x328] sm:$0xff]
  %v3023 = vld [vmem:[%s5 + $0x330] sm:$0xff]
  %v3024 = vld [vmem:[%s5 + $0x338] sm:$0xff]
  %v3025 = vld [vmem:[%s5 + $0x340] sm:$0xff]
  %v3026 = vld [vmem:[%s5 + $0x348] sm:$0xff]
  %v3027 = vld [vmem:[%s5 + $0x350] sm:$0xff]
  %v3028 = vld [vmem:[%s5 + $0x358] sm:$0xff]
  %v3029 = vld [vmem:[%s5 + $0x360] sm:$0xff]
  %v3030 = vld [vmem:[%s5 + $0x368] sm:$0xff]
  %v3031 = vld [vmem:[%s5 + $0x370] sm:$0xff]
  %v3032 = vld [vmem:[%s5 + $0x378] sm:$0xff]
  %v3033 = vld [vmem:[%s5 + $0x380] sm:$0xff]
  %v3034 = vld [vmem:[%s5 + $0x388] sm:$0xff]
  %v3035 = vld [vmem:[%s5 + $0x390] sm:$0xff]
  %v3036 = vld [vmem:[%s5 + $0x398] sm:$0xff]
  %v3037 = vld [vmem:[%s5 + $0x3a0] sm:$0xff]
  %v3038 = vld [vmem:[%s5 + $0x3a8] sm:$0xff]
  %v3039 = vld [vmem:[%s5 + $0x3b0] sm:$0xff]
  %v3040 = vld [vmem:[%s5 + $0x3b8] sm:$0xff]
  %v3041 = vld [vmem:[%s5 + $0x3c0] sm:$0xff]
  %v3042 = vld [vmem:[%s5 + $0x3c8] sm:$0xff]
  %v3043 = vld [vmem:[%s5 + $0x3d0] sm:$0xff]
  %v3044 = vld [vmem:[%s5 + $0x3d8] sm:$0xff]
  %v3045 = vld [vmem:[%s5 + $0x3e0] sm:$0xff]
  %v3046 = vld [vmem:[%s5 + $0x3e8] sm:$0xff]
  %v3047 = vld [vmem:[%s5 + $0x3f0] sm:$0xff]
  %v3048 = vld [vmem:[%s5 + $0x3f8] sm:$0xff]
  %v3049 = vld [vmem:[%s5 + $0x400] sm:$0xff]
  %v3050 = vld [vmem:[%s5 + $0x408] sm:$0xff]
  %v3051 = vld [vmem:[%s5 + $0x410] sm:$0xff]
  %v3052 = vld [vmem:[%s5 + $0x418] sm:$0xff]
  %v3053 = vld [vmem:[%s5 + $0x420] sm:$0xff]
  %v3054 = vld [vmem:[%s5 + $0x428] sm:$0xff]
  %v3055 = vld [vmem:[%s5 + $0x430] sm:$0xff]
  %v3056 = vld [vmem:[%s5 + $0x438] sm:$0xff]
  %v3057 = vld [vmem:[%s5 + $0x440] sm:$0xff]
  %v3058 = vld [vmem:[%s5 + $0x448] sm:$0xff]
  %v3059 = vld [vmem:[%s5 + $0x450] sm:$0xff]
  %v3060 = vld [vmem:[%s5 + $0x458] sm:$0xff]
  %v3061 = vld [vmem:[%s5 + $0x460] sm:$0xff]
  %v3062 = vld [vmem:[%s5 + $0x468] sm:$0xff]
  %v3063 = vld [vmem:[%s5 + $0x470] sm:$0xff]
  %v3064 = vld [vmem:[%s5 + $0x478] sm:$0xff]
  %v3065 = vld [vmem:[%s5 + $0x480] sm:$0xff]
  %v3066 = vld [vmem:[%s5 + $0x488] sm:$0xff]
  %v3067 = vld [vmem:[%s5 + $0x490] sm:$0xff]
  %v3068 = vld [vmem:[%s5 + $0x498] sm:$0xff]
  %v3069 = vld [vmem:[%s5 + $0x4a0] sm:$0xff]
  %v3070 = vld [vmem:[%s5 + $0x4a8] sm:$0xff]
  %v3071 = vld [vmem:[%s5 + $0x4b0] sm:$0xff]
  %v3072 = vld [vmem:[%s5 + $0x4b8] sm:$0xff]
  %v3073 = vld [vmem:[%s5 + $0x4c0] sm:$0xff]
  %v3074 = vld [vmem:[%s5 + $0x4c8] sm:$0xff]
  %v3075 = vld [vmem:[%s5 + $0x4d0] sm:$0xff]
  %v3076 = vld [vmem:[%s5 + $0x4d8] sm:$0xff]
  %v3077 = vld [vmem:[%s5 + $0x4e0] sm:$0xff]
  %v3078 = vld [vmem:[%s5 + $0x4e8] sm:$0xff]
  %v3079 = vld [vmem:[%s5 + $0x4f0] sm:$0xff]
  %v3080 = vld [vmem:[%s5 + $0x4f8] sm:$0xff]
  %v3081 = vld [vmem:[%s5 + $0x500] sm:$0xff]
  %v3082 = vld [vmem:[%s5 + $0x508] sm:$0xff]
  %v3083 = vld [vmem:[%s5 + $0x510] sm:$0xff]
  %v3084 = vld [vmem:[%s5 + $0x518] sm:$0xff]
  %v3085 = vld [vmem:[%s5 + $0x520] sm:$0xff]
  %v3086 = vld [vmem:[%s5 + $0x528] sm:$0xff]
  %v3087 = vld [vmem:[%s5 + $0x530] sm:$0xff]
  %v3088 = vld [vmem:[%s5 + $0x538] sm:$0xff]
  %v3089 = vld [vmem:[%s5 + $0x540] sm:$0xff]
  %v3090 = vld [vmem:[%s5 + $0x548] sm:$0xff]
  %v3091 = vld [vmem:[%s5 + $0x550] sm:$0xff]
  %v3092 = vld [vmem:[%s5 + $0x558] sm:$0xff]
  %v3093 = vld [vmem:[%s5 + $0x560] sm:$0xff]
  %v3094 = vld [vmem:[%s5 + $0x568] sm:$0xff]
  %v3095 = vld [vmem:[%s5 + $0x570] sm:$0xff]
  %v3096 = vld [vmem:[%s5 + $0x578] sm:$0xff]
  %v3097 = vld [vmem:[%s5 + $0x580] sm:$0xff]
  %v3098 = vld [vmem:[%s5 + $0x588] sm:$0xff]
  %v3099 = vld [vmem:[%s5 + $0x590] sm:$0xff]
  %v3100 = vld [vmem:[%s5 + $0x598] sm:$0xff]
  %v3101 = vld [vmem:[%s5 + $0x5a0] sm:$0xff]
  %v3102 = vld [vmem:[%s5 + $0x5a8] sm:$0xff]
  %v3103 = vld [vmem:[%s5 + $0x5b0] sm:$0xff]
  %v3104 = vld [vmem:[%s5 + $0x5b8] sm:$0xff]
  %v3105 = vld [vmem:[%s5 + $0x5c0] sm:$0xff]
  %v3106 = vld [vmem:[%s5 + $0x5c8] sm:$0xff]
  %v3107 = vld [vmem:[%s5 + $0x5d0] sm:$0xff]
  %v3108 = vld [vmem:[%s5 + $0x5d8] sm:$0xff]
  %v3109 = vld [vmem:[%s5 + $0x5e0] sm:$0xff]
  %v3110 = vld [vmem:[%s5 + $0x5e8] sm:$0xff]
  %v3111 = vld [vmem:[%s5 + $0x5f0] sm:$0xff]
  %v3112 = vld [vmem:[%s5 + $0x5f8] sm:$0xff]
  %v3113 = vld [vmem:[%s5 + $0x600] sm:$0xff]
  %v3114 = vld [vmem:[%s5 + $0x608] sm:$0xff]
  %v3115 = vld [vmem:[%s5 + $0x610] sm:$0xff]
  %v3116 = vld [vmem:[%s5 + $0x618] sm:$0xff]
  %v3117 = vld [vmem:[%s6] sm:$0xff]
  %v3118 = vld [vmem:[%s6 + $0x8] sm:$0xff]
  %v3119 = vld [vmem:[%s6 + $0x10] sm:$0xff]
  %v3120 = vld [vmem:[%s6 + $0x18] sm:$0xff]
  %v3121 = vld [vmem:[%s6 + $0x20] sm:$0xff]
  %v3122 = vld [vmem:[%s6 + $0x28] sm:$0xff]
  %v3123 = vld [vmem:[%s6 + $0x30] sm:$0xff]
  %v3124 = vld [vmem:[%s6 + $0x38] sm:$0xff]
  %v3125 = vld [vmem:[%s6 + $0x40] sm:$0xff]
  %v3126 = vld [vmem:[%s6 + $0x48] sm:$0xff]
  %v3127 = vld [vmem:[%s6 + $0x50] sm:$0xff]
  %v3128 = vld [vmem:[%s6 + $0x58] sm:$0xff]
  %v3129 = vld [vmem:[%s6 + $0x60] sm:$0xff]
  %v3130 = vld [vmem:[%s6 + $0x68] sm:$0xff]
  %v3131 = vld [vmem:[%s6 + $0x70] sm:$0xff]
  %v3132 = vld [vmem:[%s6 + $0x78] sm:$0xff]
  %v3133 = vld [vmem:[%s6 + $0x80] sm:$0xff]
  %v3134 = vld [vmem:[%s6 + $0x88] sm:$0xff]
  %v3135 = vld [vmem:[%s6 + $0x90] sm:$0xff]
  %v3136 = vld [vmem:[%s6 + $0x98] sm:$0xff]
  %v3137 = vld [vmem:[%s6 + $0xa0] sm:$0xff]
  %v3138 = vld [vmem:[%s6 + $0xa8] sm:$0xff]
  %v3139 = vld [vmem:[%s6 + $0xb0] sm:$0xff]
  %v3140 = vld [vmem:[%s6 + $0xb8] sm:$0xff]
  %v3141 = vld [vmem:[%s6 + $0xc0] sm:$0xff]
  %v3142 = vld [vmem:[%s6 + $0xc8] sm:$0xff]
  %v3143 = vld [vmem:[%s6 + $0xd0] sm:$0xff]
  %v3144 = vld [vmem:[%s6 + $0xd8] sm:$0xff]
  %v3145 = vld [vmem:[%s6 + $0xe0] sm:$0xff]
  %v3146 = vld [vmem:[%s6 + $0xe8] sm:$0xff]
  %v3147 = vld [vmem:[%s6 + $0xf0] sm:$0xff]
  %v3148 = vld [vmem:[%s6 + $0xf8] sm:$0xff]
  %v3149 = vld [vmem:[%s6 + $0x100] sm:$0xff]
  %v3150 = vld [vmem:[%s6 + $0x108] sm:$0xff]
  %v3151 = vld [vmem:[%s6 + $0x110] sm:$0xff]
  %v3152 = vld [vmem:[%s6 + $0x118] sm:$0xff]
  %v3153 = vld [vmem:[%s6 + $0x120] sm:$0xff]
  %v3154 = vld [vmem:[%s6 + $0x128] sm:$0xff]
  %v3155 = vld [vmem:[%s6 + $0x130] sm:$0xff]
  %v3156 = vld [vmem:[%s6 + $0x138] sm:$0xff]
  %v3157 = vld [vmem:[%s6 + $0x140] sm:$0xff]
  %v3158 = vld [vmem:[%s6 + $0x148] sm:$0xff]
  %v3159 = vld [vmem:[%s6 + $0x150] sm:$0xff]
  %v3160 = vld [vmem:[%s6 + $0x158] sm:$0xff]
  %v3161 = vld [vmem:[%s6 + $0x160] sm:$0xff]
  %v3162 = vld [vmem:[%s6 + $0x168] sm:$0xff]
  %v3163 = vld [vmem:[%s6 + $0x170] sm:$0xff]
  %v3164 = vld [vmem:[%s6 + $0x178] sm:$0xff]
  %v3165 = vld [vmem:[%s6 + $0x180] sm:$0xff]
  %v3166 = vld [vmem:[%s6 + $0x188] sm:$0xff]
  %v3167 = vld [vmem:[%s6 + $0x190] sm:$0xff]
  %v3168 = vld [vmem:[%s6 + $0x198] sm:$0xff]
  %v3169 = vld [vmem:[%s6 + $0x1a0] sm:$0xff]
  %v3170 = vld [vmem:[%s6 + $0x1a8] sm:$0xff]
  %v3171 = vld [vmem:[%s6 + $0x1b0] sm:$0xff]
  %v3172 = vld [vmem:[%s6 + $0x1b8] sm:$0xff]
  %v3173 = vld [vmem:[%s6 + $0x1c0] sm:$0xff]
  %v3174 = vld [vmem:[%s6 + $0x1c8] sm:$0xff]
  %v3175 = vld [vmem:[%s6 + $0x1d0] sm:$0xff]
  %v3176 = vld [vmem:[%s6 + $0x1d8] sm:$0xff]
  %v3177 = vld [vmem:[%s6 + $0x1e0] sm:$0xff]
  %v3178 = vld [vmem:[%s6 + $0x1e8] sm:$0xff]
  %v3179 = vld [vmem:[%s6 + $0x1f0] sm:$0xff]
  %v3180 = vld [vmem:[%s6 + $0x1f8] sm:$0xff]
  %v3181 = vld [vmem:[%s6 + $0x200] sm:$0xff]
  %v3182 = vld [vmem:[%s6 + $0x208] sm:$0xff]
  %v3183 = vld [vmem:[%s6 + $0x210] sm:$0xff]
  %v3184 = vld [vmem:[%s6 + $0x218] sm:$0xff]
  %v3185 = vld [vmem:[%s6 + $0x220] sm:$0xff]
  %v3186 = vld [vmem:[%s6 + $0x228] sm:$0xff]
  %v3187 = vld [vmem:[%s6 + $0x230] sm:$0xff]
  %v3188 = vld [vmem:[%s6 + $0x238] sm:$0xff]
  %v3189 = vld [vmem:[%s6 + $0x240] sm:$0xff]
  %v3190 = vld [vmem:[%s6 + $0x248] sm:$0xff]
  %v3191 = vld [vmem:[%s6 + $0x250] sm:$0xff]
  %v3192 = vld [vmem:[%s6 + $0x258] sm:$0xff]
  %v3193 = vld [vmem:[%s6 + $0x260] sm:$0xff]
  %v3194 = vld [vmem:[%s6 + $0x268] sm:$0xff]
  %v3195 = vld [vmem:[%s6 + $0x270] sm:$0xff]
  %v3196 = vld [vmem:[%s6 + $0x278] sm:$0xff]
  %v3197 = vld [vmem:[%s6 + $0x280] sm:$0xff]
  %v3198 = vld [vmem:[%s6 + $0x288] sm:$0xff]
  %v3199 = vld [vmem:[%s6 + $0x290] sm:$0xff]
  %v3200 = vld [vmem:[%s6 + $0x298] sm:$0xff]
  %v3201 = vld [vmem:[%s6 + $0x2a0] sm:$0xff]
  %v3202 = vld [vmem:[%s6 + $0x2a8] sm:$0xff]
  %v3203 = vld [vmem:[%s6 + $0x2b0] sm:$0xff]
  %v3204 = vld [vmem:[%s6 + $0x2b8] sm:$0xff]
  %v3205 = vld [vmem:[%s6 + $0x2c0] sm:$0xff]
  %v3206 = vld [vmem:[%s6 + $0x2c8] sm:$0xff]
  %v3207 = vld [vmem:[%s6 + $0x2d0] sm:$0xff]
  %v3208 = vld [vmem:[%s6 + $0x2d8] sm:$0xff]
  %v3209 = vld [vmem:[%s6 + $0x2e0] sm:$0xff]
  %v3210 = vld [vmem:[%s6 + $0x2e8] sm:$0xff]
  %v3211 = vld [vmem:[%s6 + $0x2f0] sm:$0xff]
  %v3212 = vld [vmem:[%s6 + $0x2f8] sm:$0xff]
  %v3213 = vld [vmem:[%s6 + $0x300] sm:$0xff]
  %v3214 = vld [vmem:[%s6 + $0x308] sm:$0xff]
  %v3215 = vld [vmem:[%s6 + $0x310] sm:$0xff]
  %v3216 = vld [vmem:[%s6 + $0x318] sm:$0xff]
  %v3217 = vld [vmem:[%s6 + $0x320] sm:$0xff]
  %v3218 = vld [vmem:[%s6 + $0x328] sm:$0xff]
  %v3219 = vld [vmem:[%s6 + $0x330] sm:$0xff]
  %v3220 = vld [vmem:[%s6 + $0x338] sm:$0xff]
  %v3221 = vld [vmem:[%s6 + $0x340] sm:$0xff]
  %v3222 = vld [vmem:[%s6 + $0x348] sm:$0xff]
  %v3223 = vld [vmem:[%s6 + $0x350] sm:$0xff]
  %v3224 = vld [vmem:[%s6 + $0x358] sm:$0xff]
  %v3225 = vld [vmem:[%s6 + $0x360] sm:$0xff]
  %v3226 = vld [vmem:[%s6 + $0x368] sm:$0xff]
  %v3227 = vld [vmem:[%s6 + $0x370] sm:$0xff]
  %v3228 = vld [vmem:[%s6 + $0x378] sm:$0xff]
  %v3229 = vld [vmem:[%s6 + $0x380] sm:$0xff]
  %v3230 = vld [vmem:[%s6 + $0x388] sm:$0xff]
  %v3231 = vld [vmem:[%s6 + $0x390] sm:$0xff]
  %v3232 = vld [vmem:[%s6 + $0x398] sm:$0xff]
  %v3233 = vld [vmem:[%s6 + $0x3a0] sm:$0xff]
  %v3234 = vld [vmem:[%s6 + $0x3a8] sm:$0xff]
  %v3235 = vld [vmem:[%s6 + $0x3b0] sm:$0xff]
  %v3236 = vld [vmem:[%s6 + $0x3b8] sm:$0xff]
  %v3237 = vld [vmem:[%s6 + $0x3c0] sm:$0xff]
  %v3238 = vld [vmem:[%s6 + $0x3c8] sm:$0xff]
  %v3239 = vld [vmem:[%s6 + $0x3d0] sm:$0xff]
  %v3240 = vld [vmem:[%s6 + $0x3d8] sm:$0xff]
  %v3241 = vld [vmem:[%s6 + $0x3e0] sm:$0xff]
  %v3242 = vld [vmem:[%s6 + $0x3e8] sm:$0xff]
  %v3243 = vld [vmem:[%s6 + $0x3f0] sm:$0xff]
  %v3244 = vld [vmem:[%s6 + $0x3f8] sm:$0xff]
  %v3245 = vld [vmem:[%s6 + $0x400] sm:$0xff]
  %v3246 = vld [vmem:[%s6 + $0x408] sm:$0xff]
  %v3247 = vld [vmem:[%s6 + $0x410] sm:$0xff]
  %v3248 = vld [vmem:[%s6 + $0x418] sm:$0xff]
  %v3249 = vld [vmem:[%s6 + $0x420] sm:$0xff]
  %v3250 = vld [vmem:[%s6 + $0x428] sm:$0xff]
  %v3251 = vld [vmem:[%s6 + $0x430] sm:$0xff]
  %v3252 = vld [vmem:[%s6 + $0x438] sm:$0xff]
  %v3253 = vld [vmem:[%s6 + $0x440] sm:$0xff]
  %v3254 = vld [vmem:[%s6 + $0x448] sm:$0xff]
  %v3255 = vld [vmem:[%s6 + $0x450] sm:$0xff]
  %v3256 = vld [vmem:[%s6 + $0x458] sm:$0xff]
  %v3257 = vld [vmem:[%s6 + $0x460] sm:$0xff]
  %v3258 = vld [vmem:[%s6 + $0x468] sm:$0xff]
  %v3259 = vld [vmem:[%s6 + $0x470] sm:$0xff]
  %v3260 = vld [vmem:[%s6 + $0x478] sm:$0xff]
  %v3261 = vld [vmem:[%s6 + $0x480] sm:$0xff]
  %v3262 = vld [vmem:[%s6 + $0x488] sm:$0xff]
  %v3263 = vld [vmem:[%s6 + $0x490] sm:$0xff]
  %v3264 = vld [vmem:[%s6 + $0x498] sm:$0xff]
  %v3265 = vld [vmem:[%s6 + $0x4a0] sm:$0xff]
  %v3266 = vld [vmem:[%s6 + $0x4a8] sm:$0xff]
  %v3267 = vld [vmem:[%s6 + $0x4b0] sm:$0xff]
  %v3268 = vld [vmem:[%s6 + $0x4b8] sm:$0xff]
  %v3269 = vld [vmem:[%s6 + $0x4c0] sm:$0xff]
  %v3270 = vld [vmem:[%s6 + $0x4c8] sm:$0xff]
  %v3271 = vld [vmem:[%s6 + $0x4d0] sm:$0xff]
  %v3272 = vld [vmem:[%s6 + $0x4d8] sm:$0xff]
  %v3273 = vld [vmem:[%s6 + $0x4e0] sm:$0xff]
  %v3274 = vld [vmem:[%s6 + $0x4e8] sm:$0xff]
  %v3275 = vld [vmem:[%s6 + $0x4f0] sm:$0xff]
  %v3276 = vld [vmem:[%s6 + $0x4f8] sm:$0xff]
  %v3277 = vld [vmem:[%s6 + $0x500] sm:$0xff]
  %v3278 = vld [vmem:[%s6 + $0x508] sm:$0xff]
  %v3279 = vld [vmem:[%s6 + $0x510] sm:$0xff]
  %v3280 = vld [vmem:[%s6 + $0x518] sm:$0xff]
  %v3281 = vld [vmem:[%s6 + $0x520] sm:$0xff]
  %v3282 = vld [vmem:[%s6 + $0x528] sm:$0xff]
  %v3283 = vld [vmem:[%s6 + $0x530] sm:$0xff]
  %v3284 = vld [vmem:[%s6 + $0x538] sm:$0xff]
  %v3285 = vld [vmem:[%s6 + $0x540] sm:$0xff]
  %v3286 = vld [vmem:[%s6 + $0x548] sm:$0xff]
  %v3287 = vld [vmem:[%s6 + $0x550] sm:$0xff]
  %v3288 = vld [vmem:[%s6 + $0x558] sm:$0xff]
  %v3289 = vld [vmem:[%s6 + $0x560] sm:$0xff]
  %v3290 = vld [vmem:[%s6 + $0x568] sm:$0xff]
  %v3291 = vld [vmem:[%s6 + $0x570] sm:$0xff]
  %v3292 = vld [vmem:[%s6 + $0x578] sm:$0xff]
  %v3293 = vld [vmem:[%s6 + $0x580] sm:$0xff]
  %v3294 = vld [vmem:[%s6 + $0x588] sm:$0xff]
  %v3295 = vld [vmem:[%s6 + $0x590] sm:$0xff]
  %v3296 = vld [vmem:[%s6 + $0x598] sm:$0xff]
  %v3297 = vld [vmem:[%s6 + $0x5a0] sm:$0xff]
  %v3298 = vld [vmem:[%s6 + $0x5a8] sm:$0xff]
  %v3299 = vld [vmem:[%s6 + $0x5b0] sm:$0xff]
  %v3300 = vld [vmem:[%s6 + $0x5b8] sm:$0xff]
  %v3301 = vld [vmem:[%s6 + $0x5c0] sm:$0xff]
  %v3302 = vld [vmem:[%s6 + $0x5c8] sm:$0xff]
  %v3303 = vld [vmem:[%s6 + $0x5d0] sm:$0xff]
  %v3304 = vld [vmem:[%s6 + $0x5d8] sm:$0xff]
  %v3305 = vld [vmem:[%s6 + $0x5e0] sm:$0xff]
  %v3306 = vld [vmem:[%s6 + $0x5e8] sm:$0xff]
  %v3307 = vld [vmem:[%s6 + $0x5f0] sm:$0xff]
  %v3308 = vld [vmem:[%s6 + $0x5f8] sm:$0xff]
  %v3309 = vld [vmem:[%s6 + $0x600] sm:$0xff]
  %v3310 = vld [vmem:[%s6 + $0x608] sm:$0xff]
  %v3311 = vld [vmem:[%s6 + $0x610] sm:$0xff]
  %v3312 = vld [vmem:[%s6 + $0x618] sm:$0xff]
  %s3313 = scalar_lea.vmem %s9, 5
  %v3314 = vld [vmem:[%s3313] ss:$8 sm:$0xf]
  %v3316 = vlaneseq
  %v3317 = vshrl.u32 %v3316, 7
  %v3318 = vsub.s32 0, %v3317
  %v3319 = vrot.slane %v3314, %v3318
  %v3320 = vlaneseq
  %v3321 = vshrl.u32 %v3320, 7
  %v3322 = vsub.s32 1, %v3321
  %v3323 = vrot.slane %v3314, %v3322
  %v3324 = vlaneseq
  %v3325 = vshrl.u32 %v3324, 7
  %v3326 = vsub.s32 2, %v3325
  %v3327 = vrot.slane %v3314, %v3326
  %v3328 = vlaneseq
  %v3329 = vshrl.u32 %v3328, 7
  %v3330 = vsub.s32 3, %v3329
  %v3331 = vrot.slane %v3314, %v3330
  %3336 = vmatprep.subr.mxu0 %v2922
  %3337 = vmatpush1.msra.mxu0 %v2921
  %3338 = vmatprep.subr.mxu0 %v2926
  %3339 = vmatpush1.msra.mxu0 %v2925
  %3340 = vmatprep.subr.mxu0 %v2930
  %3341 = vmatpush1.msra.mxu0 %v2929
  %3342 = vmatprep.subr.mxu0 %v2934
  %3343 = vmatpush1.msra.mxu0 %v2933
  %3344 = vmatprep.subr.mxu0 %v2938
  %3345 = vmatpush1.msra.mxu0 %v2937
  %3346 = vmatprep.subr.mxu0 %v2942
  %3347 = vmatpush1.msra.mxu0 %v2941
  %3348 = vmatprep.subr.mxu0 %v2946
  %3349 = vmatpush1.msra.mxu0 %v2945
  %3350 = vmatprep.subr.mxu0 %v2950
  %3351 = vmatpush1.msra.mxu0 %v2949
  %3352 = vmatprep.subr.mxu0 %v2954
  %3353 = vmatpush1.msra.mxu0 %v2953
  %3354 = vmatprep.subr.mxu0 %v2958
  %3355 = vmatpush1.msra.mxu0 %v2957
  %3356 = vmatprep.subr.mxu0 %v2962
  %3357 = vmatpush1.msra.mxu0 %v2961
  %3358 = vmatprep.subr.mxu0 %v2966
  %3359 = vmatpush1.msra.mxu0 %v2965
  %3360 = vmatprep.subr.mxu0 %v2970
  %3361 = vmatpush1.msra.mxu0 %v2969
  %3362 = vmatprep.subr.mxu0 %v2974
  %3363 = vmatpush1.msra.mxu0 %v2973
  %3364 = vmatprep.subr.mxu0 %v2978
  %3365 = vmatpush1.msra.mxu0 %v2977
  %3366 = vmatprep.subr.mxu0 %v2982
  %3367 = vmatpush1.msra.mxu0 %v2981
  %3368 = vmatprep.subr.mxu0 %v2986
  %3369 = vmatpush1.msra.mxu0 %v2985
  %3370 = vmatprep.subr.mxu0 %v2990
  %3371 = vmatpush1.msra.mxu0 %v2989
  %3372 = vmatprep.subr.mxu0 %v2994
  %3373 = vmatpush1.msra.mxu0 %v2993
  %3374 = vmatprep.subr.mxu0 %v2998
  %3375 = vmatpush1.msra.mxu0 %v2997
  %3376 = vmatprep.subr.mxu0 %v3002
  %3377 = vmatpush1.msra.mxu0 %v3001
  %3378 = vmatprep.subr.mxu0 %v3006
  %3379 = vmatpush1.msra.mxu0 %v3005
  %3380 = vmatprep.subr.mxu0 %v3010
  %3381 = vmatpush1.msra.mxu0 %v3009
  %3382 = vmatprep.subr.mxu0 %v3014
  %3383 = vmatpush1.msra.mxu0 %v3013
  %3384 = vmatprep.subr.mxu0 %v3018
  %3385 = vmatpush1.msra.mxu0 %v3017
  %3386 = vmatprep.subr.mxu0 %v3022
  %3387 = vmatpush1.msra.mxu0 %v3021
  %3388 = vmatprep.subr.mxu0 %v3026
  %3389 = vmatpush1.msra.mxu0 %v3025
  %3390 = vmatprep.subr.mxu0 %v3030
  %3391 = vmatpush1.msra.mxu0 %v3029
  %3392 = vmatprep.subr.mxu0 %v3034
  %3393 = vmatpush1.msra.mxu0 %v3033
  %3394 = vmatprep.subr.mxu0 %v3038
  %3395 = vmatpush1.msra.mxu0 %v3037
  %3396 = vmatprep.subr.mxu0 %v3042
  %3397 = vmatpush1.msra.mxu0 %v3041
  %3398 = vmatprep.subr.mxu0 %v3046
  %3399 = vmatpush1.msra.mxu0 %v3045
  %3400 = vmatprep.mubr.f32.mxu0 %v2686
  %3401 = vmatmul.mubr.f32.gmra.mrb[0].mxu0 %v2685
  %v3402 = vpop.f32.mrb[0].mxu0
  %v3403 = vadd.f32 %v3319, %v3402
  %v3404 = vpop.f32.mrb[0].mxu0
  %v3405 = vadd.f32 %v3323, %v3404
  %3406 = vdwg.mxu0
  %3407 = vmatprep.subr.mxu0 %v3050
  %3408 = vmatpush1.msra.mxu0 %v3049
  %3409 = vmatprep.subr.mxu0 %v3054
  %3410 = vmatpush1.msra.mxu0 %v3053
  %3411 = vmatprep.subr.mxu0 %v3058
  %3412 = vmatpush1.msra.mxu0 %v3057
  %3413 = vmatprep.subr.mxu0 %v3062
  %3414 = vmatpush1.msra.mxu0 %v3061
  %3415 = vmatprep.subr.mxu0 %v3066
  %3416 = vmatpush1.msra.mxu0 %v3065
  %3417 = vmatprep.subr.mxu0 %v3070
  %3418 = vmatpush1.msra.mxu0 %v3069
  %3419 = vmatprep.subr.mxu0 %v3074
  %3420 = vmatpush1.msra.mxu0 %v3073
  %3421 = vmatprep.subr.mxu0 %v3078
  %3422 = vmatpush1.msra.mxu0 %v3077
  %3423 = vmatprep.subr.mxu0 %v3082
  %3424 = vmatpush1.msra.mxu0 %v3081
  %3425 = vmatprep.subr.mxu0 %v3086
  %3426 = vmatpush1.msra.mxu0 %v3085
  %3427 = vmatprep.subr.mxu0 %v3090
  %3428 = vmatpush1.msra.mxu0 %v3089
  %3429 = vmatprep.subr.mxu0 %v3094
  %3430 = vmatpush1.msra.mxu0 %v3093
  %3431 = vmatprep.subr.mxu0 %v3098
  %3432 = vmatpush1.msra.mxu0 %v3097
  %3433 = vmatprep.subr.mxu0 %v3102
  %3434 = vmatpush1.msra.mxu0 %v3101
  %3435 = vmatprep.subr.mxu0 %v3106
  %3436 = vmatpush1.msra.mxu0 %v3105
  %3437 = vmatprep.subr.mxu0 %v3110
  %3438 = vmatpush1.msra.mxu0 %v3109
  %3439 = vmatprep.subr.mxu0 %v3114
  %3440 = vmatpush1.msra.mxu0 %v3113
  %3441 = vmatprep.subr.mxu0 0.0
  %3442 = vmatpush1.msra.mxu0 0.0
  %3443 = vmatprep.subr.mxu0 0.0
  %3444 = vmatpush1.msra.mxu0 0.0
  %3445 = vmatprep.subr.mxu0 0.0
  %3446 = vmatpush1.msra.mxu0 0.0
  %3447 = vmatprep.subr.mxu0 0.0
  %3448 = vmatpush1.msra.mxu0 0.0
  %3449 = vmatprep.subr.mxu0 0.0
  %3450 = vmatpush1.msra.mxu0 0.0
  %3451 = vmatprep.subr.mxu0 0.0
  %3452 = vmatpush1.msra.mxu0 0.0
  %3453 = vmatprep.subr.mxu0 0.0
  %3454 = vmatpush1.msra.mxu0 0.0
  %3455 = vmatprep.subr.mxu0 0.0
  %3456 = vmatpush1.msra.mxu0 0.0
  %3457 = vmatprep.subr.mxu0 0.0
  %3458 = vmatpush1.msra.mxu0 0.0
  %3459 = vmatprep.subr.mxu0 0.0
  %3460 = vmatpush1.msra.mxu0 0.0
  %3461 = vmatprep.subr.mxu0 0.0
  %3462 = vmatpush1.msra.mxu0 0.0
  %3463 = vmatprep.subr.mxu0 0.0
  %3464 = vmatpush1.msra.mxu0 0.0
  %3465 = vmatprep.subr.mxu0 0.0
  %3466 = vmatpush1.msra.mxu0 0.0
  %3467 = vmatprep.subr.mxu0 0.0
  %3468 = vmatpush1.msra.mxu0 0.0
  %3469 = vmatprep.subr.mxu0 0.0
  %3470 = vmatpush1.msra.mxu0 0.0
  %3471 = vmatprep.mubr.f32.mxu0 %v2690
  %3472 = vmatmul.mubr.f32.gmra.mrb[0].mxu0 %v2687
  %v3473 = vpop.f32.mrb[0].mxu0
  %v3474 = vadd.f32 %v3403, %v3473
  %v3475 = vpop.f32.mrb[0].mxu0
  %v3476 = vadd.f32 %v3405, %v3475
  %3477 = vdwg.mxu0
  %3478 = vmatprep.subr.mxu0 %v2924
  %3479 = vmatpush1.msra.mxu0 %v2923
  %3480 = vmatprep.subr.mxu0 %v2928
  %3481 = vmatpush1.msra.mxu0 %v2927
  %3482 = vmatprep.subr.mxu0 %v2932
  %3483 = vmatpush1.msra.mxu0 %v2931
  %3484 = vmatprep.subr.mxu0 %v2936
  %3485 = vmatpush1.msra.mxu0 %v2935
  %3486 = vmatprep.subr.mxu0 %v2940
  %3487 = vmatpush1.msra.mxu0 %v2939
  %3488 = vmatprep.subr.mxu0 %v2944
  %3489 = vmatpush1.msra.mxu0 %v2943
  %3490 = vmatprep.subr.mxu0 %v2948
  %3491 = vmatpush1.msra.mxu0 %v2947
  %3492 = vmatprep.subr.mxu0 %v2952
  %3493 = vmatpush1.msra.mxu0 %v2951
  %3494 = vmatprep.subr.mxu0 %v2956
  %3495 = vmatpush1.msra.mxu0 %v2955
  %3496 = vmatprep.subr.mxu0 %v2960
  %3497 = vmatpush1.msra.mxu0 %v2959
  %3498 = vmatprep.subr.mxu0 %v2964
  %3499 = vmatpush1.msra.mxu0 %v2963
  %3500 = vmatprep.subr.mxu0 %v2968
  %3501 = vmatpush1.msra.mxu0 %v2967
  %3502 = vmatprep.subr.mxu0 %v2972
  %3503 = vmatpush1.msra.mxu0 %v2971
  %3504 = vmatprep.subr.mxu0 %v2976
  %3505 = vmatpush1.msra.mxu0 %v2975
  %3506 = vmatprep.subr.mxu0 %v2980
  %3507 = vmatpush1.msra.mxu0 %v2979
  %3508 = vmatprep.subr.mxu0 %v2984
  %3509 = vmatpush1.msra.mxu0 %v2983
  %3510 = vmatprep.subr.mxu0 %v2988
  %3511 = vmatpush1.msra.mxu0 %v2987
  %3512 = vmatprep.subr.mxu0 %v2992
  %3513 = vmatpush1.msra.mxu0 %v2991
  %3514 = vmatprep.subr.mxu0 %v2996
  %3515 = vmatpush1.msra.mxu0 %v2995
  %3516 = vmatprep.subr.mxu0 %v3000
  %3517 = vmatpush1.msra.mxu0 %v2999
  %3518 = vmatprep.subr.mxu0 %v3004
  %3519 = vmatpush1.msra.mxu0 %v3003
  %3520 = vmatprep.subr.mxu0 %v3008
  %3521 = vmatpush1.msra.mxu0 %v3007
  %3522 = vmatprep.subr.mxu0 %v3012
  %3523 = vmatpush1.msra.mxu0 %v3011
  %3524 = vmatprep.subr.mxu0 %v3016
  %3525 = vmatpush1.msra.mxu0 %v3015
  %3526 = vmatprep.subr.mxu0 %v3020
  %3527 = vmatpush1.msra.mxu0 %v3019
  %3528 = vmatprep.subr.mxu0 %v3024
  %3529 = vmatpush1.msra.mxu0 %v3023
  %3530 = vmatprep.subr.mxu0 %v3028
  %3531 = vmatpush1.msra.mxu0 %v3027
  %3532 = vmatprep.subr.mxu0 %v3032
  %3533 = vmatpush1.msra.mxu0 %v3031
  %3534 = vmatprep.subr.mxu0 %v3036
  %3535 = vmatpush1.msra.mxu0 %v3035
  %3536 = vmatprep.subr.mxu0 %v3040
  %3537 = vmatpush1.msra.mxu0 %v3039
  %3538 = vmatprep.subr.mxu0 %v3044
  %3539 = vmatpush1.msra.mxu0 %v3043
  %3540 = vmatprep.subr.mxu0 %v3048
  %3541 = vmatpush1.msra.mxu0 %v3047
  %3542 = vmatprep.mubr.f32.mxu0 %v2686
  %3543 = vmatmul.mubr.f32.gmra.mrb[0].mxu0 %v2685
  %v3544 = vpop.f32.mrb[0].mxu0
  %v3545 = vadd.f32 %v3327, %v3544
  %v3546 = vpop.f32.mrb[0].mxu0
  %v3547 = vadd.f32 %v3331, %v3546
  %3548 = vdwg.mxu0
  %3549 = vmatprep.subr.mxu0 %v3052
  %3550 = vmatpush1.msra.mxu0 %v3051
  %3551 = vmatprep.subr.mxu0 %v3056
  %3552 = vmatpush1.msra.mxu0 %v3055
  %3553 = vmatprep.subr.mxu0 %v3060
  %3554 = vmatpush1.msra.mxu0 %v3059
  %3555 = vmatprep.subr.mxu0 %v3064
  %3556 = vmatpush1.msra.mxu0 %v3063
  %3557 = vmatprep.subr.mxu0 %v3068
  %3558 = vmatpush1.msra.mxu0 %v3067
  %3559 = vmatprep.subr.mxu0 %v3072
  %3560 = vmatpush1.msra.mxu0 %v3071
  %3561 = vmatprep.subr.mxu0 %v3076
  %3562 = vmatpush1.msra.mxu0 %v3075
  %3563 = vmatprep.subr.mxu0 %v3080
  %3564 = vmatpush1.msra.mxu0 %v3079
  %3565 = vmatprep.subr.mxu0 %v3084
  %3566 = vmatpush1.msra.mxu0 %v3083
  %3567 = vmatprep.subr.mxu0 %v3088
  %3568 = vmatpush1.msra.mxu0 %v3087
  %3569 = vmatprep.subr.mxu0 %v3092
  %3570 = vmatpush1.msra.mxu0 %v3091
  %3571 = vmatprep.subr.mxu0 %v3096
  %3572 = vmatpush1.msra.mxu0 %v3095
  %3573 = vmatprep.subr.mxu0 %v3100
  %3574 = vmatpush1.msra.mxu0 %v3099
  %3575 = vmatprep.subr.mxu0 %v3104
  %3576 = vmatpush1.msra.mxu0 %v3103
  %3577 = vmatprep.subr.mxu0 %v3108
  %3578 = vmatpush1.msra.mxu0 %v3107
  %3579 = vmatprep.subr.mxu0 %v3112
  %3580 = vmatpush1.msra.mxu0 %v3111
  %3581 = vmatprep.subr.mxu0 %v3116
  %3582 = vmatpush1.msra.mxu0 %v3115
  %3583 = vmatprep.subr.mxu0 0.0
  %3584 = vmatpush1.msra.mxu0 0.0
  %3585 = vmatprep.subr.mxu0 0.0
  %3586 = vmatpush1.msra.mxu0 0.0
  %3587 = vmatprep.subr.mxu0 0.0
  %3588 = vmatpush1.msra.mxu0 0.0
  %3589 = vmatprep.subr.mxu0 0.0
  %3590 = vmatpush1.msra.mxu0 0.0
  %3591 = vmatprep.subr.mxu0 0.0
  %3592 = vmatpush1.msra.mxu0 0.0
  %3593 = vmatprep.subr.mxu0 0.0
  %3594 = vmatpush1.msra.mxu0 0.0
  %3595 = vmatprep.subr.mxu0 0.0
  %3596 = vmatpush1.msra.mxu0 0.0
  %3597 = vmatprep.subr.mxu0 0.0
  %3598 = vmatpush1.msra.mxu0 0.0
  %3599 = vmatprep.subr.mxu0 0.0
  %3600 = vmatpush1.msra.mxu0 0.0
  %3601 = vmatprep.subr.mxu0 0.0
  %3602 = vmatpush1.msra.mxu0 0.0
  %3603 = vmatprep.subr.mxu0 0.0
  %3604 = vmatpush1.msra.mxu0 0.0
  %3605 = vmatprep.subr.mxu0 0.0
  %3606 = vmatpush1.msra.mxu0 0.0
  %3607 = vmatprep.subr.mxu0 0.0
  %3608 = vmatpush1.msra.mxu0 0.0
  %3609 = vmatprep.subr.mxu0 0.0
  %3610 = vmatpush1.msra.mxu0 0.0
  %3611 = vmatprep.subr.mxu0 0.0
  %3612 = vmatpush1.msra.mxu0 0.0
  %3613 = vmatprep.mubr.f32.mxu0 %v2690
  %3614 = vmatmul.mubr.f32.gmra.mrb[0].mxu0 %v2687
  %v3615 = vpop.f32.mrb[0].mxu0
  %v3616 = vadd.f32 %v3545, %v3615
  %v3617 = vpop.f32.mrb[0].mxu0
  %v3618 = vadd.f32 %v3547, %v3617
  %3619 = vdwg.mxu0
  %v3620 = vxor.u32 %v3474, 2147483648
  %v3621 = vxor.u32 %v3476, 2147483648
  %v3622 = vxor.u32 %v3616, 2147483648
  %v3623 = vxor.u32 %v3618, 2147483648
  %v3624 = vmul.f32 %v3620, 1.442695
  %v3625 = vpow.pop %v3624
  %v3626 = vmul.f32 %v3621, 1.442695
  %v3627 = vpow.pop %v3626
  %v3628 = vmul.f32 %v3622, 1.442695
  %v3629 = vpow.pop %v3628
  %v3630 = vmul.f32 %v3623, 1.442695
  %v3631 = vpow.pop %v3630
  %v3632 = vadd.f32 %v3625, 1.0
  %v3633 = vadd.f32 %v3627, 1.0
  %v3634 = vadd.f32 %v3629, 1.0
  %v3635 = vadd.f32 %v3631, 1.0
  %v3636 = vrcp.pop %v3632
  %v3637 = vmul.f32 1.0, %v3636
  %v3638 = vrcp.pop %v3633
  %v3639 = vmul.f32 1.0, %v3638
  %v3640 = vrcp.pop %v3634
  %v3641 = vmul.f32 1.0, %v3640
  %v3642 = vrcp.pop %v3635
  %v3643 = vmul.f32 1.0, %v3642
  %v3644 = vmul.f32 %v3474, %v3637
  %v3645 = vmul.f32 %v3476, %v3639
  %v3646 = vmul.f32 %v3616, %v3641
  %v3647 = vmul.f32 %v3618, %v3643
  %s3648 = scalar_lea.vmem %s9, 6
  %v3649 = vld [vmem:[%s3648] ss:$8 sm:$0xf]
  %v3651 = vlaneseq
  %v3652 = vshrl.u32 %v3651, 7
  %v3653 = vsub.s32 0, %v3652
  %v3654 = vrot.slane %v3649, %v3653
  %v3655 = vlaneseq
  %v3656 = vshrl.u32 %v3655, 7
  %v3657 = vsub.s32 1, %v3656
  %v3658 = vrot.slane %v3649, %v3657
  %v3659 = vlaneseq
  %v3660 = vshrl.u32 %v3659, 7
  %v3661 = vsub.s32 2, %v3660
  %v3662 = vrot.slane %v3649, %v3661
  %v3663 = vlaneseq
  %v3664 = vshrl.u32 %v3663, 7
  %v3665 = vsub.s32 3, %v3664
  %v3666 = vrot.slane %v3649, %v3665
  %v3672 = vsel %vm1181, %v3647, 0
  %3674 = vmatprep.subr.mxu0 %v3118
  %3675 = vmatpush1.msra.mxu0 %v3117
  %3676 = vmatprep.subr.mxu0 %v3122
  %3677 = vmatpush1.msra.mxu0 %v3121
  %3678 = vmatprep.subr.mxu0 %v3126
  %3679 = vmatpush1.msra.mxu0 %v3125
  %3680 = vmatprep.subr.mxu0 %v3130
  %3681 = vmatpush1.msra.mxu0 %v3129
  %3682 = vmatprep.subr.mxu0 %v3134
  %3683 = vmatpush1.msra.mxu0 %v3133
  %3684 = vmatprep.subr.mxu0 %v3138
  %3685 = vmatpush1.msra.mxu0 %v3137
  %3686 = vmatprep.subr.mxu0 %v3142
  %3687 = vmatpush1.msra.mxu0 %v3141
  %3688 = vmatprep.subr.mxu0 %v3146
  %3689 = vmatpush1.msra.mxu0 %v3145
  %3690 = vmatprep.subr.mxu0 %v3150
  %3691 = vmatpush1.msra.mxu0 %v3149
  %3692 = vmatprep.subr.mxu0 %v3154
  %3693 = vmatpush1.msra.mxu0 %v3153
  %3694 = vmatprep.subr.mxu0 %v3158
  %3695 = vmatpush1.msra.mxu0 %v3157
  %3696 = vmatprep.subr.mxu0 %v3162
  %3697 = vmatpush1.msra.mxu0 %v3161
  %3698 = vmatprep.subr.mxu0 %v3166
  %3699 = vmatpush1.msra.mxu0 %v3165
  %3700 = vmatprep.subr.mxu0 %v3170
  %3701 = vmatpush1.msra.mxu0 %v3169
  %3702 = vmatprep.subr.mxu0 %v3174
  %3703 = vmatpush1.msra.mxu0 %v3173
  %3704 = vmatprep.subr.mxu0 %v3178
  %3705 = vmatpush1.msra.mxu0 %v3177
  %3706 = vmatprep.subr.mxu0 %v3182
  %3707 = vmatpush1.msra.mxu0 %v3181
  %3708 = vmatprep.subr.mxu0 %v3186
  %3709 = vmatpush1.msra.mxu0 %v3185
  %3710 = vmatprep.subr.mxu0 %v3190
  %3711 = vmatpush1.msra.mxu0 %v3189
  %3712 = vmatprep.subr.mxu0 %v3194
  %3713 = vmatpush1.msra.mxu0 %v3193
  %3714 = vmatprep.subr.mxu0 %v3198
  %3715 = vmatpush1.msra.mxu0 %v3197
  %3716 = vmatprep.subr.mxu0 %v3202
  %3717 = vmatpush1.msra.mxu0 %v3201
  %3718 = vmatprep.subr.mxu0 %v3206
  %3719 = vmatpush1.msra.mxu0 %v3205
  %3720 = vmatprep.subr.mxu0 %v3210
  %3721 = vmatpush1.msra.mxu0 %v3209
  %3722 = vmatprep.subr.mxu0 %v3214
  %3723 = vmatpush1.msra.mxu0 %v3213
  %3724 = vmatprep.subr.mxu0 %v3218
  %3725 = vmatpush1.msra.mxu0 %v3217
  %3726 = vmatprep.subr.mxu0 %v3222
  %3727 = vmatpush1.msra.mxu0 %v3221
  %3728 = vmatprep.subr.mxu0 %v3226
  %3729 = vmatpush1.msra.mxu0 %v3225
  %3730 = vmatprep.subr.mxu0 %v3230
  %3731 = vmatpush1.msra.mxu0 %v3229
  %3732 = vmatprep.subr.mxu0 %v3234
  %3733 = vmatpush1.msra.mxu0 %v3233
  %3734 = vmatprep.subr.mxu0 %v3238
  %3735 = vmatpush1.msra.mxu0 %v3237
  %3736 = vmatprep.subr.mxu0 %v3242
  %3737 = vmatpush1.msra.mxu0 %v3241
  %3738 = vmatprep.mubr.f32.mxu0 %v3645
  %3739 = vmatmul.mubr.f32.gmra.mrb[0].mxu0 %v3644
  %v3740 = vpop.f32.mrb[0].mxu0
  %v3741 = vadd.f32 %v3654, %v3740
  %v3742 = vpop.f32.mrb[0].mxu0
  %v3743 = vadd.f32 %v3658, %v3742
  %3744 = vdwg.mxu0
  %3745 = vmatprep.subr.mxu0 %v3246
  %3746 = vmatpush1.msra.mxu0 %v3245
  %3747 = vmatprep.subr.mxu0 %v3250
  %3748 = vmatpush1.msra.mxu0 %v3249
  %3749 = vmatprep.subr.mxu0 %v3254
  %3750 = vmatpush1.msra.mxu0 %v3253
  %3751 = vmatprep.subr.mxu0 %v3258
  %3752 = vmatpush1.msra.mxu0 %v3257
  %3753 = vmatprep.subr.mxu0 %v3262
  %3754 = vmatpush1.msra.mxu0 %v3261
  %3755 = vmatprep.subr.mxu0 %v3266
  %3756 = vmatpush1.msra.mxu0 %v3265
  %3757 = vmatprep.subr.mxu0 %v3270
  %3758 = vmatpush1.msra.mxu0 %v3269
  %3759 = vmatprep.subr.mxu0 %v3274
  %3760 = vmatpush1.msra.mxu0 %v3273
  %3761 = vmatprep.subr.mxu0 %v3278
  %3762 = vmatpush1.msra.mxu0 %v3277
  %3763 = vmatprep.subr.mxu0 %v3282
  %3764 = vmatpush1.msra.mxu0 %v3281
  %3765 = vmatprep.subr.mxu0 %v3286
  %3766 = vmatpush1.msra.mxu0 %v3285
  %3767 = vmatprep.subr.mxu0 %v3290
  %3768 = vmatpush1.msra.mxu0 %v3289
  %3769 = vmatprep.subr.mxu0 %v3294
  %3770 = vmatpush1.msra.mxu0 %v3293
  %3771 = vmatprep.subr.mxu0 %v3298
  %3772 = vmatpush1.msra.mxu0 %v3297
  %3773 = vmatprep.subr.mxu0 %v3302
  %3774 = vmatpush1.msra.mxu0 %v3301
  %3775 = vmatprep.subr.mxu0 %v3306
  %3776 = vmatpush1.msra.mxu0 %v3305
  %3777 = vmatprep.subr.mxu0 %v3310
  %3778 = vmatpush1.msra.mxu0 %v3309
  %3779 = vmatprep.subr.mxu0 0.0
  %3780 = vmatpush1.msra.mxu0 0.0
  %3781 = vmatprep.subr.mxu0 0.0
  %3782 = vmatpush1.msra.mxu0 0.0
  %3783 = vmatprep.subr.mxu0 0.0
  %3784 = vmatpush1.msra.mxu0 0.0
  %3785 = vmatprep.subr.mxu0 0.0
  %3786 = vmatpush1.msra.mxu0 0.0
  %3787 = vmatprep.subr.mxu0 0.0
  %3788 = vmatpush1.msra.mxu0 0.0
  %3789 = vmatprep.subr.mxu0 0.0
  %3790 = vmatpush1.msra.mxu0 0.0
  %3791 = vmatprep.subr.mxu0 0.0
  %3792 = vmatpush1.msra.mxu0 0.0
  %3793 = vmatprep.subr.mxu0 0.0
  %3794 = vmatpush1.msra.mxu0 0.0
  %3795 = vmatprep.subr.mxu0 0.0
  %3796 = vmatpush1.msra.mxu0 0.0
  %3797 = vmatprep.subr.mxu0 0.0
  %3798 = vmatpush1.msra.mxu0 0.0
  %3799 = vmatprep.subr.mxu0 0.0
  %3800 = vmatpush1.msra.mxu0 0.0
  %3801 = vmatprep.subr.mxu0 0.0
  %3802 = vmatpush1.msra.mxu0 0.0
  %3803 = vmatprep.subr.mxu0 0.0
  %3804 = vmatpush1.msra.mxu0 0.0
  %3805 = vmatprep.subr.mxu0 0.0
  %3806 = vmatpush1.msra.mxu0 0.0
  %3807 = vmatprep.subr.mxu0 0.0
  %3808 = vmatpush1.msra.mxu0 0.0
  %3809 = vmatprep.mubr.f32.mxu0 %v3672
  %3810 = vmatmul.mubr.f32.gmra.mrb[0].mxu0 %v3646
  %v3811 = vpop.f32.mrb[0].mxu0
  %v3812 = vadd.f32 %v3741, %v3811
  %v3813 = vpop.f32.mrb[0].mxu0
  %v3814 = vadd.f32 %v3743, %v3813
  %3815 = vdwg.mxu0
  %3816 = vmatprep.subr.mxu0 %v3120
  %3817 = vmatpush1.msra.mxu0 %v3119
  %3818 = vmatprep.subr.mxu0 %v3124
  %3819 = vmatpush1.msra.mxu0 %v3123
  %3820 = vmatprep.subr.mxu0 %v3128
  %3821 = vmatpush1.msra.mxu0 %v3127
  %3822 = vmatprep.subr.mxu0 %v3132
  %3823 = vmatpush1.msra.mxu0 %v3131
  %3824 = vmatprep.subr.mxu0 %v3136
  %3825 = vmatpush1.msra.mxu0 %v3135
  %3826 = vmatprep.subr.mxu0 %v3140
  %3827 = vmatpush1.msra.mxu0 %v3139
  %3828 = vmatprep.subr.mxu0 %v3144
  %3829 = vmatpush1.msra.mxu0 %v3143
  %3830 = vmatprep.subr.mxu0 %v3148
  %3831 = vmatpush1.msra.mxu0 %v3147
  %3832 = vmatprep.subr.mxu0 %v3152
  %3833 = vmatpush1.msra.mxu0 %v3151
  %3834 = vmatprep.subr.mxu0 %v3156
  %3835 = vmatpush1.msra.mxu0 %v3155
  %3836 = vmatprep.subr.mxu0 %v3160
  %3837 = vmatpush1.msra.mxu0 %v3159
  %3838 = vmatprep.subr.mxu0 %v3164
  %3839 = vmatpush1.msra.mxu0 %v3163
  %3840 = vmatprep.subr.mxu0 %v3168
  %3841 = vmatpush1.msra.mxu0 %v3167
  %3842 = vmatprep.subr.mxu0 %v3172
  %3843 = vmatpush1.msra.mxu0 %v3171
  %3844 = vmatprep.subr.mxu0 %v3176
  %3845 = vmatpush1.msra.mxu0 %v3175
  %3846 = vmatprep.subr.mxu0 %v3180
  %3847 = vmatpush1.msra.mxu0 %v3179
  %3848 = vmatprep.subr.mxu0 %v3184
  %3849 = vmatpush1.msra.mxu0 %v3183
  %3850 = vmatprep.subr.mxu0 %v3188
  %3851 = vmatpush1.msra.mxu0 %v3187
  %3852 = vmatprep.subr.mxu0 %v3192
  %3853 = vmatpush1.msra.mxu0 %v3191
  %3854 = vmatprep.subr.mxu0 %v3196
  %3855 = vmatpush1.msra.mxu0 %v3195
  %3856 = vmatprep.subr.mxu0 %v3200
  %3857 = vmatpush1.msra.mxu0 %v3199
  %3858 = vmatprep.subr.mxu0 %v3204
  %3859 = vmatpush1.msra.mxu0 %v3203
  %3860 = vmatprep.subr.mxu0 %v3208
  %3861 = vmatpush1.msra.mxu0 %v3207
  %3862 = vmatprep.subr.mxu0 %v3212
  %3863 = vmatpush1.msra.mxu0 %v3211
  %3864 = vmatprep.subr.mxu0 %v3216
  %3865 = vmatpush1.msra.mxu0 %v3215
  %3866 = vmatprep.subr.mxu0 %v3220
  %3867 = vmatpush1.msra.mxu0 %v3219
  %3868 = vmatprep.subr.mxu0 %v3224
  %3869 = vmatpush1.msra.mxu0 %v3223
  %3870 = vmatprep.subr.mxu0 %v3228
  %3871 = vmatpush1.msra.mxu0 %v3227
  %3872 = vmatprep.subr.mxu0 %v3232
  %3873 = vmatpush1.msra.mxu0 %v3231
  %3874 = vmatprep.subr.mxu0 %v3236
  %3875 = vmatpush1.msra.mxu0 %v3235
  %3876 = vmatprep.subr.mxu0 %v3240
  %3877 = vmatpush1.msra.mxu0 %v3239
  %3878 = vmatprep.subr.mxu0 %v3244
  %3879 = vmatpush1.msra.mxu0 %v3243
  %3880 = vmatprep.mubr.f32.mxu0 %v3645
  %3881 = vmatmul.mubr.f32.gmra.mrb[0].mxu0 %v3644
  %v3882 = vpop.f32.mrb[0].mxu0
  %v3883 = vadd.f32 %v3662, %v3882
  %v3884 = vpop.f32.mrb[0].mxu0
  %v3885 = vadd.f32 %v3666, %v3884
  %3886 = vdwg.mxu0
  %3887 = vmatprep.subr.mxu0 %v3248
  %3888 = vmatpush1.msra.mxu0 %v3247
  %3889 = vmatprep.subr.mxu0 %v3252
  %3890 = vmatpush1.msra.mxu0 %v3251
  %3891 = vmatprep.subr.mxu0 %v3256
  %3892 = vmatpush1.msra.mxu0 %v3255
  %3893 = vmatprep.subr.mxu0 %v3260
  %3894 = vmatpush1.msra.mxu0 %v3259
  %3895 = vmatprep.subr.mxu0 %v3264
  %3896 = vmatpush1.msra.mxu0 %v3263
  %3897 = vmatprep.subr.mxu0 %v3268
  %3898 = vmatpush1.msra.mxu0 %v3267
  %3899 = vmatprep.subr.mxu0 %v3272
  %3900 = vmatpush1.msra.mxu0 %v3271
  %3901 = vmatprep.subr.mxu0 %v3276
  %3902 = vmatpush1.msra.mxu0 %v3275
  %3903 = vmatprep.subr.mxu0 %v3280
  %3904 = vmatpush1.msra.mxu0 %v3279
  %3905 = vmatprep.subr.mxu0 %v3284
  %3906 = vmatpush1.msra.mxu0 %v3283
  %3907 = vmatprep.subr.mxu0 %v3288
  %3908 = vmatpush1.msra.mxu0 %v3287
  %3909 = vmatprep.subr.mxu0 %v3292
  %3910 = vmatpush1.msra.mxu0 %v3291
  %3911 = vmatprep.subr.mxu0 %v3296
  %3912 = vmatpush1.msra.mxu0 %v3295
  %3913 = vmatprep.subr.mxu0 %v3300
  %3914 = vmatpush1.msra.mxu0 %v3299
  %3915 = vmatprep.subr.mxu0 %v3304
  %3916 = vmatpush1.msra.mxu0 %v3303
  %3917 = vmatprep.subr.mxu0 %v3308
  %3918 = vmatpush1.msra.mxu0 %v3307
  %3919 = vmatprep.subr.mxu0 %v3312
  %3920 = vmatpush1.msra.mxu0 %v3311
  %3921 = vmatprep.subr.mxu0 0.0
  %3922 = vmatpush1.msra.mxu0 0.0
  %3923 = vmatprep.subr.mxu0 0.0
  %3924 = vmatpush1.msra.mxu0 0.0
  %3925 = vmatprep.subr.mxu0 0.0
  %3926 = vmatpush1.msra.mxu0 0.0
  %3927 = vmatprep.subr.mxu0 0.0
  %3928 = vmatpush1.msra.mxu0 0.0
  %3929 = vmatprep.subr.mxu0 0.0
  %3930 = vmatpush1.msra.mxu0 0.0
  %3931 = vmatprep.subr.mxu0 0.0
  %3932 = vmatpush1.msra.mxu0 0.0
  %3933 = vmatprep.subr.mxu0 0.0
  %3934 = vmatpush1.msra.mxu0 0.0
  %3935 = vmatprep.subr.mxu0 0.0
  %3936 = vmatpush1.msra.mxu0 0.0
  %3937 = vmatprep.subr.mxu0 0.0
  %3938 = vmatpush1.msra.mxu0 0.0
  %3939 = vmatprep.subr.mxu0 0.0
  %3940 = vmatpush1.msra.mxu0 0.0
  %3941 = vmatprep.subr.mxu0 0.0
  %3942 = vmatpush1.msra.mxu0 0.0
  %3943 = vmatprep.subr.mxu0 0.0
  %3944 = vmatpush1.msra.mxu0 0.0
  %3945 = vmatprep.subr.mxu0 0.0
  %3946 = vmatpush1.msra.mxu0 0.0
  %3947 = vmatprep.subr.mxu0 0.0
  %3948 = vmatpush1.msra.mxu0 0.0
  %3949 = vmatprep.subr.mxu0 0.0
  %3950 = vmatpush1.msra.mxu0 0.0
  %3951 = vmatprep.mubr.f32.mxu0 %v3672
  %3952 = vmatmul.mubr.f32.gmra.mrb[0].mxu0 %v3646
  %v3953 = vpop.f32.mrb[0].mxu0
  %v3954 = vadd.f32 %v3883, %v3953
  %v3955 = vpop.f32.mrb[0].mxu0
  %v3956 = vadd.f32 %v3885, %v3955
  %3957 = vdwg.mxu0
  %v3958 = vld [vmem:[%s9 + $0x60] sm:$0xff]
  %v3959 = vld [vmem:[%s9 + $0x68] sm:$0xff]
  %v3960 = vld [vmem:[%s9 + $0x70] sm:$0xff]
  %v3961 = vld [vmem:[%s9 + $0x78] sm:$0xff]
  %s3962 = scalar_lea.vmem %s9, 7
  %v3963 = vld [vmem:[%s3962] ss:$8 sm:$0xf]
  %v3965 = vlaneseq
  %v3966 = vshrl.u32 %v3965, 7
  %v3967 = vsub.s32 0, %v3966
  %v3968 = vrot.slane %v3963, %v3967
  %v3969 = vlaneseq
  %v3970 = vshrl.u32 %v3969, 7
  %v3971 = vsub.s32 1, %v3970
  %v3972 = vrot.slane %v3963, %v3971
  %v3973 = vlaneseq
  %v3974 = vshrl.u32 %v3973, 7
  %v3975 = vsub.s32 2, %v3974
  %v3976 = vrot.slane %v3963, %v3975
  %v3977 = vlaneseq
  %v3978 = vshrl.u32 %v3977, 7
  %v3979 = vsub.s32 3, %v3978
  %v3980 = vrot.slane %v3963, %v3979
  %v3986 = vsel %vm1181, %v2918, 0
  %3988 = vmatprep.subr.mxu0 %v3959
  %3989 = vmatpush1.msra.mxu0 %v3958
  %3990 = vmatprep.subr.mxu0 0.0
  %3991 = vmatpush1.msra.mxu0 0.0
  %3992 = vmatprep.subr.mxu0 0.0
  %3993 = vmatpush1.msra.mxu0 0.0
  %3994 = vmatprep.subr.mxu0 0.0
  %3995 = vmatpush1.msra.mxu0 0.0
  %3996 = vmatprep.subr.mxu0 0.0
  %3997 = vmatpush1.msra.mxu0 0.0
  %3998 = vmatprep.subr.mxu0 0.0
  %3999 = vmatpush1.msra.mxu0 0.0
  %4000 = vmatprep.subr.mxu0 0.0
  %4001 = vmatpush1.msra.mxu0 0.0
  %4002 = vmatprep.subr.mxu0 0.0
  %4003 = vmatpush1.msra.mxu0 0.0
  %4004 = vmatprep.subr.mxu0 0.0
  %4005 = vmatpush1.msra.mxu0 0.0
  %4006 = vmatprep.subr.mxu0 0.0
  %4007 = vmatpush1.msra.mxu0 0.0
  %4008 = vmatprep.subr.mxu0 0.0
  %4009 = vmatpush1.msra.mxu0 0.0
  %4010 = vmatprep.subr.mxu0 0.0
  %4011 = vmatpush1.msra.mxu0 0.0
  %4012 = vmatprep.subr.mxu0 0.0
  %4013 = vmatpush1.msra.mxu0 0.0
  %4014 = vmatprep.subr.mxu0 0.0
  %4015 = vmatpush1.msra.mxu0 0.0
  %4016 = vmatprep.subr.mxu0 0.0
  %4017 = vmatpush1.msra.mxu0 0.0
  %4018 = vmatprep.subr.mxu0 0.0
  %4019 = vmatpush1.msra.mxu0 0.0
  %4020 = vmatprep.subr.mxu0 0.0
  %4021 = vmatpush1.msra.mxu0 0.0
  %4022 = vmatprep.subr.mxu0 0.0
  %4023 = vmatpush1.msra.mxu0 0.0
  %4024 = vmatprep.subr.mxu0 0.0
  %4025 = vmatpush1.msra.mxu0 0.0
  %4026 = vmatprep.subr.mxu0 0.0
  %4027 = vmatpush1.msra.mxu0 0.0
  %4028 = vmatprep.subr.mxu0 0.0
  %4029 = vmatpush1.msra.mxu0 0.0
  %4030 = vmatprep.subr.mxu0 0.0
  %4031 = vmatpush1.msra.mxu0 0.0
  %4032 = vmatprep.subr.mxu0 0.0
  %4033 = vmatpush1.msra.mxu0 0.0
  %4034 = vmatprep.subr.mxu0 0.0
  %4035 = vmatpush1.msra.mxu0 0.0
  %4036 = vmatprep.subr.mxu0 0.0
  %4037 = vmatpush1.msra.mxu0 0.0
  %4038 = vmatprep.subr.mxu0 0.0
  %4039 = vmatpush1.msra.mxu0 0.0
  %4040 = vmatprep.subr.mxu0 0.0
  %4041 = vmatpush1.msra.mxu0 0.0
  %4042 = vmatprep.subr.mxu0 0.0
  %4043 = vmatpush1.msra.mxu0 0.0
  %4044 = vmatprep.subr.mxu0 0.0
  %4045 = vmatpush1.msra.mxu0 0.0
  %4046 = vmatprep.subr.mxu0 0.0
  %4047 = vmatpush1.msra.mxu0 0.0
  %4048 = vmatprep.subr.mxu0 0.0
  %4049 = vmatpush1.msra.mxu0 0.0
  %4050 = vmatprep.subr.mxu0 0.0
  %4051 = vmatpush1.msra.mxu0 0.0
  %4052 = vmatprep.mubr.f32.mxu0 0.0
  %4053 = vmatmul.mubr.f32.gmra.mrb[0].mxu0 %v3986
  %v4054 = vpop.f32.mrb[0].mxu0
  %v4055 = vadd.f32 %v3968, %v4054
  %v4056 = vpop.f32.mrb[0].mxu0
  %v4057 = vadd.f32 %v3972, %v4056
  %4058 = vdwg.mxu0
  %4059 = vmatprep.subr.mxu0 %v3961
  %4060 = vmatpush1.msra.mxu0 %v3960
  %4061 = vmatprep.subr.mxu0 0.0
  %4062 = vmatpush1.msra.mxu0 0.0
  %4063 = vmatprep.subr.mxu0 0.0
  %4064 = vmatpush1.msra.mxu0 0.0
  %4065 = vmatprep.subr.mxu0 0.0
  %4066 = vmatpush1.msra.mxu0 0.0
  %4067 = vmatprep.subr.mxu0 0.0
  %4068 = vmatpush1.msra.mxu0 0.0
  %4069 = vmatprep.subr.mxu0 0.0
  %4070 = vmatpush1.msra.mxu0 0.0
  %4071 = vmatprep.subr.mxu0 0.0
  %4072 = vmatpush1.msra.mxu0 0.0
  %4073 = vmatprep.subr.mxu0 0.0
  %4074 = vmatpush1.msra.mxu0 0.0
  %4075 = vmatprep.subr.mxu0 0.0
  %4076 = vmatpush1.msra.mxu0 0.0
  %4077 = vmatprep.subr.mxu0 0.0
  %4078 = vmatpush1.msra.mxu0 0.0
  %4079 = vmatprep.subr.mxu0 0.0
  %4080 = vmatpush1.msra.mxu0 0.0
  %4081 = vmatprep.subr.mxu0 0.0
  %4082 = vmatpush1.msra.mxu0 0.0
  %4083 = vmatprep.subr.mxu0 0.0
  %4084 = vmatpush1.msra.mxu0 0.0
  %4085 = vmatprep.subr.mxu0 0.0
  %4086 = vmatpush1.msra.mxu0 0.0
  %4087 = vmatprep.subr.mxu0 0.0
  %4088 = vmatpush1.msra.mxu0 0.0
  %4089 = vmatprep.subr.mxu0 0.0
  %4090 = vmatpush1.msra.mxu0 0.0
  %4091 = vmatprep.subr.mxu0 0.0
  %4092 = vmatpush1.msra.mxu0 0.0
  %4093 = vmatprep.subr.mxu0 0.0
  %4094 = vmatpush1.msra.mxu0 0.0
  %4095 = vmatprep.subr.mxu0 0.0
  %4096 = vmatpush1.msra.mxu0 0.0
  %4097 = vmatprep.subr.mxu0 0.0
  %4098 = vmatpush1.msra.mxu0 0.0
  %4099 = vmatprep.subr.mxu0 0.0
  %4100 = vmatpush1.msra.mxu0 0.0
  %4101 = vmatprep.subr.mxu0 0.0
  %4102 = vmatpush1.msra.mxu0 0.0
  %4103 = vmatprep.subr.mxu0 0.0
  %4104 = vmatpush1.msra.mxu0 0.0
  %4105 = vmatprep.subr.mxu0 0.0
  %4106 = vmatpush1.msra.mxu0 0.0
  %4107 = vmatprep.subr.mxu0 0.0
  %4108 = vmatpush1.msra.mxu0 0.0
  %4109 = vmatprep.subr.mxu0 0.0
  %4110 = vmatpush1.msra.mxu0 0.0
  %4111 = vmatprep.subr.mxu0 0.0
  %4112 = vmatpush1.msra.mxu0 0.0
  %4113 = vmatprep.subr.mxu0 0.0
  %4114 = vmatpush1.msra.mxu0 0.0
  %4115 = vmatprep.subr.mxu0 0.0
  %4116 = vmatpush1.msra.mxu0 0.0
  %4117 = vmatprep.subr.mxu0 0.0
  %4118 = vmatpush1.msra.mxu0 0.0
  %4119 = vmatprep.subr.mxu0 0.0
  %4120 = vmatpush1.msra.mxu0 0.0
  %4121 = vmatprep.subr.mxu0 0.0
  %4122 = vmatpush1.msra.mxu0 0.0
  %4123 = vmatprep.mubr.f32.mxu0 0.0
  %4124 = vmatmul.mubr.f32.gmra.mrb[0].mxu0 %v3986
  %v4125 = vpop.f32.mrb[0].mxu0
  %v4126 = vadd.f32 %v3976, %v4125
  %v4127 = vpop.f32.mrb[0].mxu0
  %v4128 = vadd.f32 %v3980, %v4127
  %4129 = vdwg.mxu0
  %v4130 = vxor.u32 %v4055, 2147483648
  %v4131 = vxor.u32 %v4057, 2147483648
  %v4132 = vxor.u32 %v4126, 2147483648
  %v4133 = vxor.u32 %v4128, 2147483648
  %v4134 = vmul.f32 %v4130, 1.442695
  %v4135 = vpow.pop %v4134
  %v4136 = vmul.f32 %v4131, 1.442695
  %v4137 = vpow.pop %v4136
  %v4138 = vmul.f32 %v4132, 1.442695
  %v4139 = vpow.pop %v4138
  %v4140 = vmul.f32 %v4133, 1.442695
  %v4141 = vpow.pop %v4140
  %v4142 = vadd.f32 %v4135, 1.0
  %v4143 = vadd.f32 %v4137, 1.0
  %v4144 = vadd.f32 %v4139, 1.0
  %v4145 = vadd.f32 %v4141, 1.0
  %v4146 = vrcp.pop %v4142
  %v4147 = vmul.f32 1.0, %v4146
  %v4148 = vrcp.pop %v4143
  %v4149 = vmul.f32 1.0, %v4148
  %v4150 = vrcp.pop %v4144
  %v4151 = vmul.f32 1.0, %v4150
  %v4152 = vrcp.pop %v4145
  %v4153 = vmul.f32 1.0, %v4152
  %v4154 = vmul.f32 %v3812, %v4147
  %v4155 = vmul.f32 %v3814, %v4149
  %v4156 = vmul.f32 %v3954, %v4151
  %v4157 = vmul.f32 %v3956, %v4153
  %v4158 = vadd.f32 %v2685, %v4154
  %v4159 = vadd.f32 %v2686, %v4155
  %v4160 = vadd.f32 %v2687, %v4156
  %v4161 = vadd.f32 %v2688, %v4157
  %v4162 = vxor.u32 %v4158, 2147483648
  %v4163 = vxor.u32 %v4159, 2147483648
  %v4164 = vxor.u32 %v4160, 2147483648
  %v4165 = vxor.u32 %v4161, 2147483648
  %v4166 = vmul.f32 %v4162, 1.442695
  %v4167 = vpow.pop %v4166
  %v4168 = vmul.f32 %v4163, 1.442695
  %v4169 = vpow.pop %v4168
  %v4170 = vmul.f32 %v4164, 1.442695
  %v4171 = vpow.pop %v4170
  %v4172 = vmul.f32 %v4165, 1.442695
  %v4173 = vpow.pop %v4172
  %v4174 = vadd.f32 %v4167, 1.0
  %v4175 = vadd.f32 %v4169, 1.0
  %v4176 = vadd.f32 %v4171, 1.0
  %v4177 = vadd.f32 %v4173, 1.0
  %v4178 = vrcp.pop %v4174
  %v4179 = vmul.f32 1.0, %v4178
  %v4180 = vrcp.pop %v4175
  %v4181 = vmul.f32 1.0, %v4180
  %v4182 = vrcp.pop %v4176
  %v4183 = vmul.f32 1.0, %v4182
  %v4184 = vrcp.pop %v4177
  %v4185 = vmul.f32 1.0, %v4184
  %v4186 = vmul.f32 %v4158, %v4179
  %v4187 = vmul.f32 %v4159, %v4181
  %v4188 = vmul.f32 %v4160, %v4183
  %v4189 = vmul.f32 %v4161, %v4185
  %v4190 = vld [vmem:[%s7] sm:$0xff]
  %v4191 = vld [vmem:[%s7 + $0x8] sm:$0xff]
  %v4192 = vld [vmem:[%s7 + $0x10] sm:$0xff]
  %v4193 = vld [vmem:[%s7 + $0x18] sm:$0xff]
  %v4194 = vld [vmem:[%s7 + $0x20] sm:$0xff]
  %v4195 = vld [vmem:[%s7 + $0x28] sm:$0xff]
  %v4196 = vld [vmem:[%s7 + $0x30] sm:$0xff]
  %v4197 = vld [vmem:[%s7 + $0x38] sm:$0xff]
  %v4198 = vld [vmem:[%s7 + $0x40] sm:$0xff]
  %v4199 = vld [vmem:[%s7 + $0x48] sm:$0xff]
  %v4200 = vld [vmem:[%s7 + $0x50] sm:$0xff]
  %v4201 = vld [vmem:[%s7 + $0x58] sm:$0xff]
  %v4202 = vld [vmem:[%s7 + $0x60] sm:$0xff]
  %v4203 = vld [vmem:[%s7 + $0x68] sm:$0xff]
  %v4204 = vld [vmem:[%s7 + $0x70] sm:$0xff]
  %v4205 = vld [vmem:[%s7 + $0x78] sm:$0xff]
  %v4206 = vld [vmem:[%s7 + $0x80] sm:$0xff]
  %v4207 = vld [vmem:[%s7 + $0x88] sm:$0xff]
  %v4208 = vld [vmem:[%s7 + $0x90] sm:$0xff]
  %v4209 = vld [vmem:[%s7 + $0x98] sm:$0xff]
  %v4210 = vld [vmem:[%s7 + $0xa0] sm:$0xff]
  %v4211 = vld [vmem:[%s7 + $0xa8] sm:$0xff]
  %v4212 = vld [vmem:[%s7 + $0xb0] sm:$0xff]
  %v4213 = vld [vmem:[%s7 + $0xb8] sm:$0xff]
  %v4214 = vld [vmem:[%s7 + $0xc0] sm:$0xff]
  %v4215 = vld [vmem:[%s7 + $0xc8] sm:$0xff]
  %v4216 = vld [vmem:[%s7 + $0xd0] sm:$0xff]
  %v4217 = vld [vmem:[%s7 + $0xd8] sm:$0xff]
  %v4218 = vld [vmem:[%s7 + $0xe0] sm:$0xff]
  %v4219 = vld [vmem:[%s7 + $0xe8] sm:$0xff]
  %v4220 = vld [vmem:[%s7 + $0xf0] sm:$0xff]
  %v4221 = vld [vmem:[%s7 + $0xf8] sm:$0xff]
  %v4222 = vld [vmem:[%s7 + $0x100] sm:$0xff]
  %v4223 = vld [vmem:[%s7 + $0x108] sm:$0xff]
  %v4224 = vld [vmem:[%s7 + $0x110] sm:$0xff]
  %v4225 = vld [vmem:[%s7 + $0x118] sm:$0xff]
  %v4226 = vld [vmem:[%s7 + $0x120] sm:$0xff]
  %v4227 = vld [vmem:[%s7 + $0x128] sm:$0xff]
  %v4228 = vld [vmem:[%s7 + $0x130] sm:$0xff]
  %v4229 = vld [vmem:[%s7 + $0x138] sm:$0xff]
  %v4230 = vld [vmem:[%s7 + $0x140] sm:$0xff]
  %v4231 = vld [vmem:[%s7 + $0x148] sm:$0xff]
  %v4232 = vld [vmem:[%s7 + $0x150] sm:$0xff]
  %v4233 = vld [vmem:[%s7 + $0x158] sm:$0xff]
  %v4234 = vld [vmem:[%s7 + $0x160] sm:$0xff]
  %v4235 = vld [vmem:[%s7 + $0x168] sm:$0xff]
  %v4236 = vld [vmem:[%s7 + $0x170] sm:$0xff]
  %v4237 = vld [vmem:[%s7 + $0x178] sm:$0xff]
  %v4238 = vld [vmem:[%s7 + $0x180] sm:$0xff]
  %v4239 = vld [vmem:[%s9 + $0x20] ss:$0 sm:$0xff]
  %v4241 = vsel %vm1181, %v4189, 0
  %4243 = vmatprep.subr.mxu0 0.0
  %4244 = vmatpush1.msra.mxu0 %v4190
  %4245 = vmatprep.subr.mxu0 0.0
  %4246 = vmatpush1.msra.mxu0 %v4191
  %4247 = vmatprep.subr.mxu0 0.0
  %4248 = vmatpush1.msra.mxu0 %v4192
  %4249 = vmatprep.subr.mxu0 0.0
  %4250 = vmatpush1.msra.mxu0 %v4193
  %4251 = vmatprep.subr.mxu0 0.0
  %4252 = vmatpush1.msra.mxu0 %v4194
  %4253 = vmatprep.subr.mxu0 0.0
  %4254 = vmatpush1.msra.mxu0 %v4195
  %4255 = vmatprep.subr.mxu0 0.0
  %4256 = vmatpush1.msra.mxu0 %v4196
  %4257 = vmatprep.subr.mxu0 0.0
  %4258 = vmatpush1.msra.mxu0 %v4197
  %4259 = vmatprep.subr.mxu0 0.0
  %4260 = vmatpush1.msra.mxu0 %v4198
  %4261 = vmatprep.subr.mxu0 0.0
  %4262 = vmatpush1.msra.mxu0 %v4199
  %4263 = vmatprep.subr.mxu0 0.0
  %4264 = vmatpush1.msra.mxu0 %v4200
  %4265 = vmatprep.subr.mxu0 0.0
  %4266 = vmatpush1.msra.mxu0 %v4201
  %4267 = vmatprep.subr.mxu0 0.0
  %4268 = vmatpush1.msra.mxu0 %v4202
  %4269 = vmatprep.subr.mxu0 0.0
  %4270 = vmatpush1.msra.mxu0 %v4203
  %4271 = vmatprep.subr.mxu0 0.0
  %4272 = vmatpush1.msra.mxu0 %v4204
  %4273 = vmatprep.subr.mxu0 0.0
  %4274 = vmatpush1.msra.mxu0 %v4205
  %4275 = vmatprep.subr.mxu0 0.0
  %4276 = vmatpush1.msra.mxu0 %v4206
  %4277 = vmatprep.subr.mxu0 0.0
  %4278 = vmatpush1.msra.mxu0 %v4207
  %4279 = vmatprep.subr.mxu0 0.0
  %4280 = vmatpush1.msra.mxu0 %v4208
  %4281 = vmatprep.subr.mxu0 0.0
  %4282 = vmatpush1.msra.mxu0 %v4209
  %4283 = vmatprep.subr.mxu0 0.0
  %4284 = vmatpush1.msra.mxu0 %v4210
  %4285 = vmatprep.subr.mxu0 0.0
  %4286 = vmatpush1.msra.mxu0 %v4211
  %4287 = vmatprep.subr.mxu0 0.0
  %4288 = vmatpush1.msra.mxu0 %v4212
  %4289 = vmatprep.subr.mxu0 0.0
  %4290 = vmatpush1.msra.mxu0 %v4213
  %4291 = vmatprep.subr.mxu0 0.0
  %4292 = vmatpush1.msra.mxu0 %v4214
  %4293 = vmatprep.subr.mxu0 0.0
  %4294 = vmatpush1.msra.mxu0 %v4215
  %4295 = vmatprep.subr.mxu0 0.0
  %4296 = vmatpush1.msra.mxu0 %v4216
  %4297 = vmatprep.subr.mxu0 0.0
  %4298 = vmatpush1.msra.mxu0 %v4217
  %4299 = vmatprep.subr.mxu0 0.0
  %4300 = vmatpush1.msra.mxu0 %v4218
  %4301 = vmatprep.subr.mxu0 0.0
  %4302 = vmatpush1.msra.mxu0 %v4219
  %4303 = vmatprep.subr.mxu0 0.0
  %4304 = vmatpush1.msra.mxu0 %v4220
  %4305 = vmatprep.subr.mxu0 0.0
  %4306 = vmatpush1.msra.mxu0 %v4221
  %4307 = vmatprep.mubr.f32.mxu0 %v4187
  %4308 = vmatmul.mubr.f32.gmra.mrb[0].mxu0 %v4186
  %v4309 = vpop.f32.mrb[0].mxu0
  %v4310 = vadd.f32 %v4239, %v4309
  %v4311 = vpop.f32.mrb[0].mxu0
  %4312 = vdwg.mxu0
  %4313 = vmatprep.subr.mxu0 0.0
  %4314 = vmatpush1.msra.mxu0 %v4222
  %4315 = vmatprep.subr.mxu0 0.0
  %4316 = vmatpush1.msra.mxu0 %v4223
  %4317 = vmatprep.subr.mxu0 0.0
  %4318 = vmatpush1.msra.mxu0 %v4224
  %4319 = vmatprep.subr.mxu0 0.0
  %4320 = vmatpush1.msra.mxu0 %v4225
  %4321 = vmatprep.subr.mxu0 0.0
  %4322 = vmatpush1.msra.mxu0 %v4226
  %4323 = vmatprep.subr.mxu0 0.0
  %4324 = vmatpush1.msra.mxu0 %v4227
  %4325 = vmatprep.subr.mxu0 0.0
  %4326 = vmatpush1.msra.mxu0 %v4228
  %4327 = vmatprep.subr.mxu0 0.0
  %4328 = vmatpush1.msra.mxu0 %v4229
  %4329 = vmatprep.subr.mxu0 0.0
  %4330 = vmatpush1.msra.mxu0 %v4230
  %4331 = vmatprep.subr.mxu0 0.0
  %4332 = vmatpush1.msra.mxu0 %v4231
  %4333 = vmatprep.subr.mxu0 0.0
  %4334 = vmatpush1.msra.mxu0 %v4232
  %4335 = vmatprep.subr.mxu0 0.0
  %4336 = vmatpush1.msra.mxu0 %v4233
  %4337 = vmatprep.subr.mxu0 0.0
  %4338 = vmatpush1.msra.mxu0 %v4234
  %4339 = vmatprep.subr.mxu0 0.0
  %4340 = vmatpush1.msra.mxu0 %v4235
  %4341 = vmatprep.subr.mxu0 0.0
  %4342 = vmatpush1.msra.mxu0 %v4236
  %4343 = vmatprep.subr.mxu0 0.0
  %4344 = vmatpush1.msra.mxu0 %v4237
  %4345 = vmatprep.subr.mxu0 0.0
  %4346 = vmatpush1.msra.mxu0 %v4238
  %4347 = vmatprep.subr.mxu0 0.0
  %4348 = vmatpush1.msra.mxu0 0.0
  %4349 = vmatprep.subr.mxu0 0.0
  %4350 = vmatpush1.msra.mxu0 0.0
  %4351 = vmatprep.subr.mxu0 0.0
  %4352 = vmatpush1.msra.mxu0 0.0
  %4353 = vmatprep.subr.mxu0 0.0
  %4354 = vmatpush1.msra.mxu0 0.0
  %4355 = vmatprep.subr.mxu0 0.0
  %4356 = vmatpush1.msra.mxu0 0.0
  %4357 = vmatprep.subr.mxu0 0.0
  %4358 = vmatpush1.msra.mxu0 0.0
  %4359 = vmatprep.subr.mxu0 0.0
  %4360 = vmatpush1.msra.mxu0 0.0
  %4361 = vmatprep.subr.mxu0 0.0
  %4362 = vmatpush1.msra.mxu0 0.0
  %4363 = vmatprep.subr.mxu0 0.0
  %4364 = vmatpush1.msra.mxu0 0.0
  %4365 = vmatprep.subr.mxu0 0.0
  %4366 = vmatpush1.msra.mxu0 0.0
  %4367 = vmatprep.subr.mxu0 0.0
  %4368 = vmatpush1.msra.mxu0 0.0
  %4369 = vmatprep.subr.mxu0 0.0
  %4370 = vmatpush1.msra.mxu0 0.0
  %4371 = vmatprep.subr.mxu0 0.0
  %4372 = vmatpush1.msra.mxu0 0.0
  %4373 = vmatprep.subr.mxu0 0.0
  %4374 = vmatpush1.msra.mxu0 0.0
  %4375 = vmatprep.subr.mxu0 0.0
  %4376 = vmatpush1.msra.mxu0 0.0
  %4377 = vmatprep.mubr.f32.mxu0 %v4241
  %4378 = vmatmul.mubr.f32.gmra.mrb[0].mxu0 %v4188
  %v4379 = vpop.f32.mrb[0].mxu0
  %v4380 = vadd.f32 %v4310, %v4379
  %v4381 = vpop.f32.mrb[0].mxu0
  %4382 = vdwg.mxu0
  %v4383 = vld [vmem:[%s9 + $0x22] ss:$0 sm:$0xff]
  %vm4384 = vcmask 801792
  %v4386 = vsel %vm4384, %v4380, 0
  %vm4388 = vcmask 1041408
  %v4390 = vsel %vm4388, %v1065, 0
  %4392 = vmatprep.subr.mxu0 0.0
  %4393 = vmatpush1.msra.mxu0 %v1053
  %4394 = vmatprep.subr.mxu0 0.0
  %4395 = vmatpush1.msra.mxu0 %v1054
  %4396 = vmatprep.subr.mxu0 0.0
  %4397 = vmatpush1.msra.mxu0 %v1055
  %4398 = vmatprep.subr.mxu0 0.0
  %4399 = vmatpush1.msra.mxu0 %v1056
  %4400 = vmatprep.subr.mxu0 0.0
  %4401 = vmatpush1.msra.mxu0 %v1057
  %4402 = vmatprep.subr.mxu0 0.0
  %4403 = vmatpush1.msra.mxu0 %v1058
  %4404 = vmatprep.subr.mxu0 0.0
  %4405 = vmatpush1.msra.mxu0 %v1059
  %4406 = vmatprep.subr.mxu0 0.0
  %4407 = vmatpush1.msra.mxu0 %v1060
  %4408 = vmatprep.subr.mxu0 0.0
  %4409 = vmatpush1.msra.mxu0 %v1061
  %4410 = vmatprep.subr.mxu0 0.0
  %4411 = vmatpush1.msra.mxu0 %v1062
  %4412 = vmatprep.subr.mxu0 0.0
  %4413 = vmatpush1.msra.mxu0 %v1063
  %4414 = vmatprep.subr.mxu0 0.0
  %4415 = vmatpush1.msra.mxu0 %v1064
  %4416 = vmatprep.subr.mxu0 0.0
  %4417 = vmatpush1.msra.mxu0 %v4390
  %4418 = vmatprep.subr.mxu0 0.0
  %4419 = vmatpush1.msra.mxu0 0.0
  %4420 = vmatprep.subr.mxu0 0.0
  %4421 = vmatpush1.msra.mxu0 0.0
  %4422 = vmatprep.subr.mxu0 0.0
  %4423 = vmatpush1.msra.mxu0 0.0
  %4424 = vmatprep.subr.mxu0 0.0
  %4425 = vmatpush1.msra.mxu0 0.0
  %4426 = vmatprep.subr.mxu0 0.0
  %4427 = vmatpush1.msra.mxu0 0.0
  %4428 = vmatprep.subr.mxu0 0.0
  %4429 = vmatpush1.msra.mxu0 0.0
  %4430 = vmatprep.subr.mxu0 0.0
  %4431 = vmatpush1.msra.mxu0 0.0
  %4432 = vmatprep.subr.mxu0 0.0
  %4433 = vmatpush1.msra.mxu0 0.0
  %4434 = vmatprep.subr.mxu0 0.0
  %4435 = vmatpush1.msra.mxu0 0.0
  %4436 = vmatprep.subr.mxu0 0.0
  %4437 = vmatpush1.msra.mxu0 0.0
  %4438 = vmatprep.subr.mxu0 0.0
  %4439 = vmatpush1.msra.mxu0 0.0
  %4440 = vmatprep.subr.mxu0 0.0
  %4441 = vmatpush1.msra.mxu0 0.0
  %4442 = vmatprep.subr.mxu0 0.0
  %4443 = vmatpush1.msra.mxu0 0.0
  %4444 = vmatprep.subr.mxu0 0.0
  %4445 = vmatpush1.msra.mxu0 0.0
  %4446 = vmatprep.subr.mxu0 0.0
  %4447 = vmatpush1.msra.mxu0 0.0
  %4448 = vmatprep.subr.mxu0 0.0
  %4449 = vmatpush1.msra.mxu0 0.0
  %4450 = vmatprep.subr.mxu0 0.0
  %4451 = vmatpush1.msra.mxu0 0.0
  %4452 = vmatprep.subr.mxu0 0.0
  %4453 = vmatpush1.msra.mxu0 0.0
  %4454 = vmatprep.subr.mxu0 0.0
  %4455 = vmatpush1.msra.mxu0 0.0
  %4456 = vmatprep.mubr.f32.mxu0 0.0
  %4457 = vmatmul.mubr.f32.gmra.mrb[0].mxu0 %v4386
  %v4458 = vpop.f32.mrb[0].mxu0
  %v4459 = vadd.f32 %v4383, %v4458
  %v4460 = vpop.f32.mrb[0].mxu0
  %4461 = vdwg.mxu0
  %v4462 = vxor.u32 %v4459, 2147483648
  %v4463 = vmul.f32 %v4462, 1.442695
  %v4464 = vpow.pop %v4463
  %v4465 = vadd.f32 %v4464, 1.0
  %v4466 = vrcp.pop %v4465
  %v4467 = vmul.f32 1.0, %v4466
  %v4468 = vmul.f32 %v4459, %v4467
  %v4469 = vld [vmem:[%s9 + $0x23] ss:$0 sm:$0xff]
  %vm4470 = vcmask 261120
  %v4472 = vsel %vm4470, %v4468, 0
  %4474 = vmatprep.subr.mxu0 0.0
  %4475 = vmatpush1.msra.mxu0 %v1066
  %4476 = vmatprep.subr.mxu0 0.0
  %4477 = vmatpush1.msra.mxu0 %v1067
  %4478 = vmatprep.subr.mxu0 0.0
  %4479 = vmatpush1.msra.mxu0 %v1068
  %4480 = vmatprep.subr.mxu0 0.0
  %4481 = vmatpush1.msra.mxu0 %v1069
  %4482 = vmatprep.subr.mxu0 0.0
  %4483 = vmatpush1.msra.mxu0 0.0
  %4484 = vmatprep.subr.mxu0 0.0
  %4485 = vmatpush1.msra.mxu0 0.0
  %4486 = vmatprep.subr.mxu0 0.0
  %4487 = vmatpush1.msra.mxu0 0.0
  %4488 = vmatprep.subr.mxu0 0.0
  %4489 = vmatpush1.msra.mxu0 0.0
  %4490 = vmatprep.subr.mxu0 0.0
  %4491 = vmatpush1.msra.mxu0 0.0
  %4492 = vmatprep.subr.mxu0 0.0
  %4493 = vmatpush1.msra.mxu0 0.0
  %4494 = vmatprep.subr.mxu0 0.0
  %4495 = vmatpush1.msra.mxu0 0.0
  %4496 = vmatprep.subr.mxu0 0.0
  %4497 = vmatpush1.msra.mxu0 0.0
  %4498 = vmatprep.subr.mxu0 0.0
  %4499 = vmatpush1.msra.mxu0 0.0
  %4500 = vmatprep.subr.mxu0 0.0
  %4501 = vmatpush1.msra.mxu0 0.0
  %4502 = vmatprep.subr.mxu0 0.0
  %4503 = vmatpush1.msra.mxu0 0.0
  %4504 = vmatprep.subr.mxu0 0.0
  %4505 = vmatpush1.msra.mxu0 0.0
  %4506 = vmatprep.subr.mxu0 0.0
  %4507 = vmatpush1.msra.mxu0 0.0
  %4508 = vmatprep.subr.mxu0 0.0
  %4509 = vmatpush1.msra.mxu0 0.0
  %4510 = vmatprep.subr.mxu0 0.0
  %4511 = vmatpush1.msra.mxu0 0.0
  %4512 = vmatprep.subr.mxu0 0.0
  %4513 = vmatpush1.msra.mxu0 0.0
  %4514 = vmatprep.subr.mxu0 0.0
  %4515 = vmatpush1.msra.mxu0 0.0
  %4516 = vmatprep.subr.mxu0 0.0
  %4517 = vmatpush1.msra.mxu0 0.0
  %4518 = vmatprep.subr.mxu0 0.0
  %4519 = vmatpush1.msra.mxu0 0.0
  %4520 = vmatprep.subr.mxu0 0.0
  %4521 = vmatpush1.msra.mxu0 0.0
  %4522 = vmatprep.subr.mxu0 0.0
  %4523 = vmatpush1.msra.mxu0 0.0
  %4524 = vmatprep.subr.mxu0 0.0
  %4525 = vmatpush1.msra.mxu0 0.0
  %4526 = vmatprep.subr.mxu0 0.0
  %4527 = vmatpush1.msra.mxu0 0.0
  %4528 = vmatprep.subr.mxu0 0.0
  %4529 = vmatpush1.msra.mxu0 0.0
  %4530 = vmatprep.subr.mxu0 0.0
  %4531 = vmatpush1.msra.mxu0 0.0
  %4532 = vmatprep.subr.mxu0 0.0
  %4533 = vmatpush1.msra.mxu0 0.0
  %4534 = vmatprep.subr.mxu0 0.0
  %4535 = vmatpush1.msra.mxu0 0.0
  %4536 = vmatprep.subr.mxu0 0.0
  %4537 = vmatpush1.msra.mxu0 0.0
  %4538 = vmatprep.mubr.f32.mxu0 0.0
  %4539 = vmatmul.mubr.f32.gmra.mrb[0].mxu0 %v4472
  %v4540 = vpop.f32.mrb[0].mxu0
  %v4541 = vadd.f32 %v4469, %v4540
  %v4542 = vpop.f32.mrb[0].mxu0
  %4543 = vdwg.mxu0
  %vm4544 = vcmask 80896
  %4545 = vst.msk [vmem:[%s10] sm:$0xff] %vm4544, %v4541
  // Predicated region
  $region42: #{scacnn_forward.1} parent=0 // pred_check
    _
  $region43: #{scacnn_forward.1} parent=0 // pred_check_branch
    %4547 = sbr.rel (0) target = $region45
  $region44: #{scacnn_forward.1} parent=0 // pred_region
    _
  $region45: #{scacnn_forward.1} parent=0 // pred_fallthru
    _
  // Predicated region
  $region46: #{scacnn_forward.1} parent=0 // pred_check
    _
  $region47: #{scacnn_forward.1} parent=0 // pred_check_branch
    %4549 = sbr.rel (0) target = $region49
  $region48: #{scacnn_forward.1} parent=0 // pred_region
    _
  $region49: #{scacnn_forward.1} parent=0 // pred_fallthru
    _

</llo_original>
